<compile_context>
chip_gen: v5e
topology: v5e:2x2
jax: 0.10.0
libtpu: 0.0.40
codegen_flags: <defaults>
</compile_context>

<pallas_src>
import functools

import jax
import jax.numpy as jnp
import numpy as np
from jax.experimental import pallas as pl
from jax.experimental.pallas import tpu as pltpu


def _decoder_gru_kernel(x_ref, h0_ref, adj_ref,
                        wg_x_ref, wg_h_ref, bg_ref,
                        wu_x_ref, wu_h_ref, bu_ref,
                        w_ref, b_ref,
                        y_ref, h_slab,
                        *, T, N, F, BPC, mm_dtype):
    """Full seq_target recurrence for BPC batch elements (one grid step)."""
    f32 = jnp.float32
    # All matmuls go through the MXU in mm_dtype with f32 accumulation.
    mm = lambda a, b: jnp.dot(a.astype(mm_dtype), b, preferred_element_type=f32)

    adj = adj_ref[...]            # (N, N)   mm_dtype
    wg_h = wg_h_ref[...]          # (F, 2F)  fused reset|update columns
    wu_h = wu_h_ref[...]          # (F, F)
    bg = bg_ref[...]              # (1, 2F)  f32
    bu = bu_ref[...]              # (1, F)   f32

    # ---- Hoisted time-invariant x contributions + per-batch initial state --
    gx, ux, hx = [], [], []
    for bi in range(BPC):
        xb = x_ref[bi]                                         # (N, F)
        gx.append(mm(adj, mm(xb, wg_x_ref[...]).astype(mm_dtype)) + bg)  # (N,2F)
        ux.append(mm(adj, mm(xb, wu_x_ref[...]).astype(mm_dtype)) + bu)  # (N, F)
        hx.append(h0_ref[bi].astype(f32))                      # (N, F)

    # ---- Recurrence: T * BPC fully unrolled; the BPC chains within a step
    # are independent, giving the scheduler work to fill MXU bubbles. -------
    for t in range(T):
        for bi in range(BPC):
            h = hx[bi]
            # One fused gate projection: hx @ (F,2F), then adj @ (N,2F).
            gates = gx[bi] + mm(adj, mm(h, wg_h).astype(mm_dtype))   # (N, 2F)
            sg = jax.nn.sigmoid(gates)
            resetgate, updategate = sg[:, :F], sg[:, F:]
            cy = jnp.tanh(
                ux[bi] + mm(adj, mm(resetgate * h, wu_h).astype(mm_dtype)))
            h = cy + updategate * (h - cy)        # == u*h + (1-u)*cy
            hx[bi] = h
            h_slab[pl.ds((bi * T + t) * N, N), :] = h

    # ---- One lane-amortized output projection over all (batch, step) states.
    y = jax.nn.sigmoid(mm(h_slab[...], w_ref[...]) + b_ref[...])
    y_ref[0] = y.astype(y_ref.dtype)


def decoder_gru_pallas(x, h0, adj, Wg, bg, Wu, bu, W, b, seq_target,
                       *, mm_dtype=jnp.bfloat16):
    """x: (B,N,F); h0: (B,N,F); returns (B, seq_target, N, dim_out_dec)."""
    B, N, F = x.shape
    O = W.shape[1]
    T = seq_target

    # Lane-dense output: pad dim_out columns up to a multiple of 128 so the
    # output stores are full (unmasked) lane writes; sliced back in wrapper.
    O_pad = ((O + 127) // 128) * 128

    # At most 2 grid steps (one per v7x TensorCore); each body carries >= 2
    # independent batch recurrences when possible.  v5e/v6e are single-core,
    # so for small B everything runs in a single invocation (grid=(1,)).
    G = 2 if B >= 4 else 1
    bpc = -(-B // G)                       # batches per kernel body
    B_pad = G * bpc
    if B_pad != B:
        pad = B_pad - B
        x = jnp.concatenate([x, jnp.zeros((pad, N, F), x.dtype)], axis=0)
        h0 = jnp.concatenate([h0, jnp.zeros((pad, N, F), h0.dtype)], axis=0)

    # Split combined-input weights once in the wrapper:
    #   rows : x-half vs hx-half  -> x contribution hoisted out of the loop
    #   cols : reset|update kept FUSED -> one hx matmul + one adj matmul/step
    Wg_x, Wg_h = Wg[:F, :], Wg[F:, :]                 # (F, 2F) each
    Wu_x, Wu_h = Wu[:F, :], Wu[F:, :]                 # (F, F) each
    W_pad = jnp.zeros((F, O_pad), W.dtype).at[:, :O].set(W)
    b_pad = jnp.zeros((1, O_pad), jnp.float32).at[:, :O].set(
        jnp.asarray(b, jnp.float32).reshape(1, O))
    bg2 = jnp.asarray(bg, jnp.float32).reshape(1, 2 * F)
    bu2 = jnp.asarray(bu, jnp.float32).reshape(1, F)

    # MXU operands in bf16 (MXU is bf16-native on v5e/v6e/v7x); all gate /
    # elementwise math stays f32 inside the kernel.
    cast = lambda a: a.astype(mm_dtype)
    x_mm, adj_mm = cast(x), cast(adj)
    Wg_x, Wg_h, Wu_x, Wu_h, W_pad = map(cast, (Wg_x, Wg_h, Wu_x, Wu_h, W_pad))

    kernel = functools.partial(_decoder_gru_kernel, T=T, N=N, F=F, BPC=bpc,
                               mm_dtype=mm_dtype)
    const = lambda g: (0, 0)

    # NOTE: with a 1-2 step grid and constant index maps, the time-invariant
    # weight/bias operands are fetched exactly once; pipeline double-buffering
    # overhead is negligible (a few KiB of extra VMEM at these sizes).
    out = pl.pallas_call(
        kernel,
        out_shape=jax.ShapeDtypeStruct((G, bpc * T * N, O_pad), jnp.float32),
        grid_spec=pltpu.PrefetchScalarGridSpec(
            num_scalar_prefetch=0,
            grid=(G,),
            in_specs=[
                pl.BlockSpec((bpc, N, F), lambda g: (g, 0, 0)),   # x
                pl.BlockSpec((bpc, N, F), lambda g: (g, 0, 0)),   # h0
                pl.BlockSpec((N, N), const),                      # adj
                pl.BlockSpec((F, 2 * F), const),                  # Wg_x
                pl.BlockSpec((F, 2 * F), const),                  # Wg_h (fused)
                pl.BlockSpec((1, 2 * F), const),                  # bg
                pl.BlockSpec((F, F), const),                      # Wu_x
                pl.BlockSpec((F, F), const),                      # Wu_h
                pl.BlockSpec((1, F), const),                      # bu
                pl.BlockSpec((F, O_pad), const),                  # W (padded)
                pl.BlockSpec((1, O_pad), const),                  # b (padded)
            ],
            out_specs=pl.BlockSpec((1, bpc * T * N, O_pad),
                                   lambda g: (g, 0, 0)),
            scratch_shapes=[pltpu.VMEM((bpc * T * N, F), jnp.float32)],
        ),
        compiler_params=pltpu.CompilerParams(
            dimension_semantics=("parallel",)),
    )(x_mm, h0, adj_mm, Wg_x, Wg_h, bg2, Wu_x, Wu_h, bu2, W_pad, b_pad)

    # (G, bpc*T*N, O_pad) -> (B, T, N, O): contiguous reshape + slice.
    out = out.reshape(B_pad, T, N, O_pad)
    return out[:B, :, :, :O]


def decoder_gru_ref(x, h0, adj, Wg, bg, Wu, bu, W, b, seq_target):
    """Pure-JAX reference mirroring the PyTorch forward (same graph-conv
    stand-in for MRA_BGCN)."""
    F = x.shape[-1]
    hx = h0
    outs = []
    for _ in range(seq_target):
        combined = jnp.concatenate([x, hx], axis=-1)
        gates = jnp.einsum('nm,bmk->bnk', adj, combined @ Wg) + bg
        resetgate = jax.nn.sigmoid(gates[..., :F])
        updategate = jax.nn.sigmoid(gates[..., F:])
        combined2 = jnp.concatenate([x, resetgate * hx], axis=-1)
        cy = jnp.tanh(jnp.einsum('nm,bmk->bnk', adj, combined2 @ Wu) + bu)
        hy = updategate * hx + (1.0 - updategate) * cy
        hx = hy
        outs.append(jax.nn.sigmoid(hy @ W + b))
    return jnp.stack(outs, axis=1)   # (B, T, N, dim_out)


if __name__ == "__main__":
    # Small shapes consistent with the module: (B, N, F) node features.
    B, N, F = 2, 16, 8            # batch, vertices, dim_in_dec
    dim_out_dec = 4
    seq_target = 6

    key = jax.random.PRNGKey(0)
    k = jax.random.split(key, 8)

    x = jax.random.normal(k[0], (B, N, F), dtype=jnp.float32)
    h0 = jax.random.normal(k[1], (B, N, F), dtype=jnp.float32) * 0.5

    # Deterministic row-normalized adjacency (adj_node stand-in).
    a_raw = jnp.abs(jax.random.normal(k[2], (N, N), dtype=jnp.float32))
    a_raw = a_raw + jnp.eye(N, dtype=jnp.float32)
    adj = a_raw / jnp.sum(a_raw, axis=-1, keepdims=True)

    # Parameters (deterministic random init; shapes from __init__).
    Wg = jax.random.normal(k[3], (2 * F, 2 * F), dtype=jnp.float32) * 0.2
    bg = jax.random.normal(k[4], (1, 2 * F), dtype=jnp.float32) * 0.1
    Wu = jax.random.normal(k[5], (2 * F, F), dtype=jnp.float32) * 0.2
    bu = jax.random.normal(k[6], (1, F), dtype=jnp.float32) * 0.1
    W = jax.random.normal(k[7], (F, dim_out_dec), dtype=jnp.float32) * 0.2
    b = jnp.linspace(-0.1, 0.1, dim_out_dec,
                     dtype=jnp.float32).reshape(1, dim_out_dec)

    # Full-precision pure-JAX reference.
    with jax.default_matmul_precision("float32"):
        ref = jax.block_until_ready(
            decoder_gru_ref(x, h0, adj, Wg, bg, Wu, bu, W, b, seq_target))

    # f32 MXU path: tight check against the reference.
    out_f32 = jax.block_until_ready(
        decoder_gru_pallas(x, h0, adj, Wg, bg, Wu, bu, W, b, seq_target,
                           mm_dtype=jnp.float32))
    assert out_f32.shape == (B, seq_target, N, dim_out_dec), out_f32.shape
    np.testing.assert_allclose(np.asarray(out_f32), np.asarray(ref),
                               rtol=1e-3, atol=1e-3)

    # Default bf16 MXU path (per perf review): bf16 rounding compounds over
    # the T-step recurrence, so the tolerance is loosened accordingly.
    out = jax.block_until_ready(
        decoder_gru_pallas(x, h0, adj, Wg, bg, Wu, bu, W, b, seq_target))
    assert out.shape == (B, seq_target, N, dim_out_dec), out.shape
    np.testing.assert_allclose(np.asarray(out), np.asarray(ref),
                               rtol=3e-2, atol=3e-2)
    print("KERNEL_OK")
</pallas_src>

<mosaic_0001>
module attributes {stable_mosaic.version = 11 : i64} {
  func.func @_decoder_gru_kernel(%arg0: i32, %arg1: memref<2x16x8xf32, #tpu.memory_space<vmem>>, %arg2: memref<2x16x8xf32, #tpu.memory_space<vmem>>, %arg3: memref<16x16xf32, #tpu.memory_space<vmem>>, %arg4: memref<8x16xf32, #tpu.memory_space<vmem>>, %arg5: memref<8x16xf32, #tpu.memory_space<vmem>>, %arg6: memref<1x16xf32, #tpu.memory_space<vmem>>, %arg7: memref<8x8xf32, #tpu.memory_space<vmem>>, %arg8: memref<8x8xf32, #tpu.memory_space<vmem>>, %arg9: memref<1x8xf32, #tpu.memory_space<vmem>>, %arg10: memref<8x128xf32, #tpu.memory_space<vmem>>, %arg11: memref<1x128xf32, #tpu.memory_space<vmem>>, %arg12: memref<1x192x128xf32, #tpu.memory_space<vmem>>, %arg13: memref<192x8xf32, #tpu.memory_space<vmem>>) attributes {dimension_semantics = [#tpu.dimension_semantics<parallel>], iteration_bounds = array<i64: 1>, scalar_prefetch = 0 : i64, scratch_operands = 1 : i64, tpu.core_type = #tpu.core_type<tc>, window_params = [{transform_indices = @transform_0, window_bounds = array<i64: 2, 16, 8>}, {transform_indices = @transform_1, window_bounds = array<i64: 2, 16, 8>}, {pipeline_mode = #tpu.pipeline_mode<synchronous>, transform_indices = @transform_2, window_bounds = array<i64: 16, 16>}, {pipeline_mode = #tpu.pipeline_mode<synchronous>, transform_indices = @transform_3, window_bounds = array<i64: 8, 16>}, {pipeline_mode = #tpu.pipeline_mode<synchronous>, transform_indices = @transform_4, window_bounds = array<i64: 8, 16>}, {pipeline_mode = #tpu.pipeline_mode<synchronous>, transform_indices = @transform_5, window_bounds = array<i64: 1, 16>}, {pipeline_mode = #tpu.pipeline_mode<synchronous>, transform_indices = @transform_6, window_bounds = array<i64: 8, 8>}, {pipeline_mode = #tpu.pipeline_mode<synchronous>, transform_indices = @transform_7, window_bounds = array<i64: 8, 8>}, {pipeline_mode = #tpu.pipeline_mode<synchronous>, transform_indices = @transform_8, window_bounds = array<i64: 1, 8>}, {pipeline_mode = #tpu.pipeline_mode<synchronous>, transform_indices = @transform_9, window_bounds = array<i64: 8, 128>}, {pipeline_mode = #tpu.pipeline_mode<synchronous>, transform_indices = @transform_10, window_bounds = array<i64: 1, 128>}, {transform_indices = @transform_11, window_bounds = array<i64: 1, 192, 128>}]} {
    %c0 = arith.constant 0 : index
    %c0_0 = arith.constant 0 : index
    %0 = vector.load %arg3[%c0, %c0_0] : memref<16x16xf32, #tpu.memory_space<vmem>>, vector<16x16xf32>
    %c0_1 = arith.constant 0 : index
    %c0_2 = arith.constant 0 : index
    %1 = vector.load %arg5[%c0_1, %c0_2] : memref<8x16xf32, #tpu.memory_space<vmem>>, vector<8x16xf32>
    %c0_3 = arith.constant 0 : index
    %c0_4 = arith.constant 0 : index
    %2 = vector.load %arg8[%c0_3, %c0_4] : memref<8x8xf32, #tpu.memory_space<vmem>>, vector<8x8xf32>
    %c0_5 = arith.constant 0 : index
    %c0_6 = arith.constant 0 : index
    %3 = vector.load %arg6[%c0_5, %c0_6] : memref<1x16xf32, #tpu.memory_space<vmem>>, vector<1x16xf32>
    %c0_7 = arith.constant 0 : index
    %c0_8 = arith.constant 0 : index
    %4 = vector.load %arg9[%c0_7, %c0_8] : memref<1x8xf32, #tpu.memory_space<vmem>>, vector<1x8xf32>
    %c0_9 = arith.constant 0 : index
    %c0_10 = arith.constant 0 : index
    %c0_11 = arith.constant 0 : index
    %5 = vector.load %arg1[%c0_9, %c0_10, %c0_11] : memref<2x16x8xf32, #tpu.memory_space<vmem>>, vector<1x16x8xf32>
    %6 = vector.shape_cast %5 : vector<1x16x8xf32> to vector<16x8xf32>
    %c0_12 = arith.constant 0 : index
    %c0_13 = arith.constant 0 : index
    %7 = vector.load %arg4[%c0_12, %c0_13] : memref<8x16xf32, #tpu.memory_space<vmem>>, vector<8x16xf32>
    %cst = arith.constant dense<0.000000e+00> : vector<16x16xf32>
    %8 = tpu.matmul %6, %7, %cst {dimension_numbers = #tpu.dot_dimension_numbers<[1], [0], [0], [1], [0, 0, 1, 1], [], []>} : vector<16x8xf32>, vector<8x16xf32>, vector<16x16xf32> -> vector<16x16xf32>
    %cst_14 = arith.constant dense<0.000000e+00> : vector<16x16xf32>
    %9 = tpu.matmul %0, %8, %cst_14 {dimension_numbers = #tpu.dot_dimension_numbers<[1], [0], [0], [1], [0, 0, 1, 1], [], []>} : vector<16x16xf32>, vector<16x16xf32>, vector<16x16xf32> -> vector<16x16xf32>
    %10 = vector.broadcast %3 : vector<1x16xf32> to vector<16x16xf32>
    %11 = arith.addf %9, %10 : vector<16x16xf32>
    %c0_15 = arith.constant 0 : index
    %c0_16 = arith.constant 0 : index
    %12 = vector.load %arg7[%c0_15, %c0_16] : memref<8x8xf32, #tpu.memory_space<vmem>>, vector<8x8xf32>
    %cst_17 = arith.constant dense<0.000000e+00> : vector<16x8xf32>
    %13 = tpu.matmul %6, %12, %cst_17 {dimension_numbers = #tpu.dot_dimension_numbers<[1], [0], [0], [1], [0, 0, 1, 1], [], []>} : vector<16x8xf32>, vector<8x8xf32>, vector<16x8xf32> -> vector<16x8xf32>
    %cst_18 = arith.constant dense<0.000000e+00> : vector<16x8xf32>
    %14 = tpu.matmul %0, %13, %cst_18 {dimension_numbers = #tpu.dot_dimension_numbers<[1], [0], [0], [1], [0, 0, 1, 1], [], []>} : vector<16x16xf32>, vector<16x8xf32>, vector<16x8xf32> -> vector<16x8xf32>
    %15 = vector.broadcast %4 : vector<1x8xf32> to vector<16x8xf32>
    %16 = arith.addf %14, %15 : vector<16x8xf32>
    %c0_19 = arith.constant 0 : index
    %c0_20 = arith.constant 0 : index
    %c0_21 = arith.constant 0 : index
    %17 = vector.load %arg2[%c0_19, %c0_20, %c0_21] : memref<2x16x8xf32, #tpu.memory_space<vmem>>, vector<1x16x8xf32>
    %18 = vector.shape_cast %17 : vector<1x16x8xf32> to vector<16x8xf32>
    %c1 = arith.constant 1 : index
    %c0_22 = arith.constant 0 : index
    %c0_23 = arith.constant 0 : index
    %19 = vector.load %arg1[%c1, %c0_22, %c0_23] : memref<2x16x8xf32, #tpu.memory_space<vmem>>, vector<1x16x8xf32>
    %20 = vector.shape_cast %19 : vector<1x16x8xf32> to vector<16x8xf32>
    %c0_24 = arith.constant 0 : index
    %c0_25 = arith.constant 0 : index
    %21 = vector.load %arg4[%c0_24, %c0_25] : memref<8x16xf32, #tpu.memory_space<vmem>>, vector<8x16xf32>
    %cst_26 = arith.constant dense<0.000000e+00> : vector<16x16xf32>
    %22 = tpu.matmul %20, %21, %cst_26 {dimension_numbers = #tpu.dot_dimension_numbers<[1], [0], [0], [1], [0, 0, 1, 1], [], []>} : vector<16x8xf32>, vector<8x16xf32>, vector<16x16xf32> -> vector<16x16xf32>
    %cst_27 = arith.constant dense<0.000000e+00> : vector<16x16xf32>
    %23 = tpu.matmul %0, %22, %cst_27 {dimension_numbers = #tpu.dot_dimension_numbers<[1], [0], [0], [1], [0, 0, 1, 1], [], []>} : vector<16x16xf32>, vector<16x16xf32>, vector<16x16xf32> -> vector<16x16xf32>
    %24 = vector.broadcast %3 : vector<1x16xf32> to vector<16x16xf32>
    %25 = arith.addf %23, %24 : vector<16x16xf32>
    %c0_28 = arith.constant 0 : index
    %c0_29 = arith.constant 0 : index
    %26 = vector.load %arg7[%c0_28, %c0_29] : memref<8x8xf32, #tpu.memory_space<vmem>>, vector<8x8xf32>
    %cst_30 = arith.constant dense<0.000000e+00> : vector<16x8xf32>
    %27 = tpu.matmul %20, %26, %cst_30 {dimension_numbers = #tpu.dot_dimension_numbers<[1], [0], [0], [1], [0, 0, 1, 1], [], []>} : vector<16x8xf32>, vector<8x8xf32>, vector<16x8xf32> -> vector<16x8xf32>
    %cst_31 = arith.constant dense<0.000000e+00> : vector<16x8xf32>
    %28 = tpu.matmul %0, %27, %cst_31 {dimension_numbers = #tpu.dot_dimension_numbers<[1], [0], [0], [1], [0, 0, 1, 1], [], []>} : vector<16x16xf32>, vector<16x8xf32>, vector<16x8xf32> -> vector<16x8xf32>
    %29 = vector.broadcast %4 : vector<1x8xf32> to vector<16x8xf32>
    %30 = arith.addf %28, %29 : vector<16x8xf32>
    %c1_32 = arith.constant 1 : index
    %c0_33 = arith.constant 0 : index
    %c0_34 = arith.constant 0 : index
    %31 = vector.load %arg2[%c1_32, %c0_33, %c0_34] : memref<2x16x8xf32, #tpu.memory_space<vmem>>, vector<1x16x8xf32>
    %32 = vector.shape_cast %31 : vector<1x16x8xf32> to vector<16x8xf32>
    %cst_35 = arith.constant dense<0.000000e+00> : vector<16x16xf32>
    %33 = tpu.matmul %18, %1, %cst_35 {dimension_numbers = #tpu.dot_dimension_numbers<[1], [0], [0], [1], [0, 0, 1, 1], [], []>} : vector<16x8xf32>, vector<8x16xf32>, vector<16x16xf32> -> vector<16x16xf32>
    %cst_36 = arith.constant dense<0.000000e+00> : vector<16x16xf32>
    %34 = tpu.matmul %0, %33, %cst_36 {dimension_numbers = #tpu.dot_dimension_numbers<[1], [0], [0], [1], [0, 0, 1, 1], [], []>} : vector<16x16xf32>, vector<16x16xf32>, vector<16x16xf32> -> vector<16x16xf32>
    %35 = arith.addf %11, %34 : vector<16x16xf32>
    %36 = arith.negf %35 : vector<16x16xf32>
    %37 = math.exp %36 : vector<16x16xf32>
    %cst_37 = arith.constant 1.000000e+00 : f32
    %38 = vector.broadcast %cst_37 : f32 to vector<16x16xf32>
    %39 = arith.addf %38, %37 : vector<16x16xf32>
    %40 = arith.divf %38, %39 : vector<16x16xf32>
    %41 = vector.extract_strided_slice %40 {offsets = [0, 0], sizes = [16, 8], strides = [1, 1]} : vector<16x16xf32> to vector<16x8xf32>
    %42 = vector.extract_strided_slice %40 {offsets = [0, 8], sizes = [16, 8], strides = [1, 1]} : vector<16x16xf32> to vector<16x8xf32>
    %43 = arith.mulf %41, %18 : vector<16x8xf32>
    %cst_38 = arith.constant dense<0.000000e+00> : vector<16x8xf32>
    %44 = tpu.matmul %43, %2, %cst_38 {dimension_numbers = #tpu.dot_dimension_numbers<[1], [0], [0], [1], [0, 0, 1, 1], [], []>} : vector<16x8xf32>, vector<8x8xf32>, vector<16x8xf32> -> vector<16x8xf32>
    %cst_39 = arith.constant dense<0.000000e+00> : vector<16x8xf32>
    %45 = tpu.matmul %0, %44, %cst_39 {dimension_numbers = #tpu.dot_dimension_numbers<[1], [0], [0], [1], [0, 0, 1, 1], [], []>} : vector<16x16xf32>, vector<16x8xf32>, vector<16x8xf32> -> vector<16x8xf32>
    %46 = arith.addf %16, %45 : vector<16x8xf32>
    %47 = math.tanh %46 : vector<16x8xf32>
    %48 = arith.subf %18, %47 : vector<16x8xf32>
    %49 = arith.mulf %42, %48 : vector<16x8xf32>
    %50 = arith.addf %47, %49 : vector<16x8xf32>
    %c0_40 = arith.constant 0 : index
    %c0_41 = arith.constant 0 : index
    %51 = vector.load %arg13[%c0_40, %c0_41] : memref<192x8xf32, #tpu.memory_space<vmem>>, vector<16x8xf32>
    tpu.vector_store %arg13[%c0_40, %c0_41], %50 {strides = array<i32>} : memref<192x8xf32, #tpu.memory_space<vmem>>, vector<16x8xf32>,
    %cst_42 = arith.constant dense<0.000000e+00> : vector<16x16xf32>
    %52 = tpu.matmul %32, %1, %cst_42 {dimension_numbers = #tpu.dot_dimension_numbers<[1], [0], [0], [1], [0, 0, 1, 1], [], []>} : vector<16x8xf32>, vector<8x16xf32>, vector<16x16xf32> -> vector<16x16xf32>
    %cst_43 = arith.constant dense<0.000000e+00> : vector<16x16xf32>
    %53 = tpu.matmul %0, %52, %cst_43 {dimension_numbers = #tpu.dot_dimension_numbers<[1], [0], [0], [1], [0, 0, 1, 1], [], []>} : vector<16x16xf32>, vector<16x16xf32>, vector<16x16xf32> -> vector<16x16xf32>
    %54 = arith.addf %25, %53 : vector<16x16xf32>
    %55 = arith.negf %54 : vector<16x16xf32>
    %56 = math.exp %55 : vector<16x16xf32>
    %cst_44 = arith.constant 1.000000e+00 : f32
    %57 = vector.broadcast %cst_44 : f32 to vector<16x16xf32>
    %58 = arith.addf %57, %56 : vector<16x16xf32>
    %59 = arith.divf %57, %58 : vector<16x16xf32>
    %60 = vector.extract_strided_slice %59 {offsets = [0, 0], sizes = [16, 8], strides = [1, 1]} : vector<16x16xf32> to vector<16x8xf32>
    %61 = vector.extract_strided_slice %59 {offsets = [0, 8], sizes = [16, 8], strides = [1, 1]} : vector<16x16xf32> to vector<16x8xf32>
    %62 = arith.mulf %60, %32 : vector<16x8xf32>
    %cst_45 = arith.constant dense<0.000000e+00> : vector<16x8xf32>
    %63 = tpu.matmul %62, %2, %cst_45 {dimension_numbers = #tpu.dot_dimension_numbers<[1], [0], [0], [1], [0, 0, 1, 1], [], []>} : vector<16x8xf32>, vector<8x8xf32>, vector<16x8xf32> -> vector<16x8xf32>
    %cst_46 = arith.constant dense<0.000000e+00> : vector<16x8xf32>
    %64 = tpu.matmul %0, %63, %cst_46 {dimension_numbers = #tpu.dot_dimension_numbers<[1], [0], [0], [1], [0, 0, 1, 1], [], []>} : vector<16x16xf32>, vector<16x8xf32>, vector<16x8xf32> -> vector<16x8xf32>
    %65 = arith.addf %30, %64 : vector<16x8xf32>
    %66 = math.tanh %65 : vector<16x8xf32>
    %67 = arith.subf %32, %66 : vector<16x8xf32>
    %68 = arith.mulf %61, %67 : vector<16x8xf32>
    %69 = arith.addf %66, %68 : vector<16x8xf32>
    %c96 = arith.constant 96 : index
    %c0_47 = arith.constant 0 : index
    %70 = vector.load %arg13[%c96, %c0_47] : memref<192x8xf32, #tpu.memory_space<vmem>>, vector<16x8xf32>
    tpu.vector_store %arg13[%c96, %c0_47], %69 {strides = array<i32>} : memref<192x8xf32, #tpu.memory_space<vmem>>, vector<16x8xf32>,
    %cst_48 = arith.constant dense<0.000000e+00> : vector<16x16xf32>
    %71 = tpu.matmul %50, %1, %cst_48 {dimension_numbers = #tpu.dot_dimension_numbers<[1], [0], [0], [1], [0, 0, 1, 1], [], []>} : vector<16x8xf32>, vector<8x16xf32>, vector<16x16xf32> -> vector<16x16xf32>
    %cst_49 = arith.constant dense<0.000000e+00> : vector<16x16xf32>
    %72 = tpu.matmul %0, %71, %cst_49 {dimension_numbers = #tpu.dot_dimension_numbers<[1], [0], [0], [1], [0, 0, 1, 1], [], []>} : vector<16x16xf32>, vector<16x16xf32>, vector<16x16xf32> -> vector<16x16xf32>
    %73 = arith.addf %11, %72 : vector<16x16xf32>
    %74 = arith.negf %73 : vector<16x16xf32>
    %75 = math.exp %74 : vector<16x16xf32>
    %cst_50 = arith.constant 1.000000e+00 : f32
    %76 = vector.broadcast %cst_50 : f32 to vector<16x16xf32>
    %77 = arith.addf %76, %75 : vector<16x16xf32>
    %78 = arith.divf %76, %77 : vector<16x16xf32>
    %79 = vector.extract_strided_slice %78 {offsets = [0, 0], sizes = [16, 8], strides = [1, 1]} : vector<16x16xf32> to vector<16x8xf32>
    %80 = vector.extract_strided_slice %78 {offsets = [0, 8], sizes = [16, 8], strides = [1, 1]} : vector<16x16xf32> to vector<16x8xf32>
    %81 = arith.mulf %79, %50 : vector<16x8xf32>
    %cst_51 = arith.constant dense<0.000000e+00> : vector<16x8xf32>
    %82 = tpu.matmul %81, %2, %cst_51 {dimension_numbers = #tpu.dot_dimension_numbers<[1], [0], [0], [1], [0, 0, 1, 1], [], []>} : vector<16x8xf32>, vector<8x8xf32>, vector<16x8xf32> -> vector<16x8xf32>
    %cst_52 = arith.constant dense<0.000000e+00> : vector<16x8xf32>
    %83 = tpu.matmul %0, %82, %cst_52 {dimension_numbers = #tpu.dot_dimension_numbers<[1], [0], [0], [1], [0, 0, 1, 1], [], []>} : vector<16x16xf32>, vector<16x8xf32>, vector<16x8xf32> -> vector<16x8xf32>
    %84 = arith.addf %16, %83 : vector<16x8xf32>
    %85 = math.tanh %84 : vector<16x8xf32>
    %86 = arith.subf %50, %85 : vector<16x8xf32>
    %87 = arith.mulf %80, %86 : vector<16x8xf32>
    %88 = arith.addf %85, %87 : vector<16x8xf32>
    %c16 = arith.constant 16 : index
    %c0_53 = arith.constant 0 : index
    %89 = vector.load %arg13[%c16, %c0_53] : memref<192x8xf32, #tpu.memory_space<vmem>>, vector<16x8xf32>
    tpu.vector_store %arg13[%c16, %c0_53], %88 {strides = array<i32>} : memref<192x8xf32, #tpu.memory_space<vmem>>, vector<16x8xf32>,
    %cst_54 = arith.constant dense<0.000000e+00> : vector<16x16xf32>
    %90 = tpu.matmul %69, %1, %cst_54 {dimension_numbers = #tpu.dot_dimension_numbers<[1], [0], [0], [1], [0, 0, 1, 1], [], []>} : vector<16x8xf32>, vector<8x16xf32>, vector<16x16xf32> -> vector<16x16xf32>
    %cst_55 = arith.constant dense<0.000000e+00> : vector<16x16xf32>
    %91 = tpu.matmul %0, %90, %cst_55 {dimension_numbers = #tpu.dot_dimension_numbers<[1], [0], [0], [1], [0, 0, 1, 1], [], []>} : vector<16x16xf32>, vector<16x16xf32>, vector<16x16xf32> -> vector<16x16xf32>
    %92 = arith.addf %25, %91 : vector<16x16xf32>
    %93 = arith.negf %92 : vector<16x16xf32>
    %94 = math.exp %93 : vector<16x16xf32>
    %cst_56 = arith.constant 1.000000e+00 : f32
    %95 = vector.broadcast %cst_56 : f32 to vector<16x16xf32>
    %96 = arith.addf %95, %94 : vector<16x16xf32>
    %97 = arith.divf %95, %96 : vector<16x16xf32>
    %98 = vector.extract_strided_slice %97 {offsets = [0, 0], sizes = [16, 8], strides = [1, 1]} : vector<16x16xf32> to vector<16x8xf32>
    %99 = vector.extract_strided_slice %97 {offsets = [0, 8], sizes = [16, 8], strides = [1, 1]} : vector<16x16xf32> to vector<16x8xf32>
    %100 = arith.mulf %98, %69 : vector<16x8xf32>
    %cst_57 = arith.constant dense<0.000000e+00> : vector<16x8xf32>
    %101 = tpu.matmul %100, %2, %cst_57 {dimension_numbers = #tpu.dot_dimension_numbers<[1], [0], [0], [1], [0, 0, 1, 1], [], []>} : vector<16x8xf32>, vector<8x8xf32>, vector<16x8xf32> -> vector<16x8xf32>
    %cst_58 = arith.constant dense<0.000000e+00> : vector<16x8xf32>
    %102 = tpu.matmul %0, %101, %cst_58 {dimension_numbers = #tpu.dot_dimension_numbers<[1], [0], [0], [1], [0, 0, 1, 1], [], []>} : vector<16x16xf32>, vector<16x8xf32>, vector<16x8xf32> -> vector<16x8xf32>
    %103 = arith.addf %30, %102 : vector<16x8xf32>
    %104 = math.tanh %103 : vector<16x8xf32>
    %105 = arith.subf %69, %104 : vector<16x8xf32>
    %106 = arith.mulf %99, %105 : vector<16x8xf32>
    %107 = arith.addf %104, %106 : vector<16x8xf32>
    %c112 = arith.constant 112 : index
    %c0_59 = arith.constant 0 : index
    %108 = vector.load %arg13[%c112, %c0_59] : memref<192x8xf32, #tpu.memory_space<vmem>>, vector<16x8xf32>
    tpu.vector_store %arg13[%c112, %c0_59], %107 {strides = array<i32>} : memref<192x8xf32, #tpu.memory_space<vmem>>, vector<16x8xf32>,
    %cst_60 = arith.constant dense<0.000000e+00> : vector<16x16xf32>
    %109 = tpu.matmul %88, %1, %cst_60 {dimension_numbers = #tpu.dot_dimension_numbers<[1], [0], [0], [1], [0, 0, 1, 1], [], []>} : vector<16x8xf32>, vector<8x16xf32>, vector<16x16xf32> -> vector<16x16xf32>
    %cst_61 = arith.constant dense<0.000000e+00> : vector<16x16xf32>
    %110 = tpu.matmul %0, %109, %cst_61 {dimension_numbers = #tpu.dot_dimension_numbers<[1], [0], [0], [1], [0, 0, 1, 1], [], []>} : vector<16x16xf32>, vector<16x16xf32>, vector<16x16xf32> -> vector<16x16xf32>
    %111 = arith.addf %11, %110 : vector<16x16xf32>
    %112 = arith.negf %111 : vector<16x16xf32>
    %113 = math.exp %112 : vector<16x16xf32>
    %cst_62 = arith.constant 1.000000e+00 : f32
    %114 = vector.broadcast %cst_62 : f32 to vector<16x16xf32>
    %115 = arith.addf %114, %113 : vector<16x16xf32>
    %116 = arith.divf %114, %115 : vector<16x16xf32>
    %117 = vector.extract_strided_slice %116 {offsets = [0, 0], sizes = [16, 8], strides = [1, 1]} : vector<16x16xf32> to vector<16x8xf32>
    %118 = vector.extract_strided_slice %116 {offsets = [0, 8], sizes = [16, 8], strides = [1, 1]} : vector<16x16xf32> to vector<16x8xf32>
    %119 = arith.mulf %117, %88 : vector<16x8xf32>
    %cst_63 = arith.constant dense<0.000000e+00> : vector<16x8xf32>
    %120 = tpu.matmul %119, %2, %cst_63 {dimension_numbers = #tpu.dot_dimension_numbers<[1], [0], [0], [1], [0, 0, 1, 1], [], []>} : vector<16x8xf32>, vector<8x8xf32>, vector<16x8xf32> -> vector<16x8xf32>
    %cst_64 = arith.constant dense<0.000000e+00> : vector<16x8xf32>
    %121 = tpu.matmul %0, %120, %cst_64 {dimension_numbers = #tpu.dot_dimension_numbers<[1], [0], [0], [1], [0, 0, 1, 1], [], []>} : vector<16x16xf32>, vector<16x8xf32>, vector<16x8xf32> -> vector<16x8xf32>
    %122 = arith.addf %16, %121 : vector<16x8xf32>
    %123 = math.tanh %122 : vector<16x8xf32>
    %124 = arith.subf %88, %123 : vector<16x8xf32>
    %125 = arith.mulf %118, %124 : vector<16x8xf32>
    %126 = arith.addf %123, %125 : vector<16x8xf32>
    %c32 = arith.constant 32 : index
    %c0_65 = arith.constant 0 : index
    %127 = vector.load %arg13[%c32, %c0_65] : memref<192x8xf32, #tpu.memory_space<vmem>>, vector<16x8xf32>
    tpu.vector_store %arg13[%c32, %c0_65], %126 {strides = array<i32>} : memref<192x8xf32, #tpu.memory_space<vmem>>, vector<16x8xf32>,
    %cst_66 = arith.constant dense<0.000000e+00> : vector<16x16xf32>
    %128 = tpu.matmul %107, %1, %cst_66 {dimension_numbers = #tpu.dot_dimension_numbers<[1], [0], [0], [1], [0, 0, 1, 1], [], []>} : vector<16x8xf32>, vector<8x16xf32>, vector<16x16xf32> -> vector<16x16xf32>
    %cst_67 = arith.constant dense<0.000000e+00> : vector<16x16xf32>
    %129 = tpu.matmul %0, %128, %cst_67 {dimension_numbers = #tpu.dot_dimension_numbers<[1], [0], [0], [1], [0, 0, 1, 1], [], []>} : vector<16x16xf32>, vector<16x16xf32>, vector<16x16xf32> -> vector<16x16xf32>
    %130 = arith.addf %25, %129 : vector<16x16xf32>
    %131 = arith.negf %130 : vector<16x16xf32>
    %132 = math.exp %131 : vector<16x16xf32>
    %cst_68 = arith.constant 1.000000e+00 : f32
    %133 = vector.broadcast %cst_68 : f32 to vector<16x16xf32>
    %134 = arith.addf %133, %132 : vector<16x16xf32>
    %135 = arith.divf %133, %134 : vector<16x16xf32>
    %136 = vector.extract_strided_slice %135 {offsets = [0, 0], sizes = [16, 8], strides = [1, 1]} : vector<16x16xf32> to vector<16x8xf32>
    %137 = vector.extract_strided_slice %135 {offsets = [0, 8], sizes = [16, 8], strides = [1, 1]} : vector<16x16xf32> to vector<16x8xf32>
    %138 = arith.mulf %136, %107 : vector<16x8xf32>
    %cst_69 = arith.constant dense<0.000000e+00> : vector<16x8xf32>
    %139 = tpu.matmul %138, %2, %cst_69 {dimension_numbers = #tpu.dot_dimension_numbers<[1], [0], [0], [1], [0, 0, 1, 1], [], []>} : vector<16x8xf32>, vector<8x8xf32>, vector<16x8xf32> -> vector<16x8xf32>
    %cst_70 = arith.constant dense<0.000000e+00> : vector<16x8xf32>
    %140 = tpu.matmul %0, %139, %cst_70 {dimension_numbers = #tpu.dot_dimension_numbers<[1], [0], [0], [1], [0, 0, 1, 1], [], []>} : vector<16x16xf32>, vector<16x8xf32>, vector<16x8xf32> -> vector<16x8xf32>
    %141 = arith.addf %30, %140 : vector<16x8xf32>
    %142 = math.tanh %141 : vector<16x8xf32>
    %143 = arith.subf %107, %142 : vector<16x8xf32>
    %144 = arith.mulf %137, %143 : vector<16x8xf32>
    %145 = arith.addf %142, %144 : vector<16x8xf32>
    %c128 = arith.constant 128 : index
    %c0_71 = arith.constant 0 : index
    %146 = vector.load %arg13[%c128, %c0_71] : memref<192x8xf32, #tpu.memory_space<vmem>>, vector<16x8xf32>
    tpu.vector_store %arg13[%c128, %c0_71], %145 {strides = array<i32>} : memref<192x8xf32, #tpu.memory_space<vmem>>, vector<16x8xf32>,
    %cst_72 = arith.constant dense<0.000000e+00> : vector<16x16xf32>
    %147 = tpu.matmul %126, %1, %cst_72 {dimension_numbers = #tpu.dot_dimension_numbers<[1], [0], [0], [1], [0, 0, 1, 1], [], []>} : vector<16x8xf32>, vector<8x16xf32>, vector<16x16xf32> -> vector<16x16xf32>
    %cst_73 = arith.constant dense<0.000000e+00> : vector<16x16xf32>
    %148 = tpu.matmul %0, %147, %cst_73 {dimension_numbers = #tpu.dot_dimension_numbers<[1], [0], [0], [1], [0, 0, 1, 1], [], []>} : vector<16x16xf32>, vector<16x16xf32>, vector<16x16xf32> -> vector<16x16xf32>
    %149 = arith.addf %11, %148 : vector<16x16xf32>
    %150 = arith.negf %149 : vector<16x16xf32>
    %151 = math.exp %150 : vector<16x16xf32>
    %cst_74 = arith.constant 1.000000e+00 : f32
    %152 = vector.broadcast %cst_74 : f32 to vector<16x16xf32>
    %153 = arith.addf %152, %151 : vector<16x16xf32>
    %154 = arith.divf %152, %153 : vector<16x16xf32>
    %155 = vector.extract_strided_slice %154 {offsets = [0, 0], sizes = [16, 8], strides = [1, 1]} : vector<16x16xf32> to vector<16x8xf32>
    %156 = vector.extract_strided_slice %154 {offsets = [0, 8], sizes = [16, 8], strides = [1, 1]} : vector<16x16xf32> to vector<16x8xf32>
    %157 = arith.mulf %155, %126 : vector<16x8xf32>
    %cst_75 = arith.constant dense<0.000000e+00> : vector<16x8xf32>
    %158 = tpu.matmul %157, %2, %cst_75 {dimension_numbers = #tpu.dot_dimension_numbers<[1], [0], [0], [1], [0, 0, 1, 1], [], []>} : vector<16x8xf32>, vector<8x8xf32>, vector<16x8xf32> -> vector<16x8xf32>
    %cst_76 = arith.constant dense<0.000000e+00> : vector<16x8xf32>
    %159 = tpu.matmul %0, %158, %cst_76 {dimension_numbers = #tpu.dot_dimension_numbers<[1], [0], [0], [1], [0, 0, 1, 1], [], []>} : vector<16x16xf32>, vector<16x8xf32>, vector<16x8xf32> -> vector<16x8xf32>
    %160 = arith.addf %16, %159 : vector<16x8xf32>
    %161 = math.tanh %160 : vector<16x8xf32>
    %162 = arith.subf %126, %161 : vector<16x8xf32>
    %163 = arith.mulf %156, %162 : vector<16x8xf32>
    %164 = arith.addf %161, %163 : vector<16x8xf32>
    %c48 = arith.constant 48 : index
    %c0_77 = arith.constant 0 : index
    %165 = vector.load %arg13[%c48, %c0_77] : memref<192x8xf32, #tpu.memory_space<vmem>>, vector<16x8xf32>
    tpu.vector_store %arg13[%c48, %c0_77], %164 {strides = array<i32>} : memref<192x8xf32, #tpu.memory_space<vmem>>, vector<16x8xf32>,
    %cst_78 = arith.constant dense<0.000000e+00> : vector<16x16xf32>
    %166 = tpu.matmul %145, %1, %cst_78 {dimension_numbers = #tpu.dot_dimension_numbers<[1], [0], [0], [1], [0, 0, 1, 1], [], []>} : vector<16x8xf32>, vector<8x16xf32>, vector<16x16xf32> -> vector<16x16xf32>
    %cst_79 = arith.constant dense<0.000000e+00> : vector<16x16xf32>
    %167 = tpu.matmul %0, %166, %cst_79 {dimension_numbers = #tpu.dot_dimension_numbers<[1], [0], [0], [1], [0, 0, 1, 1], [], []>} : vector<16x16xf32>, vector<16x16xf32>, vector<16x16xf32> -> vector<16x16xf32>
    %168 = arith.addf %25, %167 : vector<16x16xf32>
    %169 = arith.negf %168 : vector<16x16xf32>
    %170 = math.exp %169 : vector<16x16xf32>
    %cst_80 = arith.constant 1.000000e+00 : f32
    %171 = vector.broadcast %cst_80 : f32 to vector<16x16xf32>
    %172 = arith.addf %171, %170 : vector<16x16xf32>
    %173 = arith.divf %171, %172 : vector<16x16xf32>
    %174 = vector.extract_strided_slice %173 {offsets = [0, 0], sizes = [16, 8], strides = [1, 1]} : vector<16x16xf32> to vector<16x8xf32>
    %175 = vector.extract_strided_slice %173 {offsets = [0, 8], sizes = [16, 8], strides = [1, 1]} : vector<16x16xf32> to vector<16x8xf32>
    %176 = arith.mulf %174, %145 : vector<16x8xf32>
    %cst_81 = arith.constant dense<0.000000e+00> : vector<16x8xf32>
    %177 = tpu.matmul %176, %2, %cst_81 {dimension_numbers = #tpu.dot_dimension_numbers<[1], [0], [0], [1], [0, 0, 1, 1], [], []>} : vector<16x8xf32>, vector<8x8xf32>, vector<16x8xf32> -> vector<16x8xf32>
    %cst_82 = arith.constant dense<0.000000e+00> : vector<16x8xf32>
    %178 = tpu.matmul %0, %177, %cst_82 {dimension_numbers = #tpu.dot_dimension_numbers<[1], [0], [0], [1], [0, 0, 1, 1], [], []>} : vector<16x16xf32>, vector<16x8xf32>, vector<16x8xf32> -> vector<16x8xf32>
    %179 = arith.addf %30, %178 : vector<16x8xf32>
    %180 = math.tanh %179 : vector<16x8xf32>
    %181 = arith.subf %145, %180 : vector<16x8xf32>
    %182 = arith.mulf %175, %181 : vector<16x8xf32>
    %183 = arith.addf %180, %182 : vector<16x8xf32>
    %c144 = arith.constant 144 : index
    %c0_83 = arith.constant 0 : index
    %184 = vector.load %arg13[%c144, %c0_83] : memref<192x8xf32, #tpu.memory_space<vmem>>, vector<16x8xf32>
    tpu.vector_store %arg13[%c144, %c0_83], %183 {strides = array<i32>} : memref<192x8xf32, #tpu.memory_space<vmem>>, vector<16x8xf32>,
    %cst_84 = arith.constant dense<0.000000e+00> : vector<16x16xf32>
    %185 = tpu.matmul %164, %1, %cst_84 {dimension_numbers = #tpu.dot_dimension_numbers<[1], [0], [0], [1], [0, 0, 1, 1], [], []>} : vector<16x8xf32>, vector<8x16xf32>, vector<16x16xf32> -> vector<16x16xf32>
    %cst_85 = arith.constant dense<0.000000e+00> : vector<16x16xf32>
    %186 = tpu.matmul %0, %185, %cst_85 {dimension_numbers = #tpu.dot_dimension_numbers<[1], [0], [0], [1], [0, 0, 1, 1], [], []>} : vector<16x16xf32>, vector<16x16xf32>, vector<16x16xf32> -> vector<16x16xf32>
    %187 = arith.addf %11, %186 : vector<16x16xf32>
    %188 = arith.negf %187 : vector<16x16xf32>
    %189 = math.exp %188 : vector<16x16xf32>
    %cst_86 = arith.constant 1.000000e+00 : f32
    %190 = vector.broadcast %cst_86 : f32 to vector<16x16xf32>
    %191 = arith.addf %190, %189 : vector<16x16xf32>
    %192 = arith.divf %190, %191 : vector<16x16xf32>
    %193 = vector.extract_strided_slice %192 {offsets = [0, 0], sizes = [16, 8], strides = [1, 1]} : vector<16x16xf32> to vector<16x8xf32>
    %194 = vector.extract_strided_slice %192 {offsets = [0, 8], sizes = [16, 8], strides = [1, 1]} : vector<16x16xf32> to vector<16x8xf32>
    %195 = arith.mulf %193, %164 : vector<16x8xf32>
    %cst_87 = arith.constant dense<0.000000e+00> : vector<16x8xf32>
    %196 = tpu.matmul %195, %2, %cst_87 {dimension_numbers = #tpu.dot_dimension_numbers<[1], [0], [0], [1], [0, 0, 1, 1], [], []>} : vector<16x8xf32>, vector<8x8xf32>, vector<16x8xf32> -> vector<16x8xf32>
    %cst_88 = arith.constant dense<0.000000e+00> : vector<16x8xf32>
    %197 = tpu.matmul %0, %196, %cst_88 {dimension_numbers = #tpu.dot_dimension_numbers<[1], [0], [0], [1], [0, 0, 1, 1], [], []>} : vector<16x16xf32>, vector<16x8xf32>, vector<16x8xf32> -> vector<16x8xf32>
    %198 = arith.addf %16, %197 : vector<16x8xf32>
    %199 = math.tanh %198 : vector<16x8xf32>
    %200 = arith.subf %164, %199 : vector<16x8xf32>
    %201 = arith.mulf %194, %200 : vector<16x8xf32>
    %202 = arith.addf %199, %201 : vector<16x8xf32>
    %c64 = arith.constant 64 : index
    %c0_89 = arith.constant 0 : index
    %203 = vector.load %arg13[%c64, %c0_89] : memref<192x8xf32, #tpu.memory_space<vmem>>, vector<16x8xf32>
    tpu.vector_store %arg13[%c64, %c0_89], %202 {strides = array<i32>} : memref<192x8xf32, #tpu.memory_space<vmem>>, vector<16x8xf32>,
    %cst_90 = arith.constant dense<0.000000e+00> : vector<16x16xf32>
    %204 = tpu.matmul %183, %1, %cst_90 {dimension_numbers = #tpu.dot_dimension_numbers<[1], [0], [0], [1], [0, 0, 1, 1], [], []>} : vector<16x8xf32>, vector<8x16xf32>, vector<16x16xf32> -> vector<16x16xf32>
    %cst_91 = arith.constant dense<0.000000e+00> : vector<16x16xf32>
    %205 = tpu.matmul %0, %204, %cst_91 {dimension_numbers = #tpu.dot_dimension_numbers<[1], [0], [0], [1], [0, 0, 1, 1], [], []>} : vector<16x16xf32>, vector<16x16xf32>, vector<16x16xf32> -> vector<16x16xf32>
    %206 = arith.addf %25, %205 : vector<16x16xf32>
    %207 = arith.negf %206 : vector<16x16xf32>
    %208 = math.exp %207 : vector<16x16xf32>
    %cst_92 = arith.constant 1.000000e+00 : f32
    %209 = vector.broadcast %cst_92 : f32 to vector<16x16xf32>
    %210 = arith.addf %209, %208 : vector<16x16xf32>
    %211 = arith.divf %209, %210 : vector<16x16xf32>
    %212 = vector.extract_strided_slice %211 {offsets = [0, 0], sizes = [16, 8], strides = [1, 1]} : vector<16x16xf32> to vector<16x8xf32>
    %213 = vector.extract_strided_slice %211 {offsets = [0, 8], sizes = [16, 8], strides = [1, 1]} : vector<16x16xf32> to vector<16x8xf32>
    %214 = arith.mulf %212, %183 : vector<16x8xf32>
    %cst_93 = arith.constant dense<0.000000e+00> : vector<16x8xf32>
    %215 = tpu.matmul %214, %2, %cst_93 {dimension_numbers = #tpu.dot_dimension_numbers<[1], [0], [0], [1], [0, 0, 1, 1], [], []>} : vector<16x8xf32>, vector<8x8xf32>, vector<16x8xf32> -> vector<16x8xf32>
    %cst_94 = arith.constant dense<0.000000e+00> : vector<16x8xf32>
    %216 = tpu.matmul %0, %215, %cst_94 {dimension_numbers = #tpu.dot_dimension_numbers<[1], [0], [0], [1], [0, 0, 1, 1], [], []>} : vector<16x16xf32>, vector<16x8xf32>, vector<16x8xf32> -> vector<16x8xf32>
    %217 = arith.addf %30, %216 : vector<16x8xf32>
    %218 = math.tanh %217 : vector<16x8xf32>
    %219 = arith.subf %183, %218 : vector<16x8xf32>
    %220 = arith.mulf %213, %219 : vector<16x8xf32>
    %221 = arith.addf %218, %220 : vector<16x8xf32>
    %c160 = arith.constant 160 : index
    %c0_95 = arith.constant 0 : index
    %222 = vector.load %arg13[%c160, %c0_95] : memref<192x8xf32, #tpu.memory_space<vmem>>, vector<16x8xf32>
    tpu.vector_store %arg13[%c160, %c0_95], %221 {strides = array<i32>} : memref<192x8xf32, #tpu.memory_space<vmem>>, vector<16x8xf32>,
    %cst_96 = arith.constant dense<0.000000e+00> : vector<16x16xf32>
    %223 = tpu.matmul %202, %1, %cst_96 {dimension_numbers = #tpu.dot_dimension_numbers<[1], [0], [0], [1], [0, 0, 1, 1], [], []>} : vector<16x8xf32>, vector<8x16xf32>, vector<16x16xf32> -> vector<16x16xf32>
    %cst_97 = arith.constant dense<0.000000e+00> : vector<16x16xf32>
    %224 = tpu.matmul %0, %223, %cst_97 {dimension_numbers = #tpu.dot_dimension_numbers<[1], [0], [0], [1], [0, 0, 1, 1], [], []>} : vector<16x16xf32>, vector<16x16xf32>, vector<16x16xf32> -> vector<16x16xf32>
    %225 = arith.addf %11, %224 : vector<16x16xf32>
    %226 = arith.negf %225 : vector<16x16xf32>
    %227 = math.exp %226 : vector<16x16xf32>
    %cst_98 = arith.constant 1.000000e+00 : f32
    %228 = vector.broadcast %cst_98 : f32 to vector<16x16xf32>
    %229 = arith.addf %228, %227 : vector<16x16xf32>
    %230 = arith.divf %228, %229 : vector<16x16xf32>
    %231 = vector.extract_strided_slice %230 {offsets = [0, 0], sizes = [16, 8], strides = [1, 1]} : vector<16x16xf32> to vector<16x8xf32>
    %232 = vector.extract_strided_slice %230 {offsets = [0, 8], sizes = [16, 8], strides = [1, 1]} : vector<16x16xf32> to vector<16x8xf32>
    %233 = arith.mulf %231, %202 : vector<16x8xf32>
    %cst_99 = arith.constant dense<0.000000e+00> : vector<16x8xf32>
    %234 = tpu.matmul %233, %2, %cst_99 {dimension_numbers = #tpu.dot_dimension_numbers<[1], [0], [0], [1], [0, 0, 1, 1], [], []>} : vector<16x8xf32>, vector<8x8xf32>, vector<16x8xf32> -> vector<16x8xf32>
    %cst_100 = arith.constant dense<0.000000e+00> : vector<16x8xf32>
    %235 = tpu.matmul %0, %234, %cst_100 {dimension_numbers = #tpu.dot_dimension_numbers<[1], [0], [0], [1], [0, 0, 1, 1], [], []>} : vector<16x16xf32>, vector<16x8xf32>, vector<16x8xf32> -> vector<16x8xf32>
    %236 = arith.addf %16, %235 : vector<16x8xf32>
    %237 = math.tanh %236 : vector<16x8xf32>
    %238 = arith.subf %202, %237 : vector<16x8xf32>
    %239 = arith.mulf %232, %238 : vector<16x8xf32>
    %240 = arith.addf %237, %239 : vector<16x8xf32>
    %c80 = arith.constant 80 : index
    %c0_101 = arith.constant 0 : index
    %241 = vector.load %arg13[%c80, %c0_101] : memref<192x8xf32, #tpu.memory_space<vmem>>, vector<16x8xf32>
    tpu.vector_store %arg13[%c80, %c0_101], %240 {strides = array<i32>} : memref<192x8xf32, #tpu.memory_space<vmem>>, vector<16x8xf32>,
    %cst_102 = arith.constant dense<0.000000e+00> : vector<16x16xf32>
    %242 = tpu.matmul %221, %1, %cst_102 {dimension_numbers = #tpu.dot_dimension_numbers<[1], [0], [0], [1], [0, 0, 1, 1], [], []>} : vector<16x8xf32>, vector<8x16xf32>, vector<16x16xf32> -> vector<16x16xf32>
    %cst_103 = arith.constant dense<0.000000e+00> : vector<16x16xf32>
    %243 = tpu.matmul %0, %242, %cst_103 {dimension_numbers = #tpu.dot_dimension_numbers<[1], [0], [0], [1], [0, 0, 1, 1], [], []>} : vector<16x16xf32>, vector<16x16xf32>, vector<16x16xf32> -> vector<16x16xf32>
    %244 = arith.addf %25, %243 : vector<16x16xf32>
    %245 = arith.negf %244 : vector<16x16xf32>
    %246 = math.exp %245 : vector<16x16xf32>
    %cst_104 = arith.constant 1.000000e+00 : f32
    %247 = vector.broadcast %cst_104 : f32 to vector<16x16xf32>
    %248 = arith.addf %247, %246 : vector<16x16xf32>
    %249 = arith.divf %247, %248 : vector<16x16xf32>
    %250 = vector.extract_strided_slice %249 {offsets = [0, 0], sizes = [16, 8], strides = [1, 1]} : vector<16x16xf32> to vector<16x8xf32>
    %251 = vector.extract_strided_slice %249 {offsets = [0, 8], sizes = [16, 8], strides = [1, 1]} : vector<16x16xf32> to vector<16x8xf32>
    %252 = arith.mulf %250, %221 : vector<16x8xf32>
    %cst_105 = arith.constant dense<0.000000e+00> : vector<16x8xf32>
    %253 = tpu.matmul %252, %2, %cst_105 {dimension_numbers = #tpu.dot_dimension_numbers<[1], [0], [0], [1], [0, 0, 1, 1], [], []>} : vector<16x8xf32>, vector<8x8xf32>, vector<16x8xf32> -> vector<16x8xf32>
    %cst_106 = arith.constant dense<0.000000e+00> : vector<16x8xf32>
    %254 = tpu.matmul %0, %253, %cst_106 {dimension_numbers = #tpu.dot_dimension_numbers<[1], [0], [0], [1], [0, 0, 1, 1], [], []>} : vector<16x16xf32>, vector<16x8xf32>, vector<16x8xf32> -> vector<16x8xf32>
    %255 = arith.addf %30, %254 : vector<16x8xf32>
    %256 = math.tanh %255 : vector<16x8xf32>
    %257 = arith.subf %221, %256 : vector<16x8xf32>
    %258 = arith.mulf %251, %257 : vector<16x8xf32>
    %259 = arith.addf %256, %258 : vector<16x8xf32>
    %c176 = arith.constant 176 : index
    %c0_107 = arith.constant 0 : index
    %260 = vector.load %arg13[%c176, %c0_107] : memref<192x8xf32, #tpu.memory_space<vmem>>, vector<16x8xf32>
    tpu.vector_store %arg13[%c176, %c0_107], %259 {strides = array<i32>} : memref<192x8xf32, #tpu.memory_space<vmem>>, vector<16x8xf32>,
    %c0_108 = arith.constant 0 : index
    %c0_109 = arith.constant 0 : index
    %261 = vector.load %arg13[%c0_108, %c0_109] : memref<192x8xf32, #tpu.memory_space<vmem>>, vector<192x8xf32>
    %c0_110 = arith.constant 0 : index
    %c0_111 = arith.constant 0 : index
    %262 = vector.load %arg10[%c0_110, %c0_111] : memref<8x128xf32, #tpu.memory_space<vmem>>, vector<8x128xf32>
    %cst_112 = arith.constant dense<0.000000e+00> : vector<192x128xf32>
    %263 = tpu.matmul %261, %262, %cst_112 {dimension_numbers = #tpu.dot_dimension_numbers<[1], [0], [0], [1], [0, 0, 1, 1], [], []>} : vector<192x8xf32>, vector<8x128xf32>, vector<192x128xf32> -> vector<192x128xf32>
    %c0_113 = arith.constant 0 : index
    %c0_114 = arith.constant 0 : index
    %264 = vector.load %arg11[%c0_113, %c0_114] : memref<1x128xf32, #tpu.memory_space<vmem>>, vector<1x128xf32>
    %265 = vector.broadcast %264 : vector<1x128xf32> to vector<192x128xf32>
    %266 = arith.addf %263, %265 : vector<192x128xf32>
    %267 = arith.negf %266 : vector<192x128xf32>
    %268 = math.exp %267 : vector<192x128xf32>
    %cst_115 = arith.constant 1.000000e+00 : f32
    %269 = vector.broadcast %cst_115 : f32 to vector<192x128xf32>
    %270 = arith.addf %269, %268 : vector<192x128xf32>
    %271 = arith.divf %269, %270 : vector<192x128xf32>
    %c0_116 = arith.constant 0 : index
    %c0_117 = arith.constant 0 : index
    %c0_118 = arith.constant 0 : index
    %272 = vector.load %arg12[%c0_116, %c0_117, %c0_118] : memref<1x192x128xf32, #tpu.memory_space<vmem>>, vector<1x192x128xf32>
    %273 = vector.shape_cast %272 : vector<1x192x128xf32> to vector<192x128xf32>
    %274 = vector.shape_cast %271 : vector<192x128xf32> to vector<1x192x128xf32>
    tpu.vector_store %arg12[%c0_116, %c0_117, %c0_118], %274 {strides = array<i32>} : memref<1x192x128xf32, #tpu.memory_space<vmem>>, vector<1x192x128xf32>,
    return
  }
  func.func @transform_0(%arg0: i32) -> (i32, i32, i32) {
    %c0_i32 = arith.constant 0 : i32
    %c0_i32_0 = arith.constant 0 : i32
    %c0_i32_1 = arith.constant 0 : i32
    return %arg0, %c0_i32, %c0_i32_0 : i32, i32, i32
  }
  func.func @transform_1(%arg0: i32) -> (i32, i32, i32) {
    %c0_i32 = arith.constant 0 : i32
    %c0_i32_0 = arith.constant 0 : i32
    %c0_i32_1 = arith.constant 0 : i32
    return %arg0, %c0_i32, %c0_i32_0 : i32, i32, i32
  }
  func.func @transform_2(%arg0: i32) -> (i32, i32) {
    %c0_i32 = arith.constant 0 : i32
    %c0_i32_0 = arith.constant 0 : i32
    %c0_i32_1 = arith.constant 0 : i32
    return %c0_i32, %c0_i32_0 : i32, i32
  }
  func.func @transform_3(%arg0: i32) -> (i32, i32) {
    %c0_i32 = arith.constant 0 : i32
    %c0_i32_0 = arith.constant 0 : i32
    %c0_i32_1 = arith.constant 0 : i32
    return %c0_i32, %c0_i32_0 : i32, i32
  }
  func.func @transform_4(%arg0: i32) -> (i32, i32) {
    %c0_i32 = arith.constant 0 : i32
    %c0_i32_0 = arith.constant 0 : i32
    %c0_i32_1 = arith.constant 0 : i32
    return %c0_i32, %c0_i32_0 : i32, i32
  }
  func.func @transform_5(%arg0: i32) -> (i32, i32) {
    %c0_i32 = arith.constant 0 : i32
    %c0_i32_0 = arith.constant 0 : i32
    %c0_i32_1 = arith.constant 0 : i32
    return %c0_i32, %c0_i32_0 : i32, i32
  }
  func.func @transform_6(%arg0: i32) -> (i32, i32) {
    %c0_i32 = arith.constant 0 : i32
    %c0_i32_0 = arith.constant 0 : i32
    %c0_i32_1 = arith.constant 0 : i32
    return %c0_i32, %c0_i32_0 : i32, i32
  }
  func.func @transform_7(%arg0: i32) -> (i32, i32) {
    %c0_i32 = arith.constant 0 : i32
    %c0_i32_0 = arith.constant 0 : i32
    %c0_i32_1 = arith.constant 0 : i32
    return %c0_i32, %c0_i32_0 : i32, i32
  }
  func.func @transform_8(%arg0: i32) -> (i32, i32) {
    %c0_i32 = arith.constant 0 : i32
    %c0_i32_0 = arith.constant 0 : i32
    %c0_i32_1 = arith.constant 0 : i32
    return %c0_i32, %c0_i32_0 : i32, i32
  }
  func.func @transform_9(%arg0: i32) -> (i32, i32) {
    %c0_i32 = arith.constant 0 : i32
    %c0_i32_0 = arith.constant 0 : i32
    %c0_i32_1 = arith.constant 0 : i32
    return %c0_i32, %c0_i32_0 : i32, i32
  }
  func.func @transform_10(%arg0: i32) -> (i32, i32) {
    %c0_i32 = arith.constant 0 : i32
    %c0_i32_0 = arith.constant 0 : i32
    %c0_i32_1 = arith.constant 0 : i32
    return %c0_i32, %c0_i32_0 : i32, i32
  }
  func.func @transform_11(%arg0: i32) -> (i32, i32, i32) {
    %c0_i32 = arith.constant 0 : i32
    %c0_i32_0 = arith.constant 0 : i32
    %c0_i32_1 = arith.constant 0 : i32
    return %arg0, %c0_i32, %c0_i32_0 : i32, i32, i32
  }
}

</mosaic_0001>

<llo_original>
// kernel: tpu_custom_call.1
$region0: #{tpu_custom_call.1}
  #allocation0 [shape = 'u32[]', space=smem, size = 0x4, offset = 0x4, fixed_abs, tag = 'smem constant byte address 0x4 - core index']
  #allocation1 [shape = 'u32[72,128]{1,0:T(1,128)}', space=vmem, size = 0x9000, scoped, tag = 'internal scratch']
  #allocation2 [shape = 'f32[192,8]{1,0:T(8,128)}', space=vmem, size = 0x18000, scoped, tag = 'scratch operand']
  %s0 = inlined_call_operand.vmem [shape: f32[2,16,8], index: 0, kind: input, shape index: {}]
  %s1 = inlined_call_operand.vmem [shape: f32[2,16,8], index: 1, kind: input, shape index: {}]
  %s2 = inlined_call_operand.vmem [shape: f32[16,16], index: 2, kind: input, shape index: {}]
  %s3 = inlined_call_operand.vmem [shape: f32[8,16], index: 3, kind: input, shape index: {}]
  %s4 = inlined_call_operand.vmem [shape: f32[8,16], index: 4, kind: input, shape index: {}]
  %s5 = inlined_call_operand.vmem [shape: f32[1,16], index: 5, kind: input, shape index: {}]
  %s6 = inlined_call_operand.vmem [shape: f32[8,8], index: 6, kind: input, shape index: {}]
  %s7 = inlined_call_operand.vmem [shape: f32[8,8], index: 7, kind: input, shape index: {}]
  %s8 = inlined_call_operand.vmem [shape: f32[1,8], index: 8, kind: input, shape index: {}]
  %s9 = inlined_call_operand.vmem [shape: f32[8,128], index: 9, kind: input, shape index: {}]
  %s10 = inlined_call_operand.vmem [shape: f32[1,128], index: 10, kind: input, shape index: {}]
  %s11 = inlined_call_operand.hbm [shape: f32[1,192,128], index: 11, kind: output, shape index: {}]
  %s12 = sld [smem:[#allocation0]]
  $region54: #{tpu_custom_call.1} parent=0
    _
  %s14 = ssub.s32 1, %s12
  %s15 = scalar_select 0, %s14, %s12
  $region1: #{tpu_custom_call.1} parent=0
    #allocation3 [shape = 'u8[98304]{0}', space=vmem, size = 0x18000, scoped, tag = 'output window, operand 0, single buffered']
    #allocation4 [shape = 's32[1]{0}', space=sflag, size = 0x4, scoped, tag = 'scoped memory for tpu_custom_call.1']
    %16 = vsyncpa [#allocation4], 0
    // Predicated region
    $region2: #{tpu_custom_call.1} parent=1 // pred_check
      _
    $region3: #{tpu_custom_call.1} parent=1 // pred_check_branch
      %18 = sbr.rel (0) target = $region5
    $region4: #{tpu_custom_call.1} parent=1 // pred_region
      _
    $region5: #{tpu_custom_call.1} parent=1 // pred_fallthru
      _
    // Predicated region
    $region6: #{tpu_custom_call.1} parent=1 // pred_check
      _
    $region7: #{tpu_custom_call.1} parent=1 // pred_check_branch
      %20 = sbr.rel (0) target = $region9
    $region8: #{tpu_custom_call.1} parent=1 // pred_region
      _
    $region9: #{tpu_custom_call.1} parent=1 // pred_fallthru
      _
    // Predicated region
    $region10: #{tpu_custom_call.1} parent=1 // pred_check
      _
    $region11: #{tpu_custom_call.1} parent=1 // pred_check_branch
      %22 = sbr.rel (0) target = $region13
    $region12: #{tpu_custom_call.1} parent=1 // pred_region
      _
    $region13: #{tpu_custom_call.1} parent=1 // pred_fallthru
      _
    // Predicated region
    $region14: #{tpu_custom_call.1} parent=1 // pred_check
      _
    $region15: #{tpu_custom_call.1} parent=1 // pred_check_branch
      %24 = sbr.rel (0) target = $region17
    $region16: #{tpu_custom_call.1} parent=1 // pred_region
      _
    $region17: #{tpu_custom_call.1} parent=1 // pred_fallthru
      _
    // Predicated region
    $region18: #{tpu_custom_call.1} parent=1 // pred_check
      _
    $region19: #{tpu_custom_call.1} parent=1 // pred_check_branch
      %26 = sbr.rel (0) target = $region21
    $region20: #{tpu_custom_call.1} parent=1 // pred_region
      _
    $region21: #{tpu_custom_call.1} parent=1 // pred_fallthru
      _
    // Predicated region
    $region22: #{tpu_custom_call.1} parent=1 // pred_check
      _
    $region23: #{tpu_custom_call.1} parent=1 // pred_check_branch
      %28 = sbr.rel (0) target = $region25
    $region24: #{tpu_custom_call.1} parent=1 // pred_region
      _
    $region25: #{tpu_custom_call.1} parent=1 // pred_fallthru
      _
    // Predicated region
    $region26: #{tpu_custom_call.1} parent=1 // pred_check
      _
    $region27: #{tpu_custom_call.1} parent=1 // pred_check_branch
      %30 = sbr.rel (0) target = $region29
    $region28: #{tpu_custom_call.1} parent=1 // pred_region
      _
    $region29: #{tpu_custom_call.1} parent=1 // pred_fallthru
      _
    // Predicated region
    $region30: #{tpu_custom_call.1} parent=1 // pred_check
      _
    $region31: #{tpu_custom_call.1} parent=1 // pred_check_branch
      %32 = sbr.rel (0) target = $region33
    $region32: #{tpu_custom_call.1} parent=1 // pred_region
      _
    $region33: #{tpu_custom_call.1} parent=1 // pred_fallthru
      _
    // Predicated region
    $region34: #{tpu_custom_call.1} parent=1 // pred_check
      _
    $region35: #{tpu_custom_call.1} parent=1 // pred_check_branch
      %34 = sbr.rel (0) target = $region37
    $region36: #{tpu_custom_call.1} parent=1 // pred_region
      _
    $region37: #{tpu_custom_call.1} parent=1 // pred_fallthru
      _
    // Predicated region
    $region38: #{tpu_custom_call.1} parent=1 // pred_check
      _
    $region39: #{tpu_custom_call.1} parent=1 // pred_check_branch
      %36 = sbr.rel (0) target = $region41
    $region40: #{tpu_custom_call.1} parent=1 // pred_region
      _
    $region41: #{tpu_custom_call.1} parent=1 // pred_fallthru
      _
    // Predicated region
    $region42: #{tpu_custom_call.1} parent=1 // pred_check
      _
    $region43: #{tpu_custom_call.1} parent=1 // pred_check_branch
      %38 = sbr.rel (0) target = $region45
    $region44: #{tpu_custom_call.1} parent=1 // pred_region
      _
    $region45: #{tpu_custom_call.1} parent=1 // pred_fallthru
      _
    %v39 = vld [vmem:[%s2] sm:$0xff]
    %v40 = vld [vmem:[%s2 + $0x8] sm:$0xff]
    %v41 = vld [vmem:[%s4] sm:$0xff]
    %v42 = vld [vmem:[%s7] sm:$0xff]
    %v43 = vld [vmem:[%s5] sm:$0x1]
    %v44 = vld [vmem:[%s8] sm:$0x1]
    %v45 = vld [vmem:[%s0] sm:$0xff]
    %v46 = vld [vmem:[%s0 + $0x8] sm:$0xff]
    %v47 = vld [vmem:[%s3] sm:$0xff]
    %vm48 = vcmask 64512
    %v50 = vsel %vm48, %v45, 0
    %v53 = vsel %vm48, %v46, 0
    %55 = vmatpush.msra.mxu0 0.0
    %56 = vmatpush.msra.mxu0 0.0
    %57 = vmatpush.msra.mxu0 0.0
    %58 = vmatpush.msra.mxu0 0.0
    %59 = vmatpush.msra.mxu0 0.0
    %60 = vmatpush.msra.mxu0 0.0
    %61 = vmatpush.msra.mxu0 0.0
    %62 = vmatpush.msra.mxu0 0.0
    %63 = vmatpush.msra.mxu0 0.0
    %64 = vmatpush.msra.mxu0 0.0
    %65 = vmatpush.msra.mxu0 0.0
    %66 = vmatpush.msra.mxu0 0.0
    %67 = vmatpush.msra.mxu0 0.0
    %68 = vmatpush.msra.mxu0 0.0
    %69 = vmatpush.msra.mxu0 0.0
    %70 = vmatpush.msra.mxu0 %v47
    %71 = vmatmul.f32.gmra.mxu0 %v50
    %v72 = vpop.f32.mrf.mxu0
    %v73 = vadd.f32 0.0, %v72
    %74 = vmatmul.f32.gmra.mxu0 %v53
    %v75 = vpop.f32.mrf.mxu0
    %v76 = vadd.f32 0.0, %v75
    %77 = vdwg.mxu0
    %v79 = vperm.slane %v43, 0
    %vm81 = vcmask 130048
    %v83 = vsel %vm81, %v39, 0
    %v86 = vsel %vm81, %v40, 0
    %88 = vmatpush.msra.mxu0 0.0
    %89 = vmatpush.msra.mxu0 0.0
    %90 = vmatpush.msra.mxu0 0.0
    %91 = vmatpush.msra.mxu0 0.0
    %92 = vmatpush.msra.mxu0 0.0
    %93 = vmatpush.msra.mxu0 0.0
    %94 = vmatpush.msra.mxu0 0.0
    %95 = vmatpush.msra.mxu0 0.0
    %96 = vmatpush.msra.mxu0 0.0
    %97 = vmatpush.msra.mxu0 0.0
    %98 = vmatpush.msra.mxu0 0.0
    %99 = vmatpush.msra.mxu0 0.0
    %100 = vmatpush.msra.mxu0 0.0
    %101 = vmatpush.msra.mxu0 0.0
    %102 = vmatpush.msra.mxu0 %v76
    %103 = vmatpush.msra.mxu0 %v73
    %104 = vmatmul.f32.gmra.mxu0 %v83
    %v105 = vpop.f32.mrf.mxu0
    %v106 = vadd.f32 %v79, %v105
    %107 = vmatmul.f32.gmra.mxu0 %v86
    %v108 = vpop.f32.mrf.mxu0
    %v109 = vadd.f32 %v79, %v108
    %110 = vdwg.mxu0
    %v111 = vld [vmem:[%s6] sm:$0xff]
    %112 = vmatpush.msra.mxu0 0.0
    %113 = vmatpush.msra.mxu0 0.0
    %114 = vmatpush.msra.mxu0 0.0
    %115 = vmatpush.msra.mxu0 0.0
    %116 = vmatpush.msra.mxu0 0.0
    %117 = vmatpush.msra.mxu0 0.0
    %118 = vmatpush.msra.mxu0 0.0
    %119 = vmatpush.msra.mxu0 0.0
    %120 = vmatpush.msra.mxu0 0.0
    %121 = vmatpush.msra.mxu0 0.0
    %122 = vmatpush.msra.mxu0 0.0
    %123 = vmatpush.msra.mxu0 0.0
    %124 = vmatpush.msra.mxu0 0.0
    %125 = vmatpush.msra.mxu0 0.0
    %126 = vmatpush.msra.mxu0 0.0
    %127 = vmatpush.msra.mxu0 %v111
    %128 = vmatmul.f32.gmra.mxu0 %v50
    %v129 = vpop.f32.mrf.mxu0
    %v130 = vadd.f32 0.0, %v129
    %131 = vmatmul.f32.gmra.mxu0 %v53
    %v132 = vpop.f32.mrf.mxu0
    %v133 = vadd.f32 0.0, %v132
    %134 = vdwg.mxu0
    %v136 = vperm.slane %v44, 0
    %138 = vmatpush.msra.mxu0 0.0
    %139 = vmatpush.msra.mxu0 0.0
    %140 = vmatpush.msra.mxu0 0.0
    %141 = vmatpush.msra.mxu0 0.0
    %142 = vmatpush.msra.mxu0 0.0
    %143 = vmatpush.msra.mxu0 0.0
    %144 = vmatpush.msra.mxu0 0.0
    %145 = vmatpush.msra.mxu0 0.0
    %146 = vmatpush.msra.mxu0 0.0
    %147 = vmatpush.msra.mxu0 0.0
    %148 = vmatpush.msra.mxu0 0.0
    %149 = vmatpush.msra.mxu0 0.0
    %150 = vmatpush.msra.mxu0 0.0
    %151 = vmatpush.msra.mxu0 0.0
    %152 = vmatpush.msra.mxu0 %v133
    %153 = vmatpush.msra.mxu0 %v130
    %154 = vmatmul.f32.gmra.mxu0 %v83
    %v155 = vpop.f32.mrf.mxu0
    %v156 = vadd.f32 %v136, %v155
    %157 = vmatmul.f32.gmra.mxu0 %v86
    %v158 = vpop.f32.mrf.mxu0
    %v159 = vadd.f32 %v136, %v158
    %160 = vdwg.mxu0
    %v161 = vld [vmem:[%s1] sm:$0xff]
    %v162 = vld [vmem:[%s1 + $0x8] sm:$0xff]
    %s163 = scalar_lea.vmem %s0, 16
    %v164 = vld [vmem:[%s163] sm:$0xff]
    %v165 = vld [vmem:[%s163 + $0x8] sm:$0xff]
    %v167 = vsel %vm48, %v164, 0
    %v170 = vsel %vm48, %v165, 0
    %172 = vmatpush.msra.mxu0 0.0
    %173 = vmatpush.msra.mxu0 0.0
    %174 = vmatpush.msra.mxu0 0.0
    %175 = vmatpush.msra.mxu0 0.0
    %176 = vmatpush.msra.mxu0 0.0
    %177 = vmatpush.msra.mxu0 0.0
    %178 = vmatpush.msra.mxu0 0.0
    %179 = vmatpush.msra.mxu0 0.0
    %180 = vmatpush.msra.mxu0 0.0
    %181 = vmatpush.msra.mxu0 0.0
    %182 = vmatpush.msra.mxu0 0.0
    %183 = vmatpush.msra.mxu0 0.0
    %184 = vmatpush.msra.mxu0 0.0
    %185 = vmatpush.msra.mxu0 0.0
    %186 = vmatpush.msra.mxu0 0.0
    %187 = vmatpush.msra.mxu0 %v47
    %188 = vmatmul.f32.gmra.mxu0 %v167
    %v189 = vpop.f32.mrf.mxu0
    %v190 = vadd.f32 0.0, %v189
    %191 = vmatmul.f32.gmra.mxu0 %v170
    %v192 = vpop.f32.mrf.mxu0
    %v193 = vadd.f32 0.0, %v192
    %194 = vdwg.mxu0
    %195 = vmatpush.msra.mxu0 0.0
    %196 = vmatpush.msra.mxu0 0.0
    %197 = vmatpush.msra.mxu0 0.0
    %198 = vmatpush.msra.mxu0 0.0
    %199 = vmatpush.msra.mxu0 0.0
    %200 = vmatpush.msra.mxu0 0.0
    %201 = vmatpush.msra.mxu0 0.0
    %202 = vmatpush.msra.mxu0 0.0
    %203 = vmatpush.msra.mxu0 0.0
    %204 = vmatpush.msra.mxu0 0.0
    %205 = vmatpush.msra.mxu0 0.0
    %206 = vmatpush.msra.mxu0 0.0
    %207 = vmatpush.msra.mxu0 0.0
    %208 = vmatpush.msra.mxu0 0.0
    %209 = vmatpush.msra.mxu0 %v193
    %210 = vmatpush.msra.mxu0 %v190
    %211 = vmatmul.f32.gmra.mxu0 %v83
    %v212 = vpop.f32.mrf.mxu0
    %v213 = vadd.f32 %v79, %v212
    %214 = vmatmul.f32.gmra.mxu0 %v86
    %v215 = vpop.f32.mrf.mxu0
    %v216 = vadd.f32 %v79, %v215
    %217 = vdwg.mxu0
    %218 = vmatpush.msra.mxu0 0.0
    %219 = vmatpush.msra.mxu0 0.0
    %220 = vmatpush.msra.mxu0 0.0
    %221 = vmatpush.msra.mxu0 0.0
    %222 = vmatpush.msra.mxu0 0.0
    %223 = vmatpush.msra.mxu0 0.0
    %224 = vmatpush.msra.mxu0 0.0
    %225 = vmatpush.msra.mxu0 0.0
    %226 = vmatpush.msra.mxu0 0.0
    %227 = vmatpush.msra.mxu0 0.0
    %228 = vmatpush.msra.mxu0 0.0
    %229 = vmatpush.msra.mxu0 0.0
    %230 = vmatpush.msra.mxu0 0.0
    %231 = vmatpush.msra.mxu0 0.0
    %232 = vmatpush.msra.mxu0 0.0
    %233 = vmatpush.msra.mxu0 %v111
    %234 = vmatmul.f32.gmra.mxu0 %v167
    %v235 = vpop.f32.mrf.mxu0
    %v236 = vadd.f32 0.0, %v235
    %237 = vmatmul.f32.gmra.mxu0 %v170
    %v238 = vpop.f32.mrf.mxu0
    %v239 = vadd.f32 0.0, %v238
    %240 = vdwg.mxu0
    %241 = vmatpush.msra.mxu0 0.0
    %242 = vmatpush.msra.mxu0 0.0
    %243 = vmatpush.msra.mxu0 0.0
    %244 = vmatpush.msra.mxu0 0.0
    %245 = vmatpush.msra.mxu0 0.0
    %246 = vmatpush.msra.mxu0 0.0
    %247 = vmatpush.msra.mxu0 0.0
    %248 = vmatpush.msra.mxu0 0.0
    %249 = vmatpush.msra.mxu0 0.0
    %250 = vmatpush.msra.mxu0 0.0
    %251 = vmatpush.msra.mxu0 0.0
    %252 = vmatpush.msra.mxu0 0.0
    %253 = vmatpush.msra.mxu0 0.0
    %254 = vmatpush.msra.mxu0 0.0
    %255 = vmatpush.msra.mxu0 %v239
    %256 = vmatpush.msra.mxu0 %v236
    %257 = vmatmul.f32.gmra.mxu0 %v83
    %v258 = vpop.f32.mrf.mxu0
    %v259 = vadd.f32 %v136, %v258
    %260 = vmatmul.f32.gmra.mxu0 %v86
    %v261 = vpop.f32.mrf.mxu0
    %v262 = vadd.f32 %v136, %v261
    %263 = vdwg.mxu0
    %s264 = scalar_lea.vmem %s1, 16
    %v265 = vld [vmem:[%s264] sm:$0xff]
    %v266 = vld [vmem:[%s264 + $0x8] sm:$0xff]
    %v268 = vsel %vm48, %v161, 0
    %v271 = vsel %vm48, %v162, 0
    %273 = vmatpush.msra.mxu0 0.0
    %274 = vmatpush.msra.mxu0 0.0
    %275 = vmatpush.msra.mxu0 0.0
    %276 = vmatpush.msra.mxu0 0.0
    %277 = vmatpush.msra.mxu0 0.0
    %278 = vmatpush.msra.mxu0 0.0
    %279 = vmatpush.msra.mxu0 0.0
    %280 = vmatpush.msra.mxu0 0.0
    %281 = vmatpush.msra.mxu0 0.0
    %282 = vmatpush.msra.mxu0 0.0
    %283 = vmatpush.msra.mxu0 0.0
    %284 = vmatpush.msra.mxu0 0.0
    %285 = vmatpush.msra.mxu0 0.0
    %286 = vmatpush.msra.mxu0 0.0
    %287 = vmatpush.msra.mxu0 0.0
    %288 = vmatpush.msra.mxu0 %v41
    %289 = vmatmul.f32.gmra.mxu0 %v268
    %v290 = vpop.f32.mrf.mxu0
    %v291 = vadd.f32 0.0, %v290
    %292 = vmatmul.f32.gmra.mxu0 %v271
    %v293 = vpop.f32.mrf.mxu0
    %v294 = vadd.f32 0.0, %v293
    %295 = vdwg.mxu0
    %296 = vmatpush.msra.mxu0 0.0
    %297 = vmatpush.msra.mxu0 0.0
    %298 = vmatpush.msra.mxu0 0.0
    %299 = vmatpush.msra.mxu0 0.0
    %300 = vmatpush.msra.mxu0 0.0
    %301 = vmatpush.msra.mxu0 0.0
    %302 = vmatpush.msra.mxu0 0.0
    %303 = vmatpush.msra.mxu0 0.0
    %304 = vmatpush.msra.mxu0 0.0
    %305 = vmatpush.msra.mxu0 0.0
    %306 = vmatpush.msra.mxu0 0.0
    %307 = vmatpush.msra.mxu0 0.0
    %308 = vmatpush.msra.mxu0 0.0
    %309 = vmatpush.msra.mxu0 0.0
    %310 = vmatpush.msra.mxu0 %v294
    %311 = vmatpush.msra.mxu0 %v291
    %312 = vmatmul.f32.gmra.mxu0 %v83
    %v313 = vpop.f32.mrf.mxu0
    %v314 = vadd.f32 0.0, %v313
    %315 = vmatmul.f32.gmra.mxu0 %v86
    %v316 = vpop.f32.mrf.mxu0
    %v317 = vadd.f32 0.0, %v316
    %318 = vdwg.mxu0
    %v319 = vadd.f32 %v106, %v314
    %v320 = vadd.f32 %v109, %v317
    %v321 = vxor.u32 %v319, 2147483648
    %v322 = vxor.u32 %v320, 2147483648
    %v323 = vmul.f32 %v321, 1.442695
    %v324 = vpow.pop %v323
    %v325 = vmul.f32 %v322, 1.442695
    %v326 = vpow.pop %v325
    %v327 = vadd.f32 %v324, 1.0
    %v328 = vadd.f32 %v326, 1.0
    %v329 = vrcp.pop %v327
    %v330 = vmul.f32 %v327, %v329
    %v331 = vsub.f32 1.0, %v330
    %v332 = vmul.f32 %v329, %v331
    %v333 = vadd.f32 %v329, %v332
    %vm334 = vweird.f32 %v327
    %vm335 = vweird.f32 %v329
    %vm336 = vmor %vm334, %vm335
    %v337 = vsel %vm336, %v329, %v333
    %v338 = vand.u32 2147483647, %v327
    %vm339 = vcmp.eq.f32.partialorder %v338, 8.507059e+37
    %v340 = vand.u32 %v327, 2147483648
    %v341 = vor.u32 1.1754944e-38, %v340
    %v342 = vsel %vm339, %v341, %v337
    %v343 = vmul.f32 1.0, %v342
    %v344 = vrcp.pop %v328
    %v345 = vmul.f32 %v328, %v344
    %v346 = vsub.f32 1.0, %v345
    %v347 = vmul.f32 %v344, %v346
    %v348 = vadd.f32 %v344, %v347
    %vm349 = vweird.f32 %v328
    %vm350 = vweird.f32 %v344
    %vm351 = vmor %vm349, %vm350
    %v352 = vsel %vm351, %v344, %v348
    %v353 = vand.u32 2147483647, %v328
    %vm354 = vcmp.eq.f32.partialorder %v353, 8.507059e+37
    %v355 = vand.u32 %v328, 2147483648
    %v356 = vor.u32 1.1754944e-38, %v355
    %v357 = vsel %vm354, %v356, %v352
    %v358 = vmul.f32 1.0, %v357
    %v359 = vmul.f32 %v343, %v161
    %v360 = vmul.f32 %v358, %v162
    %v362 = vsel %vm48, %v359, 0
    %v365 = vsel %vm48, %v360, 0
    %367 = vmatpush.msra.mxu0 0.0
    %368 = vmatpush.msra.mxu0 0.0
    %369 = vmatpush.msra.mxu0 0.0
    %370 = vmatpush.msra.mxu0 0.0
    %371 = vmatpush.msra.mxu0 0.0
    %372 = vmatpush.msra.mxu0 0.0
    %373 = vmatpush.msra.mxu0 0.0
    %374 = vmatpush.msra.mxu0 0.0
    %375 = vmatpush.msra.mxu0 0.0
    %376 = vmatpush.msra.mxu0 0.0
    %377 = vmatpush.msra.mxu0 0.0
    %378 = vmatpush.msra.mxu0 0.0
    %379 = vmatpush.msra.mxu0 0.0
    %380 = vmatpush.msra.mxu0 0.0
    %381 = vmatpush.msra.mxu0 0.0
    %382 = vmatpush.msra.mxu0 %v42
    %383 = vmatmul.f32.gmra.mxu0 %v362
    %v384 = vpop.f32.mrf.mxu0
    %v385 = vadd.f32 0.0, %v384
    %386 = vmatmul.f32.gmra.mxu0 %v365
    %v387 = vpop.f32.mrf.mxu0
    %v388 = vadd.f32 0.0, %v387
    %389 = vdwg.mxu0
    %390 = vmatpush.msra.mxu0 0.0
    %391 = vmatpush.msra.mxu0 0.0
    %392 = vmatpush.msra.mxu0 0.0
    %393 = vmatpush.msra.mxu0 0.0
    %394 = vmatpush.msra.mxu0 0.0
    %395 = vmatpush.msra.mxu0 0.0
    %396 = vmatpush.msra.mxu0 0.0
    %397 = vmatpush.msra.mxu0 0.0
    %398 = vmatpush.msra.mxu0 0.0
    %399 = vmatpush.msra.mxu0 0.0
    %400 = vmatpush.msra.mxu0 0.0
    %401 = vmatpush.msra.mxu0 0.0
    %402 = vmatpush.msra.mxu0 0.0
    %403 = vmatpush.msra.mxu0 0.0
    %404 = vmatpush.msra.mxu0 %v388
    %405 = vmatpush.msra.mxu0 %v385
    %406 = vmatmul.f32.gmra.mxu0 %v83
    %v407 = vpop.f32.mrf.mxu0
    %v408 = vadd.f32 0.0, %v407
    %409 = vmatmul.f32.gmra.mxu0 %v86
    %v410 = vpop.f32.mrf.mxu0
    %v411 = vadd.f32 0.0, %v410
    %412 = vdwg.mxu0
    %v413 = vadd.f32 %v156, %v408
    %v414 = vadd.f32 %v159, %v411
    %v415 = vtanh.pop %v413
    %v416 = vtanh.pop %v414
    %v417 = vsub.f32 %v161, %v415
    %v418 = vsub.f32 %v162, %v416
    %421 = vrot.lane.b32.xlu0 %v417, 8
    %v422 = vpop.permute.xlu0 %421
    %423 = vrot.lane.b32.xlu0 %v418, 8
    %v424 = vpop.permute.xlu0 %423
    %v427 = vmul.f32 %v343, %v422
    %v428 = vmul.f32 %v358, %v424
    %431 = vrot.lane.b32.xlu0 %v427, 120
    %v432 = vpop.permute.xlu0 %431
    %433 = vrot.lane.b32.xlu0 %v428, 120
    %v434 = vpop.permute.xlu0 %433
    %v437 = vadd.f32 %v415, %v432
    %v438 = vadd.f32 %v416, %v434
    %439 = vst.msk [vmem:[#allocation2] sm:$0xff] %vm48, %v437
    %440 = vst.msk [vmem:[#allocation2 + $0x8] sm:$0xff] %vm48, %v438
    %v442 = vsel %vm48, %v265, 0
    %v445 = vsel %vm48, %v266, 0
    %447 = vmatpush.msra.mxu0 0.0
    %448 = vmatpush.msra.mxu0 0.0
    %449 = vmatpush.msra.mxu0 0.0
    %450 = vmatpush.msra.mxu0 0.0
    %451 = vmatpush.msra.mxu0 0.0
    %452 = vmatpush.msra.mxu0 0.0
    %453 = vmatpush.msra.mxu0 0.0
    %454 = vmatpush.msra.mxu0 0.0
    %455 = vmatpush.msra.mxu0 0.0
    %456 = vmatpush.msra.mxu0 0.0
    %457 = vmatpush.msra.mxu0 0.0
    %458 = vmatpush.msra.mxu0 0.0
    %459 = vmatpush.msra.mxu0 0.0
    %460 = vmatpush.msra.mxu0 0.0
    %461 = vmatpush.msra.mxu0 0.0
    %462 = vmatpush.msra.mxu0 %v41
    %463 = vmatmul.f32.gmra.mxu0 %v442
    %v464 = vpop.f32.mrf.mxu0
    %v465 = vadd.f32 0.0, %v464
    %466 = vmatmul.f32.gmra.mxu0 %v445
    %v467 = vpop.f32.mrf.mxu0
    %v468 = vadd.f32 0.0, %v467
    %469 = vdwg.mxu0
    %470 = vmatpush.msra.mxu0 0.0
    %471 = vmatpush.msra.mxu0 0.0
    %472 = vmatpush.msra.mxu0 0.0
    %473 = vmatpush.msra.mxu0 0.0
    %474 = vmatpush.msra.mxu0 0.0
    %475 = vmatpush.msra.mxu0 0.0
    %476 = vmatpush.msra.mxu0 0.0
    %477 = vmatpush.msra.mxu0 0.0
    %478 = vmatpush.msra.mxu0 0.0
    %479 = vmatpush.msra.mxu0 0.0
    %480 = vmatpush.msra.mxu0 0.0
    %481 = vmatpush.msra.mxu0 0.0
    %482 = vmatpush.msra.mxu0 0.0
    %483 = vmatpush.msra.mxu0 0.0
    %484 = vmatpush.msra.mxu0 %v468
    %485 = vmatpush.msra.mxu0 %v465
    %486 = vmatmul.f32.gmra.mxu0 %v83
    %v487 = vpop.f32.mrf.mxu0
    %v488 = vadd.f32 0.0, %v487
    %489 = vmatmul.f32.gmra.mxu0 %v86
    %v490 = vpop.f32.mrf.mxu0
    %v491 = vadd.f32 0.0, %v490
    %492 = vdwg.mxu0
    %v493 = vadd.f32 %v213, %v488
    %v494 = vadd.f32 %v216, %v491
    %v495 = vxor.u32 %v493, 2147483648
    %v496 = vxor.u32 %v494, 2147483648
    %v497 = vmul.f32 %v495, 1.442695
    %v498 = vpow.pop %v497
    %v499 = vmul.f32 %v496, 1.442695
    %v500 = vpow.pop %v499
    %v501 = vadd.f32 %v498, 1.0
    %v502 = vadd.f32 %v500, 1.0
    %v503 = vrcp.pop %v501
    %v504 = vmul.f32 %v501, %v503
    %v505 = vsub.f32 1.0, %v504
    %v506 = vmul.f32 %v503, %v505
    %v507 = vadd.f32 %v503, %v506
    %vm508 = vweird.f32 %v501
    %vm509 = vweird.f32 %v503
    %vm510 = vmor %vm508, %vm509
    %v511 = vsel %vm510, %v503, %v507
    %v512 = vand.u32 2147483647, %v501
    %vm513 = vcmp.eq.f32.partialorder %v512, 8.507059e+37
    %v514 = vand.u32 %v501, 2147483648
    %v515 = vor.u32 1.1754944e-38, %v514
    %v516 = vsel %vm513, %v515, %v511
    %v517 = vmul.f32 1.0, %v516
    %v518 = vrcp.pop %v502
    %v519 = vmul.f32 %v502, %v518
    %v520 = vsub.f32 1.0, %v519
    %v521 = vmul.f32 %v518, %v520
    %v522 = vadd.f32 %v518, %v521
    %vm523 = vweird.f32 %v502
    %vm524 = vweird.f32 %v518
    %vm525 = vmor %vm523, %vm524
    %v526 = vsel %vm525, %v518, %v522
    %v527 = vand.u32 2147483647, %v502
    %vm528 = vcmp.eq.f32.partialorder %v527, 8.507059e+37
    %v529 = vand.u32 %v502, 2147483648
    %v530 = vor.u32 1.1754944e-38, %v529
    %v531 = vsel %vm528, %v530, %v526
    %v532 = vmul.f32 1.0, %v531
    %v533 = vmul.f32 %v517, %v265
    %v534 = vmul.f32 %v532, %v266
    %v536 = vsel %vm48, %v533, 0
    %v539 = vsel %vm48, %v534, 0
    %541 = vmatpush.msra.mxu0 0.0
    %542 = vmatpush.msra.mxu0 0.0
    %543 = vmatpush.msra.mxu0 0.0
    %544 = vmatpush.msra.mxu0 0.0
    %545 = vmatpush.msra.mxu0 0.0
    %546 = vmatpush.msra.mxu0 0.0
    %547 = vmatpush.msra.mxu0 0.0
    %548 = vmatpush.msra.mxu0 0.0
    %549 = vmatpush.msra.mxu0 0.0
    %550 = vmatpush.msra.mxu0 0.0
    %551 = vmatpush.msra.mxu0 0.0
    %552 = vmatpush.msra.mxu0 0.0
    %553 = vmatpush.msra.mxu0 0.0
    %554 = vmatpush.msra.mxu0 0.0
    %555 = vmatpush.msra.mxu0 0.0
    %556 = vmatpush.msra.mxu0 %v42
    %557 = vmatmul.f32.gmra.mxu0 %v536
    %v558 = vpop.f32.mrf.mxu0
    %v559 = vadd.f32 0.0, %v558
    %560 = vmatmul.f32.gmra.mxu0 %v539
    %v561 = vpop.f32.mrf.mxu0
    %v562 = vadd.f32 0.0, %v561
    %563 = vdwg.mxu0
    %564 = vmatpush.msra.mxu0 0.0
    %565 = vmatpush.msra.mxu0 0.0
    %566 = vmatpush.msra.mxu0 0.0
    %567 = vmatpush.msra.mxu0 0.0
    %568 = vmatpush.msra.mxu0 0.0
    %569 = vmatpush.msra.mxu0 0.0
    %570 = vmatpush.msra.mxu0 0.0
    %571 = vmatpush.msra.mxu0 0.0
    %572 = vmatpush.msra.mxu0 0.0
    %573 = vmatpush.msra.mxu0 0.0
    %574 = vmatpush.msra.mxu0 0.0
    %575 = vmatpush.msra.mxu0 0.0
    %576 = vmatpush.msra.mxu0 0.0
    %577 = vmatpush.msra.mxu0 0.0
    %578 = vmatpush.msra.mxu0 %v562
    %579 = vmatpush.msra.mxu0 %v559
    %580 = vmatmul.f32.gmra.mxu0 %v83
    %v581 = vpop.f32.mrf.mxu0
    %v582 = vadd.f32 0.0, %v581
    %583 = vmatmul.f32.gmra.mxu0 %v86
    %v584 = vpop.f32.mrf.mxu0
    %v585 = vadd.f32 0.0, %v584
    %586 = vdwg.mxu0
    %v587 = vadd.f32 %v259, %v582
    %v588 = vadd.f32 %v262, %v585
    %v589 = vtanh.pop %v587
    %v590 = vtanh.pop %v588
    %v591 = vsub.f32 %v265, %v589
    %v592 = vsub.f32 %v266, %v590
    %595 = vrot.lane.b32.xlu0 %v591, 8
    %v596 = vpop.permute.xlu0 %595
    %597 = vrot.lane.b32.xlu0 %v592, 8
    %v598 = vpop.permute.xlu0 %597
    %v601 = vmul.f32 %v517, %v596
    %v602 = vmul.f32 %v532, %v598
    %605 = vrot.lane.b32.xlu0 %v601, 120
    %v606 = vpop.permute.xlu0 %605
    %607 = vrot.lane.b32.xlu0 %v602, 120
    %v608 = vpop.permute.xlu0 %607
    %v611 = vadd.f32 %v589, %v606
    %v612 = vadd.f32 %v590, %v608
    %613 = vst.msk [vmem:[#allocation2 + $0x60] sm:$0xff] %vm48, %v611
    %614 = vst.msk [vmem:[#allocation2 + $0x68] sm:$0xff] %vm48, %v612
    %v616 = vsel %vm48, %v437, 0
    %v619 = vsel %vm48, %v438, 0
    %621 = vmatpush.msra.mxu0 0.0
    %622 = vmatpush.msra.mxu0 0.0
    %623 = vmatpush.msra.mxu0 0.0
    %624 = vmatpush.msra.mxu0 0.0
    %625 = vmatpush.msra.mxu0 0.0
    %626 = vmatpush.msra.mxu0 0.0
    %627 = vmatpush.msra.mxu0 0.0
    %628 = vmatpush.msra.mxu0 0.0
    %629 = vmatpush.msra.mxu0 0.0
    %630 = vmatpush.msra.mxu0 0.0
    %631 = vmatpush.msra.mxu0 0.0
    %632 = vmatpush.msra.mxu0 0.0
    %633 = vmatpush.msra.mxu0 0.0
    %634 = vmatpush.msra.mxu0 0.0
    %635 = vmatpush.msra.mxu0 0.0
    %636 = vmatpush.msra.mxu0 %v41
    %637 = vmatmul.f32.gmra.mxu0 %v616
    %v638 = vpop.f32.mrf.mxu0
    %v639 = vadd.f32 0.0, %v638
    %640 = vmatmul.f32.gmra.mxu0 %v619
    %v641 = vpop.f32.mrf.mxu0
    %v642 = vadd.f32 0.0, %v641
    %643 = vdwg.mxu0
    %644 = vmatpush.msra.mxu0 0.0
    %645 = vmatpush.msra.mxu0 0.0
    %646 = vmatpush.msra.mxu0 0.0
    %647 = vmatpush.msra.mxu0 0.0
    %648 = vmatpush.msra.mxu0 0.0
    %649 = vmatpush.msra.mxu0 0.0
    %650 = vmatpush.msra.mxu0 0.0
    %651 = vmatpush.msra.mxu0 0.0
    %652 = vmatpush.msra.mxu0 0.0
    %653 = vmatpush.msra.mxu0 0.0
    %654 = vmatpush.msra.mxu0 0.0
    %655 = vmatpush.msra.mxu0 0.0
    %656 = vmatpush.msra.mxu0 0.0
    %657 = vmatpush.msra.mxu0 0.0
    %658 = vmatpush.msra.mxu0 %v642
    %659 = vmatpush.msra.mxu0 %v639
    %660 = vmatmul.f32.gmra.mxu0 %v83
    %v661 = vpop.f32.mrf.mxu0
    %v662 = vadd.f32 0.0, %v661
    %663 = vmatmul.f32.gmra.mxu0 %v86
    %v664 = vpop.f32.mrf.mxu0
    %v665 = vadd.f32 0.0, %v664
    %666 = vdwg.mxu0
    %v667 = vadd.f32 %v106, %v662
    %v668 = vadd.f32 %v109, %v665
    %v669 = vxor.u32 %v667, 2147483648
    %v670 = vxor.u32 %v668, 2147483648
    %v671 = vmul.f32 %v669, 1.442695
    %v672 = vpow.pop %v671
    %v673 = vmul.f32 %v670, 1.442695
    %v674 = vpow.pop %v673
    %v675 = vadd.f32 %v672, 1.0
    %v676 = vadd.f32 %v674, 1.0
    %v677 = vrcp.pop %v675
    %v678 = vmul.f32 %v675, %v677
    %v679 = vsub.f32 1.0, %v678
    %v680 = vmul.f32 %v677, %v679
    %v681 = vadd.f32 %v677, %v680
    %vm682 = vweird.f32 %v675
    %vm683 = vweird.f32 %v677
    %vm684 = vmor %vm682, %vm683
    %v685 = vsel %vm684, %v677, %v681
    %v686 = vand.u32 2147483647, %v675
    %vm687 = vcmp.eq.f32.partialorder %v686, 8.507059e+37
    %v688 = vand.u32 %v675, 2147483648
    %v689 = vor.u32 1.1754944e-38, %v688
    %v690 = vsel %vm687, %v689, %v685
    %v691 = vmul.f32 1.0, %v690
    %v692 = vrcp.pop %v676
    %v693 = vmul.f32 %v676, %v692
    %v694 = vsub.f32 1.0, %v693
    %v695 = vmul.f32 %v692, %v694
    %v696 = vadd.f32 %v692, %v695
    %vm697 = vweird.f32 %v676
    %vm698 = vweird.f32 %v692
    %vm699 = vmor %vm697, %vm698
    %v700 = vsel %vm699, %v692, %v696
    %v701 = vand.u32 2147483647, %v676
    %vm702 = vcmp.eq.f32.partialorder %v701, 8.507059e+37
    %v703 = vand.u32 %v676, 2147483648
    %v704 = vor.u32 1.1754944e-38, %v703
    %v705 = vsel %vm702, %v704, %v700
    %v706 = vmul.f32 1.0, %v705
    %v707 = vmul.f32 %v691, %v437
    %v708 = vmul.f32 %v706, %v438
    %v710 = vsel %vm48, %v707, 0
    %v713 = vsel %vm48, %v708, 0
    %715 = vmatpush.msra.mxu0 0.0
    %716 = vmatpush.msra.mxu0 0.0
    %717 = vmatpush.msra.mxu0 0.0
    %718 = vmatpush.msra.mxu0 0.0
    %719 = vmatpush.msra.mxu0 0.0
    %720 = vmatpush.msra.mxu0 0.0
    %721 = vmatpush.msra.mxu0 0.0
    %722 = vmatpush.msra.mxu0 0.0
    %723 = vmatpush.msra.mxu0 0.0
    %724 = vmatpush.msra.mxu0 0.0
    %725 = vmatpush.msra.mxu0 0.0
    %726 = vmatpush.msra.mxu0 0.0
    %727 = vmatpush.msra.mxu0 0.0
    %728 = vmatpush.msra.mxu0 0.0
    %729 = vmatpush.msra.mxu0 0.0
    %730 = vmatpush.msra.mxu0 %v42
    %731 = vmatmul.f32.gmra.mxu0 %v710
    %v732 = vpop.f32.mrf.mxu0
    %v733 = vadd.f32 0.0, %v732
    %734 = vmatmul.f32.gmra.mxu0 %v713
    %v735 = vpop.f32.mrf.mxu0
    %v736 = vadd.f32 0.0, %v735
    %737 = vdwg.mxu0
    %738 = vmatpush.msra.mxu0 0.0
    %739 = vmatpush.msra.mxu0 0.0
    %740 = vmatpush.msra.mxu0 0.0
    %741 = vmatpush.msra.mxu0 0.0
    %742 = vmatpush.msra.mxu0 0.0
    %743 = vmatpush.msra.mxu0 0.0
    %744 = vmatpush.msra.mxu0 0.0
    %745 = vmatpush.msra.mxu0 0.0
    %746 = vmatpush.msra.mxu0 0.0
    %747 = vmatpush.msra.mxu0 0.0
    %748 = vmatpush.msra.mxu0 0.0
    %749 = vmatpush.msra.mxu0 0.0
    %750 = vmatpush.msra.mxu0 0.0
    %751 = vmatpush.msra.mxu0 0.0
    %752 = vmatpush.msra.mxu0 %v736
    %753 = vmatpush.msra.mxu0 %v733
    %754 = vmatmul.f32.gmra.mxu0 %v83
    %v755 = vpop.f32.mrf.mxu0
    %v756 = vadd.f32 0.0, %v755
    %757 = vmatmul.f32.gmra.mxu0 %v86
    %v758 = vpop.f32.mrf.mxu0
    %v759 = vadd.f32 0.0, %v758
    %760 = vdwg.mxu0
    %v761 = vadd.f32 %v156, %v756
    %v762 = vadd.f32 %v159, %v759
    %v763 = vtanh.pop %v761
    %v764 = vtanh.pop %v762
    %v765 = vsub.f32 %v437, %v763
    %v766 = vsub.f32 %v438, %v764
    %769 = vrot.lane.b32.xlu0 %v765, 8
    %v770 = vpop.permute.xlu0 %769
    %771 = vrot.lane.b32.xlu0 %v766, 8
    %v772 = vpop.permute.xlu0 %771
    %v775 = vmul.f32 %v691, %v770
    %v776 = vmul.f32 %v706, %v772
    %779 = vrot.lane.b32.xlu0 %v775, 120
    %v780 = vpop.permute.xlu0 %779
    %781 = vrot.lane.b32.xlu0 %v776, 120
    %v782 = vpop.permute.xlu0 %781
    %v785 = vadd.f32 %v763, %v780
    %v786 = vadd.f32 %v764, %v782
    %787 = vst.msk [vmem:[#allocation2 + $0x10] sm:$0xff] %vm48, %v785
    %788 = vst.msk [vmem:[#allocation2 + $0x18] sm:$0xff] %vm48, %v786
    %v790 = vsel %vm48, %v611, 0
    %v793 = vsel %vm48, %v612, 0
    %795 = vmatpush.msra.mxu0 0.0
    %796 = vmatpush.msra.mxu0 0.0
    %797 = vmatpush.msra.mxu0 0.0
    %798 = vmatpush.msra.mxu0 0.0
    %799 = vmatpush.msra.mxu0 0.0
    %800 = vmatpush.msra.mxu0 0.0
    %801 = vmatpush.msra.mxu0 0.0
    %802 = vmatpush.msra.mxu0 0.0
    %803 = vmatpush.msra.mxu0 0.0
    %804 = vmatpush.msra.mxu0 0.0
    %805 = vmatpush.msra.mxu0 0.0
    %806 = vmatpush.msra.mxu0 0.0
    %807 = vmatpush.msra.mxu0 0.0
    %808 = vmatpush.msra.mxu0 0.0
    %809 = vmatpush.msra.mxu0 0.0
    %810 = vmatpush.msra.mxu0 %v41
    %811 = vmatmul.f32.gmra.mxu0 %v790
    %v812 = vpop.f32.mrf.mxu0
    %v813 = vadd.f32 0.0, %v812
    %814 = vmatmul.f32.gmra.mxu0 %v793
    %v815 = vpop.f32.mrf.mxu0
    %v816 = vadd.f32 0.0, %v815
    %817 = vdwg.mxu0
    %818 = vmatpush.msra.mxu0 0.0
    %819 = vmatpush.msra.mxu0 0.0
    %820 = vmatpush.msra.mxu0 0.0
    %821 = vmatpush.msra.mxu0 0.0
    %822 = vmatpush.msra.mxu0 0.0
    %823 = vmatpush.msra.mxu0 0.0
    %824 = vmatpush.msra.mxu0 0.0
    %825 = vmatpush.msra.mxu0 0.0
    %826 = vmatpush.msra.mxu0 0.0
    %827 = vmatpush.msra.mxu0 0.0
    %828 = vmatpush.msra.mxu0 0.0
    %829 = vmatpush.msra.mxu0 0.0
    %830 = vmatpush.msra.mxu0 0.0
    %831 = vmatpush.msra.mxu0 0.0
    %832 = vmatpush.msra.mxu0 %v816
    %833 = vmatpush.msra.mxu0 %v813
    %834 = vmatmul.f32.gmra.mxu0 %v83
    %v835 = vpop.f32.mrf.mxu0
    %v836 = vadd.f32 0.0, %v835
    %837 = vmatmul.f32.gmra.mxu0 %v86
    %v838 = vpop.f32.mrf.mxu0
    %v839 = vadd.f32 0.0, %v838
    %840 = vdwg.mxu0
    %v841 = vadd.f32 %v213, %v836
    %v842 = vadd.f32 %v216, %v839
    %v843 = vxor.u32 %v841, 2147483648
    %v844 = vxor.u32 %v842, 2147483648
    %v845 = vmul.f32 %v843, 1.442695
    %v846 = vpow.pop %v845
    %v847 = vmul.f32 %v844, 1.442695
    %v848 = vpow.pop %v847
    %v849 = vadd.f32 %v846, 1.0
    %v850 = vadd.f32 %v848, 1.0
    %v851 = vrcp.pop %v849
    %v852 = vmul.f32 %v849, %v851
    %v853 = vsub.f32 1.0, %v852
    %v854 = vmul.f32 %v851, %v853
    %v855 = vadd.f32 %v851, %v854
    %vm856 = vweird.f32 %v849
    %vm857 = vweird.f32 %v851
    %vm858 = vmor %vm856, %vm857
    %v859 = vsel %vm858, %v851, %v855
    %v860 = vand.u32 2147483647, %v849
    %vm861 = vcmp.eq.f32.partialorder %v860, 8.507059e+37
    %v862 = vand.u32 %v849, 2147483648
    %v863 = vor.u32 1.1754944e-38, %v862
    %v864 = vsel %vm861, %v863, %v859
    %v865 = vmul.f32 1.0, %v864
    %v866 = vrcp.pop %v850
    %v867 = vmul.f32 %v850, %v866
    %v868 = vsub.f32 1.0, %v867
    %v869 = vmul.f32 %v866, %v868
    %v870 = vadd.f32 %v866, %v869
    %vm871 = vweird.f32 %v850
    %vm872 = vweird.f32 %v866
    %vm873 = vmor %vm871, %vm872
    %v874 = vsel %vm873, %v866, %v870
    %v875 = vand.u32 2147483647, %v850
    %vm876 = vcmp.eq.f32.partialorder %v875, 8.507059e+37
    %v877 = vand.u32 %v850, 2147483648
    %v878 = vor.u32 1.1754944e-38, %v877
    %v879 = vsel %vm876, %v878, %v874
    %v880 = vmul.f32 1.0, %v879
    %v881 = vmul.f32 %v865, %v611
    %v882 = vmul.f32 %v880, %v612
    %v884 = vsel %vm48, %v881, 0
    %v887 = vsel %vm48, %v882, 0
    %889 = vmatpush.msra.mxu0 0.0
    %890 = vmatpush.msra.mxu0 0.0
    %891 = vmatpush.msra.mxu0 0.0
    %892 = vmatpush.msra.mxu0 0.0
    %893 = vmatpush.msra.mxu0 0.0
    %894 = vmatpush.msra.mxu0 0.0
    %895 = vmatpush.msra.mxu0 0.0
    %896 = vmatpush.msra.mxu0 0.0
    %897 = vmatpush.msra.mxu0 0.0
    %898 = vmatpush.msra.mxu0 0.0
    %899 = vmatpush.msra.mxu0 0.0
    %900 = vmatpush.msra.mxu0 0.0
    %901 = vmatpush.msra.mxu0 0.0
    %902 = vmatpush.msra.mxu0 0.0
    %903 = vmatpush.msra.mxu0 0.0
    %904 = vmatpush.msra.mxu0 %v42
    %905 = vmatmul.f32.gmra.mxu0 %v884
    %v906 = vpop.f32.mrf.mxu0
    %v907 = vadd.f32 0.0, %v906
    %908 = vmatmul.f32.gmra.mxu0 %v887
    %v909 = vpop.f32.mrf.mxu0
    %v910 = vadd.f32 0.0, %v909
    %911 = vdwg.mxu0
    %912 = vmatpush.msra.mxu0 0.0
    %913 = vmatpush.msra.mxu0 0.0
    %914 = vmatpush.msra.mxu0 0.0
    %915 = vmatpush.msra.mxu0 0.0
    %916 = vmatpush.msra.mxu0 0.0
    %917 = vmatpush.msra.mxu0 0.0
    %918 = vmatpush.msra.mxu0 0.0
    %919 = vmatpush.msra.mxu0 0.0
    %920 = vmatpush.msra.mxu0 0.0
    %921 = vmatpush.msra.mxu0 0.0
    %922 = vmatpush.msra.mxu0 0.0
    %923 = vmatpush.msra.mxu0 0.0
    %924 = vmatpush.msra.mxu0 0.0
    %925 = vmatpush.msra.mxu0 0.0
    %926 = vmatpush.msra.mxu0 %v910
    %927 = vmatpush.msra.mxu0 %v907
    %928 = vmatmul.f32.gmra.mxu0 %v83
    %v929 = vpop.f32.mrf.mxu0
    %v930 = vadd.f32 0.0, %v929
    %931 = vmatmul.f32.gmra.mxu0 %v86
    %v932 = vpop.f32.mrf.mxu0
    %v933 = vadd.f32 0.0, %v932
    %934 = vdwg.mxu0
    %v935 = vadd.f32 %v259, %v930
    %v936 = vadd.f32 %v262, %v933
    %v937 = vtanh.pop %v935
    %v938 = vtanh.pop %v936
    %v939 = vsub.f32 %v611, %v937
    %v940 = vsub.f32 %v612, %v938
    %943 = vrot.lane.b32.xlu0 %v939, 8
    %v944 = vpop.permute.xlu0 %943
    %945 = vrot.lane.b32.xlu0 %v940, 8
    %v946 = vpop.permute.xlu0 %945
    %v949 = vmul.f32 %v865, %v944
    %v950 = vmul.f32 %v880, %v946
    %953 = vrot.lane.b32.xlu0 %v949, 120
    %v954 = vpop.permute.xlu0 %953
    %955 = vrot.lane.b32.xlu0 %v950, 120
    %v956 = vpop.permute.xlu0 %955
    %v959 = vadd.f32 %v937, %v954
    %v960 = vadd.f32 %v938, %v956
    %961 = vst.msk [vmem:[#allocation2 + $0x70] sm:$0xff] %vm48, %v959
    %962 = vst.msk [vmem:[#allocation2 + $0x78] sm:$0xff] %vm48, %v960
    %v964 = vsel %vm48, %v785, 0
    %v967 = vsel %vm48, %v786, 0
    %969 = vmatpush.msra.mxu0 0.0
    %970 = vmatpush.msra.mxu0 0.0
    %971 = vmatpush.msra.mxu0 0.0
    %972 = vmatpush.msra.mxu0 0.0
    %973 = vmatpush.msra.mxu0 0.0
    %974 = vmatpush.msra.mxu0 0.0
    %975 = vmatpush.msra.mxu0 0.0
    %976 = vmatpush.msra.mxu0 0.0
    %977 = vmatpush.msra.mxu0 0.0
    %978 = vmatpush.msra.mxu0 0.0
    %979 = vmatpush.msra.mxu0 0.0
    %980 = vmatpush.msra.mxu0 0.0
    %981 = vmatpush.msra.mxu0 0.0
    %982 = vmatpush.msra.mxu0 0.0
    %983 = vmatpush.msra.mxu0 0.0
    %984 = vmatpush.msra.mxu0 %v41
    %985 = vmatmul.f32.gmra.mxu0 %v964
    %v986 = vpop.f32.mrf.mxu0
    %v987 = vadd.f32 0.0, %v986
    %988 = vmatmul.f32.gmra.mxu0 %v967
    %v989 = vpop.f32.mrf.mxu0
    %v990 = vadd.f32 0.0, %v989
    %991 = vdwg.mxu0
    %992 = vmatpush.msra.mxu0 0.0
    %993 = vmatpush.msra.mxu0 0.0
    %994 = vmatpush.msra.mxu0 0.0
    %995 = vmatpush.msra.mxu0 0.0
    %996 = vmatpush.msra.mxu0 0.0
    %997 = vmatpush.msra.mxu0 0.0
    %998 = vmatpush.msra.mxu0 0.0
    %999 = vmatpush.msra.mxu0 0.0
    %1000 = vmatpush.msra.mxu0 0.0
    %1001 = vmatpush.msra.mxu0 0.0
    %1002 = vmatpush.msra.mxu0 0.0
    %1003 = vmatpush.msra.mxu0 0.0
    %1004 = vmatpush.msra.mxu0 0.0
    %1005 = vmatpush.msra.mxu0 0.0
    %1006 = vmatpush.msra.mxu0 %v990
    %1007 = vmatpush.msra.mxu0 %v987
    %1008 = vmatmul.f32.gmra.mxu0 %v83
    %v1009 = vpop.f32.mrf.mxu0
    %v1010 = vadd.f32 0.0, %v1009
    %1011 = vmatmul.f32.gmra.mxu0 %v86
    %v1012 = vpop.f32.mrf.mxu0
    %v1013 = vadd.f32 0.0, %v1012
    %1014 = vdwg.mxu0
    %v1015 = vadd.f32 %v106, %v1010
    %v1016 = vadd.f32 %v109, %v1013
    %v1017 = vxor.u32 %v1015, 2147483648
    %v1018 = vxor.u32 %v1016, 2147483648
    %v1019 = vmul.f32 %v1017, 1.442695
    %v1020 = vpow.pop %v1019
    %v1021 = vmul.f32 %v1018, 1.442695
    %v1022 = vpow.pop %v1021
    %v1023 = vadd.f32 %v1020, 1.0
    %v1024 = vadd.f32 %v1022, 1.0
    %v1025 = vrcp.pop %v1023
    %v1026 = vmul.f32 %v1023, %v1025
    %v1027 = vsub.f32 1.0, %v1026
    %v1028 = vmul.f32 %v1025, %v1027
    %v1029 = vadd.f32 %v1025, %v1028
    %vm1030 = vweird.f32 %v1023
    %vm1031 = vweird.f32 %v1025
    %vm1032 = vmor %vm1030, %vm1031
    %v1033 = vsel %vm1032, %v1025, %v1029
    %v1034 = vand.u32 2147483647, %v1023
    %vm1035 = vcmp.eq.f32.partialorder %v1034, 8.507059e+37
    %v1036 = vand.u32 %v1023, 2147483648
    %v1037 = vor.u32 1.1754944e-38, %v1036
    %v1038 = vsel %vm1035, %v1037, %v1033
    %v1039 = vmul.f32 1.0, %v1038
    %v1040 = vrcp.pop %v1024
    %v1041 = vmul.f32 %v1024, %v1040
    %v1042 = vsub.f32 1.0, %v1041
    %v1043 = vmul.f32 %v1040, %v1042
    %v1044 = vadd.f32 %v1040, %v1043
    %vm1045 = vweird.f32 %v1024
    %vm1046 = vweird.f32 %v1040
    %vm1047 = vmor %vm1045, %vm1046
    %v1048 = vsel %vm1047, %v1040, %v1044
    %v1049 = vand.u32 2147483647, %v1024
    %vm1050 = vcmp.eq.f32.partialorder %v1049, 8.507059e+37
    %v1051 = vand.u32 %v1024, 2147483648
    %v1052 = vor.u32 1.1754944e-38, %v1051
    %v1053 = vsel %vm1050, %v1052, %v1048
    %v1054 = vmul.f32 1.0, %v1053
    %v1055 = vmul.f32 %v1039, %v785
    %v1056 = vmul.f32 %v1054, %v786
    %v1058 = vsel %vm48, %v1055, 0
    %v1061 = vsel %vm48, %v1056, 0
    %1063 = vmatpush.msra.mxu0 0.0
    %1064 = vmatpush.msra.mxu0 0.0
    %1065 = vmatpush.msra.mxu0 0.0
    %1066 = vmatpush.msra.mxu0 0.0
    %1067 = vmatpush.msra.mxu0 0.0
    %1068 = vmatpush.msra.mxu0 0.0
    %1069 = vmatpush.msra.mxu0 0.0
    %1070 = vmatpush.msra.mxu0 0.0
    %1071 = vmatpush.msra.mxu0 0.0
    %1072 = vmatpush.msra.mxu0 0.0
    %1073 = vmatpush.msra.mxu0 0.0
    %1074 = vmatpush.msra.mxu0 0.0
    %1075 = vmatpush.msra.mxu0 0.0
    %1076 = vmatpush.msra.mxu0 0.0
    %1077 = vmatpush.msra.mxu0 0.0
    %1078 = vmatpush.msra.mxu0 %v42
    %1079 = vmatmul.f32.gmra.mxu0 %v1058
    %v1080 = vpop.f32.mrf.mxu0
    %v1081 = vadd.f32 0.0, %v1080
    %1082 = vmatmul.f32.gmra.mxu0 %v1061
    %v1083 = vpop.f32.mrf.mxu0
    %v1084 = vadd.f32 0.0, %v1083
    %1085 = vdwg.mxu0
    %1086 = vmatpush.msra.mxu0 0.0
    %1087 = vmatpush.msra.mxu0 0.0
    %1088 = vmatpush.msra.mxu0 0.0
    %1089 = vmatpush.msra.mxu0 0.0
    %1090 = vmatpush.msra.mxu0 0.0
    %1091 = vmatpush.msra.mxu0 0.0
    %1092 = vmatpush.msra.mxu0 0.0
    %1093 = vmatpush.msra.mxu0 0.0
    %1094 = vmatpush.msra.mxu0 0.0
    %1095 = vmatpush.msra.mxu0 0.0
    %1096 = vmatpush.msra.mxu0 0.0
    %1097 = vmatpush.msra.mxu0 0.0
    %1098 = vmatpush.msra.mxu0 0.0
    %1099 = vmatpush.msra.mxu0 0.0
    %1100 = vmatpush.msra.mxu0 %v1084
    %1101 = vmatpush.msra.mxu0 %v1081
    %1102 = vmatmul.f32.gmra.mxu0 %v83
    %v1103 = vpop.f32.mrf.mxu0
    %v1104 = vadd.f32 0.0, %v1103
    %1105 = vmatmul.f32.gmra.mxu0 %v86
    %v1106 = vpop.f32.mrf.mxu0
    %v1107 = vadd.f32 0.0, %v1106
    %1108 = vdwg.mxu0
    %v1109 = vadd.f32 %v156, %v1104
    %v1110 = vadd.f32 %v159, %v1107
    %v1111 = vtanh.pop %v1109
    %v1112 = vtanh.pop %v1110
    %v1113 = vsub.f32 %v785, %v1111
    %v1114 = vsub.f32 %v786, %v1112
    %1117 = vrot.lane.b32.xlu0 %v1113, 8
    %v1118 = vpop.permute.xlu0 %1117
    %1119 = vrot.lane.b32.xlu0 %v1114, 8
    %v1120 = vpop.permute.xlu0 %1119
    %v1123 = vmul.f32 %v1039, %v1118
    %v1124 = vmul.f32 %v1054, %v1120
    %1127 = vrot.lane.b32.xlu0 %v1123, 120
    %v1128 = vpop.permute.xlu0 %1127
    %1129 = vrot.lane.b32.xlu0 %v1124, 120
    %v1130 = vpop.permute.xlu0 %1129
    %v1133 = vadd.f32 %v1111, %v1128
    %v1134 = vadd.f32 %v1112, %v1130
    %1135 = vst.msk [vmem:[#allocation2 + $0x20] sm:$0xff] %vm48, %v1133
    %1136 = vst.msk [vmem:[#allocation2 + $0x28] sm:$0xff] %vm48, %v1134
    %v1138 = vsel %vm48, %v959, 0
    %v1141 = vsel %vm48, %v960, 0
    %1143 = vmatpush.msra.mxu0 0.0
    %1144 = vmatpush.msra.mxu0 0.0
    %1145 = vmatpush.msra.mxu0 0.0
    %1146 = vmatpush.msra.mxu0 0.0
    %1147 = vmatpush.msra.mxu0 0.0
    %1148 = vmatpush.msra.mxu0 0.0
    %1149 = vmatpush.msra.mxu0 0.0
    %1150 = vmatpush.msra.mxu0 0.0
    %1151 = vmatpush.msra.mxu0 0.0
    %1152 = vmatpush.msra.mxu0 0.0
    %1153 = vmatpush.msra.mxu0 0.0
    %1154 = vmatpush.msra.mxu0 0.0
    %1155 = vmatpush.msra.mxu0 0.0
    %1156 = vmatpush.msra.mxu0 0.0
    %1157 = vmatpush.msra.mxu0 0.0
    %1158 = vmatpush.msra.mxu0 %v41
    %1159 = vmatmul.f32.gmra.mxu0 %v1138
    %v1160 = vpop.f32.mrf.mxu0
    %v1161 = vadd.f32 0.0, %v1160
    %1162 = vmatmul.f32.gmra.mxu0 %v1141
    %v1163 = vpop.f32.mrf.mxu0
    %v1164 = vadd.f32 0.0, %v1163
    %1165 = vdwg.mxu0
    %1166 = vmatpush.msra.mxu0 0.0
    %1167 = vmatpush.msra.mxu0 0.0
    %1168 = vmatpush.msra.mxu0 0.0
    %1169 = vmatpush.msra.mxu0 0.0
    %1170 = vmatpush.msra.mxu0 0.0
    %1171 = vmatpush.msra.mxu0 0.0
    %1172 = vmatpush.msra.mxu0 0.0
    %1173 = vmatpush.msra.mxu0 0.0
    %1174 = vmatpush.msra.mxu0 0.0
    %1175 = vmatpush.msra.mxu0 0.0
    %1176 = vmatpush.msra.mxu0 0.0
    %1177 = vmatpush.msra.mxu0 0.0
    %1178 = vmatpush.msra.mxu0 0.0
    %1179 = vmatpush.msra.mxu0 0.0
    %1180 = vmatpush.msra.mxu0 %v1164
    %1181 = vmatpush.msra.mxu0 %v1161
    %1182 = vmatmul.f32.gmra.mxu0 %v83
    %v1183 = vpop.f32.mrf.mxu0
    %v1184 = vadd.f32 0.0, %v1183
    %1185 = vmatmul.f32.gmra.mxu0 %v86
    %v1186 = vpop.f32.mrf.mxu0
    %v1187 = vadd.f32 0.0, %v1186
    %1188 = vdwg.mxu0
    %v1189 = vadd.f32 %v213, %v1184
    %v1190 = vadd.f32 %v216, %v1187
    %v1191 = vxor.u32 %v1189, 2147483648
    %v1192 = vxor.u32 %v1190, 2147483648
    %v1193 = vmul.f32 %v1191, 1.442695
    %v1194 = vpow.pop %v1193
    %v1195 = vmul.f32 %v1192, 1.442695
    %v1196 = vpow.pop %v1195
    %v1197 = vadd.f32 %v1194, 1.0
    %v1198 = vadd.f32 %v1196, 1.0
    %v1199 = vrcp.pop %v1197
    %v1200 = vmul.f32 %v1197, %v1199
    %v1201 = vsub.f32 1.0, %v1200
    %v1202 = vmul.f32 %v1199, %v1201
    %v1203 = vadd.f32 %v1199, %v1202
    %vm1204 = vweird.f32 %v1197
    %vm1205 = vweird.f32 %v1199
    %vm1206 = vmor %vm1204, %vm1205
    %v1207 = vsel %vm1206, %v1199, %v1203
    %v1208 = vand.u32 2147483647, %v1197
    %vm1209 = vcmp.eq.f32.partialorder %v1208, 8.507059e+37
    %v1210 = vand.u32 %v1197, 2147483648
    %v1211 = vor.u32 1.1754944e-38, %v1210
    %v1212 = vsel %vm1209, %v1211, %v1207
    %v1213 = vmul.f32 1.0, %v1212
    %v1214 = vrcp.pop %v1198
    %v1215 = vmul.f32 %v1198, %v1214
    %v1216 = vsub.f32 1.0, %v1215
    %v1217 = vmul.f32 %v1214, %v1216
    %v1218 = vadd.f32 %v1214, %v1217
    %vm1219 = vweird.f32 %v1198
    %vm1220 = vweird.f32 %v1214
    %vm1221 = vmor %vm1219, %vm1220
    %v1222 = vsel %vm1221, %v1214, %v1218
    %v1223 = vand.u32 2147483647, %v1198
    %vm1224 = vcmp.eq.f32.partialorder %v1223, 8.507059e+37
    %v1225 = vand.u32 %v1198, 2147483648
    %v1226 = vor.u32 1.1754944e-38, %v1225
    %v1227 = vsel %vm1224, %v1226, %v1222
    %v1228 = vmul.f32 1.0, %v1227
    %v1229 = vmul.f32 %v1213, %v959
    %v1230 = vmul.f32 %v1228, %v960
    %v1232 = vsel %vm48, %v1229, 0
    %v1235 = vsel %vm48, %v1230, 0
    %1237 = vmatpush.msra.mxu0 0.0
    %1238 = vmatpush.msra.mxu0 0.0
    %1239 = vmatpush.msra.mxu0 0.0
    %1240 = vmatpush.msra.mxu0 0.0
    %1241 = vmatpush.msra.mxu0 0.0
    %1242 = vmatpush.msra.mxu0 0.0
    %1243 = vmatpush.msra.mxu0 0.0
    %1244 = vmatpush.msra.mxu0 0.0
    %1245 = vmatpush.msra.mxu0 0.0
    %1246 = vmatpush.msra.mxu0 0.0
    %1247 = vmatpush.msra.mxu0 0.0
    %1248 = vmatpush.msra.mxu0 0.0
    %1249 = vmatpush.msra.mxu0 0.0
    %1250 = vmatpush.msra.mxu0 0.0
    %1251 = vmatpush.msra.mxu0 0.0
    %1252 = vmatpush.msra.mxu0 %v42
    %1253 = vmatmul.f32.gmra.mxu0 %v1232
    %v1254 = vpop.f32.mrf.mxu0
    %v1255 = vadd.f32 0.0, %v1254
    %1256 = vmatmul.f32.gmra.mxu0 %v1235
    %v1257 = vpop.f32.mrf.mxu0
    %v1258 = vadd.f32 0.0, %v1257
    %1259 = vdwg.mxu0
    %1260 = vmatpush.msra.mxu0 0.0
    %1261 = vmatpush.msra.mxu0 0.0
    %1262 = vmatpush.msra.mxu0 0.0
    %1263 = vmatpush.msra.mxu0 0.0
    %1264 = vmatpush.msra.mxu0 0.0
    %1265 = vmatpush.msra.mxu0 0.0
    %1266 = vmatpush.msra.mxu0 0.0
    %1267 = vmatpush.msra.mxu0 0.0
    %1268 = vmatpush.msra.mxu0 0.0
    %1269 = vmatpush.msra.mxu0 0.0
    %1270 = vmatpush.msra.mxu0 0.0
    %1271 = vmatpush.msra.mxu0 0.0
    %1272 = vmatpush.msra.mxu0 0.0
    %1273 = vmatpush.msra.mxu0 0.0
    %1274 = vmatpush.msra.mxu0 %v1258
    %1275 = vmatpush.msra.mxu0 %v1255
    %1276 = vmatmul.f32.gmra.mxu0 %v83
    %v1277 = vpop.f32.mrf.mxu0
    %v1278 = vadd.f32 0.0, %v1277
    %1279 = vmatmul.f32.gmra.mxu0 %v86
    %v1280 = vpop.f32.mrf.mxu0
    %v1281 = vadd.f32 0.0, %v1280
    %1282 = vdwg.mxu0
    %v1283 = vadd.f32 %v259, %v1278
    %v1284 = vadd.f32 %v262, %v1281
    %v1285 = vtanh.pop %v1283
    %v1286 = vtanh.pop %v1284
    %v1287 = vsub.f32 %v959, %v1285
    %v1288 = vsub.f32 %v960, %v1286
    %1291 = vrot.lane.b32.xlu0 %v1287, 8
    %v1292 = vpop.permute.xlu0 %1291
    %1293 = vrot.lane.b32.xlu0 %v1288, 8
    %v1294 = vpop.permute.xlu0 %1293
    %v1297 = vmul.f32 %v1213, %v1292
    %v1298 = vmul.f32 %v1228, %v1294
    %1301 = vrot.lane.b32.xlu0 %v1297, 120
    %v1302 = vpop.permute.xlu0 %1301
    %1303 = vrot.lane.b32.xlu0 %v1298, 120
    %v1304 = vpop.permute.xlu0 %1303
    %v1307 = vadd.f32 %v1285, %v1302
    %v1308 = vadd.f32 %v1286, %v1304
    %1309 = vst.msk [vmem:[#allocation2 + $0x80] sm:$0xff] %vm48, %v1307
    %1310 = vst.msk [vmem:[#allocation2 + $0x88] sm:$0xff] %vm48, %v1308
    %v1312 = vsel %vm48, %v1133, 0
    %v1315 = vsel %vm48, %v1134, 0
    %1317 = vmatpush.msra.mxu0 0.0
    %1318 = vmatpush.msra.mxu0 0.0
    %1319 = vmatpush.msra.mxu0 0.0
    %1320 = vmatpush.msra.mxu0 0.0
    %1321 = vmatpush.msra.mxu0 0.0
    %1322 = vmatpush.msra.mxu0 0.0
    %1323 = vmatpush.msra.mxu0 0.0
    %1324 = vmatpush.msra.mxu0 0.0
    %1325 = vmatpush.msra.mxu0 0.0
    %1326 = vmatpush.msra.mxu0 0.0
    %1327 = vmatpush.msra.mxu0 0.0
    %1328 = vmatpush.msra.mxu0 0.0
    %1329 = vmatpush.msra.mxu0 0.0
    %1330 = vmatpush.msra.mxu0 0.0
    %1331 = vmatpush.msra.mxu0 0.0
    %1332 = vmatpush.msra.mxu0 %v41
    %1333 = vmatmul.f32.gmra.mxu0 %v1312
    %v1334 = vpop.f32.mrf.mxu0
    %v1335 = vadd.f32 0.0, %v1334
    %1336 = vmatmul.f32.gmra.mxu0 %v1315
    %v1337 = vpop.f32.mrf.mxu0
    %v1338 = vadd.f32 0.0, %v1337
    %1339 = vdwg.mxu0
    %1340 = vmatpush.msra.mxu0 0.0
    %1341 = vmatpush.msra.mxu0 0.0
    %1342 = vmatpush.msra.mxu0 0.0
    %1343 = vmatpush.msra.mxu0 0.0
    %1344 = vmatpush.msra.mxu0 0.0
    %1345 = vmatpush.msra.mxu0 0.0
    %1346 = vmatpush.msra.mxu0 0.0
    %1347 = vmatpush.msra.mxu0 0.0
    %1348 = vmatpush.msra.mxu0 0.0
    %1349 = vmatpush.msra.mxu0 0.0
    %1350 = vmatpush.msra.mxu0 0.0
    %1351 = vmatpush.msra.mxu0 0.0
    %1352 = vmatpush.msra.mxu0 0.0
    %1353 = vmatpush.msra.mxu0 0.0
    %1354 = vmatpush.msra.mxu0 %v1338
    %1355 = vmatpush.msra.mxu0 %v1335
    %1356 = vmatmul.f32.gmra.mxu0 %v83
    %v1357 = vpop.f32.mrf.mxu0
    %v1358 = vadd.f32 0.0, %v1357
    %1359 = vmatmul.f32.gmra.mxu0 %v86
    %v1360 = vpop.f32.mrf.mxu0
    %v1361 = vadd.f32 0.0, %v1360
    %1362 = vdwg.mxu0
    %v1363 = vadd.f32 %v106, %v1358
    %v1364 = vadd.f32 %v109, %v1361
    %v1365 = vxor.u32 %v1363, 2147483648
    %v1366 = vxor.u32 %v1364, 2147483648
    %v1367 = vmul.f32 %v1365, 1.442695
    %v1368 = vpow.pop %v1367
    %v1369 = vmul.f32 %v1366, 1.442695
    %v1370 = vpow.pop %v1369
    %v1371 = vadd.f32 %v1368, 1.0
    %v1372 = vadd.f32 %v1370, 1.0
    %v1373 = vrcp.pop %v1371
    %v1374 = vmul.f32 %v1371, %v1373
    %v1375 = vsub.f32 1.0, %v1374
    %v1376 = vmul.f32 %v1373, %v1375
    %v1377 = vadd.f32 %v1373, %v1376
    %vm1378 = vweird.f32 %v1371
    %vm1379 = vweird.f32 %v1373
    %vm1380 = vmor %vm1378, %vm1379
    %v1381 = vsel %vm1380, %v1373, %v1377
    %v1382 = vand.u32 2147483647, %v1371
    %vm1383 = vcmp.eq.f32.partialorder %v1382, 8.507059e+37
    %v1384 = vand.u32 %v1371, 2147483648
    %v1385 = vor.u32 1.1754944e-38, %v1384
    %v1386 = vsel %vm1383, %v1385, %v1381
    %v1387 = vmul.f32 1.0, %v1386
    %v1388 = vrcp.pop %v1372
    %v1389 = vmul.f32 %v1372, %v1388
    %v1390 = vsub.f32 1.0, %v1389
    %v1391 = vmul.f32 %v1388, %v1390
    %v1392 = vadd.f32 %v1388, %v1391
    %vm1393 = vweird.f32 %v1372
    %vm1394 = vweird.f32 %v1388
    %vm1395 = vmor %vm1393, %vm1394
    %v1396 = vsel %vm1395, %v1388, %v1392
    %v1397 = vand.u32 2147483647, %v1372
    %vm1398 = vcmp.eq.f32.partialorder %v1397, 8.507059e+37
    %v1399 = vand.u32 %v1372, 2147483648
    %v1400 = vor.u32 1.1754944e-38, %v1399
    %v1401 = vsel %vm1398, %v1400, %v1396
    %v1402 = vmul.f32 1.0, %v1401
    %v1403 = vmul.f32 %v1387, %v1133
    %v1404 = vmul.f32 %v1402, %v1134
    %v1406 = vsel %vm48, %v1403, 0
    %v1409 = vsel %vm48, %v1404, 0
    %1411 = vmatpush.msra.mxu0 0.0
    %1412 = vmatpush.msra.mxu0 0.0
    %1413 = vmatpush.msra.mxu0 0.0
    %1414 = vmatpush.msra.mxu0 0.0
    %1415 = vmatpush.msra.mxu0 0.0
    %1416 = vmatpush.msra.mxu0 0.0
    %1417 = vmatpush.msra.mxu0 0.0
    %1418 = vmatpush.msra.mxu0 0.0
    %1419 = vmatpush.msra.mxu0 0.0
    %1420 = vmatpush.msra.mxu0 0.0
    %1421 = vmatpush.msra.mxu0 0.0
    %1422 = vmatpush.msra.mxu0 0.0
    %1423 = vmatpush.msra.mxu0 0.0
    %1424 = vmatpush.msra.mxu0 0.0
    %1425 = vmatpush.msra.mxu0 0.0
    %1426 = vmatpush.msra.mxu0 %v42
    %1427 = vmatmul.f32.gmra.mxu0 %v1406
    %v1428 = vpop.f32.mrf.mxu0
    %v1429 = vadd.f32 0.0, %v1428
    %1430 = vmatmul.f32.gmra.mxu0 %v1409
    %v1431 = vpop.f32.mrf.mxu0
    %v1432 = vadd.f32 0.0, %v1431
    %1433 = vdwg.mxu0
    %1434 = vmatpush.msra.mxu0 0.0
    %1435 = vmatpush.msra.mxu0 0.0
    %1436 = vmatpush.msra.mxu0 0.0
    %1437 = vmatpush.msra.mxu0 0.0
    %1438 = vmatpush.msra.mxu0 0.0
    %1439 = vmatpush.msra.mxu0 0.0
    %1440 = vmatpush.msra.mxu0 0.0
    %1441 = vmatpush.msra.mxu0 0.0
    %1442 = vmatpush.msra.mxu0 0.0
    %1443 = vmatpush.msra.mxu0 0.0
    %1444 = vmatpush.msra.mxu0 0.0
    %1445 = vmatpush.msra.mxu0 0.0
    %1446 = vmatpush.msra.mxu0 0.0
    %1447 = vmatpush.msra.mxu0 0.0
    %1448 = vmatpush.msra.mxu0 %v1432
    %1449 = vmatpush.msra.mxu0 %v1429
    %1450 = vmatmul.f32.gmra.mxu0 %v83
    %v1451 = vpop.f32.mrf.mxu0
    %v1452 = vadd.f32 0.0, %v1451
    %1453 = vmatmul.f32.gmra.mxu0 %v86
    %v1454 = vpop.f32.mrf.mxu0
    %v1455 = vadd.f32 0.0, %v1454
    %1456 = vdwg.mxu0
    %v1457 = vadd.f32 %v156, %v1452
    %v1458 = vadd.f32 %v159, %v1455
    %v1459 = vtanh.pop %v1457
    %v1460 = vtanh.pop %v1458
    %v1461 = vsub.f32 %v1133, %v1459
    %v1462 = vsub.f32 %v1134, %v1460
    %1465 = vrot.lane.b32.xlu0 %v1461, 8
    %v1466 = vpop.permute.xlu0 %1465
    %1467 = vrot.lane.b32.xlu0 %v1462, 8
    %v1468 = vpop.permute.xlu0 %1467
    %v1471 = vmul.f32 %v1387, %v1466
    %v1472 = vmul.f32 %v1402, %v1468
    %1475 = vrot.lane.b32.xlu0 %v1471, 120
    %v1476 = vpop.permute.xlu0 %1475
    %1477 = vrot.lane.b32.xlu0 %v1472, 120
    %v1478 = vpop.permute.xlu0 %1477
    %v1481 = vadd.f32 %v1459, %v1476
    %v1482 = vadd.f32 %v1460, %v1478
    %1483 = vst.msk [vmem:[#allocation2 + $0x30] sm:$0xff] %vm48, %v1481
    %1484 = vst.msk [vmem:[#allocation2 + $0x38] sm:$0xff] %vm48, %v1482
    %v1486 = vsel %vm48, %v1307, 0
    %v1489 = vsel %vm48, %v1308, 0
    %1491 = vmatpush.msra.mxu0 0.0
    %1492 = vmatpush.msra.mxu0 0.0
    %1493 = vmatpush.msra.mxu0 0.0
    %1494 = vmatpush.msra.mxu0 0.0
    %1495 = vmatpush.msra.mxu0 0.0
    %1496 = vmatpush.msra.mxu0 0.0
    %1497 = vmatpush.msra.mxu0 0.0
    %1498 = vmatpush.msra.mxu0 0.0
    %1499 = vmatpush.msra.mxu0 0.0
    %1500 = vmatpush.msra.mxu0 0.0
    %1501 = vmatpush.msra.mxu0 0.0
    %1502 = vmatpush.msra.mxu0 0.0
    %1503 = vmatpush.msra.mxu0 0.0
    %1504 = vmatpush.msra.mxu0 0.0
    %1505 = vmatpush.msra.mxu0 0.0
    %1506 = vmatpush.msra.mxu0 %v41
    %1507 = vmatmul.f32.gmra.mxu0 %v1486
    %v1508 = vpop.f32.mrf.mxu0
    %v1509 = vadd.f32 0.0, %v1508
    %1510 = vmatmul.f32.gmra.mxu0 %v1489
    %v1511 = vpop.f32.mrf.mxu0
    %v1512 = vadd.f32 0.0, %v1511
    %1513 = vdwg.mxu0
    %1514 = vmatpush.msra.mxu0 0.0
    %1515 = vmatpush.msra.mxu0 0.0
    %1516 = vmatpush.msra.mxu0 0.0
    %1517 = vmatpush.msra.mxu0 0.0
    %1518 = vmatpush.msra.mxu0 0.0
    %1519 = vmatpush.msra.mxu0 0.0
    %1520 = vmatpush.msra.mxu0 0.0
    %1521 = vmatpush.msra.mxu0 0.0
    %1522 = vmatpush.msra.mxu0 0.0
    %1523 = vmatpush.msra.mxu0 0.0
    %1524 = vmatpush.msra.mxu0 0.0
    %1525 = vmatpush.msra.mxu0 0.0
    %1526 = vmatpush.msra.mxu0 0.0
    %1527 = vmatpush.msra.mxu0 0.0
    %1528 = vmatpush.msra.mxu0 %v1512
    %1529 = vmatpush.msra.mxu0 %v1509
    %1530 = vmatmul.f32.gmra.mxu0 %v83
    %v1531 = vpop.f32.mrf.mxu0
    %v1532 = vadd.f32 0.0, %v1531
    %1533 = vmatmul.f32.gmra.mxu0 %v86
    %v1534 = vpop.f32.mrf.mxu0
    %v1535 = vadd.f32 0.0, %v1534
    %1536 = vdwg.mxu0
    %v1537 = vadd.f32 %v213, %v1532
    %v1538 = vadd.f32 %v216, %v1535
    %v1539 = vxor.u32 %v1537, 2147483648
    %v1540 = vxor.u32 %v1538, 2147483648
    %v1541 = vmul.f32 %v1539, 1.442695
    %v1542 = vpow.pop %v1541
    %v1543 = vmul.f32 %v1540, 1.442695
    %v1544 = vpow.pop %v1543
    %v1545 = vadd.f32 %v1542, 1.0
    %v1546 = vadd.f32 %v1544, 1.0
    %v1547 = vrcp.pop %v1545
    %v1548 = vmul.f32 %v1545, %v1547
    %v1549 = vsub.f32 1.0, %v1548
    %v1550 = vmul.f32 %v1547, %v1549
    %v1551 = vadd.f32 %v1547, %v1550
    %vm1552 = vweird.f32 %v1545
    %vm1553 = vweird.f32 %v1547
    %vm1554 = vmor %vm1552, %vm1553
    %v1555 = vsel %vm1554, %v1547, %v1551
    %v1556 = vand.u32 2147483647, %v1545
    %vm1557 = vcmp.eq.f32.partialorder %v1556, 8.507059e+37
    %v1558 = vand.u32 %v1545, 2147483648
    %v1559 = vor.u32 1.1754944e-38, %v1558
    %v1560 = vsel %vm1557, %v1559, %v1555
    %v1561 = vmul.f32 1.0, %v1560
    %v1562 = vrcp.pop %v1546
    %v1563 = vmul.f32 %v1546, %v1562
    %v1564 = vsub.f32 1.0, %v1563
    %v1565 = vmul.f32 %v1562, %v1564
    %v1566 = vadd.f32 %v1562, %v1565
    %vm1567 = vweird.f32 %v1546
    %vm1568 = vweird.f32 %v1562
    %vm1569 = vmor %vm1567, %vm1568
    %v1570 = vsel %vm1569, %v1562, %v1566
    %v1571 = vand.u32 2147483647, %v1546
    %vm1572 = vcmp.eq.f32.partialorder %v1571, 8.507059e+37
    %v1573 = vand.u32 %v1546, 2147483648
    %v1574 = vor.u32 1.1754944e-38, %v1573
    %v1575 = vsel %vm1572, %v1574, %v1570
    %v1576 = vmul.f32 1.0, %v1575
    %v1577 = vmul.f32 %v1561, %v1307
    %v1578 = vmul.f32 %v1576, %v1308
    %v1580 = vsel %vm48, %v1577, 0
    %v1583 = vsel %vm48, %v1578, 0
    %1585 = vmatpush.msra.mxu0 0.0
    %1586 = vmatpush.msra.mxu0 0.0
    %1587 = vmatpush.msra.mxu0 0.0
    %1588 = vmatpush.msra.mxu0 0.0
    %1589 = vmatpush.msra.mxu0 0.0
    %1590 = vmatpush.msra.mxu0 0.0
    %1591 = vmatpush.msra.mxu0 0.0
    %1592 = vmatpush.msra.mxu0 0.0
    %1593 = vmatpush.msra.mxu0 0.0
    %1594 = vmatpush.msra.mxu0 0.0
    %1595 = vmatpush.msra.mxu0 0.0
    %1596 = vmatpush.msra.mxu0 0.0
    %1597 = vmatpush.msra.mxu0 0.0
    %1598 = vmatpush.msra.mxu0 0.0
    %1599 = vmatpush.msra.mxu0 0.0
    %1600 = vmatpush.msra.mxu0 %v42
    %1601 = vmatmul.f32.gmra.mxu0 %v1580
    %v1602 = vpop.f32.mrf.mxu0
    %v1603 = vadd.f32 0.0, %v1602
    %1604 = vmatmul.f32.gmra.mxu0 %v1583
    %v1605 = vpop.f32.mrf.mxu0
    %v1606 = vadd.f32 0.0, %v1605
    %1607 = vdwg.mxu0
    %1608 = vmatpush.msra.mxu0 0.0
    %1609 = vmatpush.msra.mxu0 0.0
    %1610 = vmatpush.msra.mxu0 0.0
    %1611 = vmatpush.msra.mxu0 0.0
    %1612 = vmatpush.msra.mxu0 0.0
    %1613 = vmatpush.msra.mxu0 0.0
    %1614 = vmatpush.msra.mxu0 0.0
    %1615 = vmatpush.msra.mxu0 0.0
    %1616 = vmatpush.msra.mxu0 0.0
    %1617 = vmatpush.msra.mxu0 0.0
    %1618 = vmatpush.msra.mxu0 0.0
    %1619 = vmatpush.msra.mxu0 0.0
    %1620 = vmatpush.msra.mxu0 0.0
    %1621 = vmatpush.msra.mxu0 0.0
    %1622 = vmatpush.msra.mxu0 %v1606
    %1623 = vmatpush.msra.mxu0 %v1603
    %1624 = vmatmul.f32.gmra.mxu0 %v83
    %v1625 = vpop.f32.mrf.mxu0
    %v1626 = vadd.f32 0.0, %v1625
    %1627 = vmatmul.f32.gmra.mxu0 %v86
    %v1628 = vpop.f32.mrf.mxu0
    %v1629 = vadd.f32 0.0, %v1628
    %1630 = vdwg.mxu0
    %v1631 = vadd.f32 %v259, %v1626
    %v1632 = vadd.f32 %v262, %v1629
    %v1633 = vtanh.pop %v1631
    %v1634 = vtanh.pop %v1632
    %v1635 = vsub.f32 %v1307, %v1633
    %v1636 = vsub.f32 %v1308, %v1634
    %1639 = vrot.lane.b32.xlu0 %v1635, 8
    %v1640 = vpop.permute.xlu0 %1639
    %1641 = vrot.lane.b32.xlu0 %v1636, 8
    %v1642 = vpop.permute.xlu0 %1641
    %v1645 = vmul.f32 %v1561, %v1640
    %v1646 = vmul.f32 %v1576, %v1642
    %1649 = vrot.lane.b32.xlu0 %v1645, 120
    %v1650 = vpop.permute.xlu0 %1649
    %1651 = vrot.lane.b32.xlu0 %v1646, 120
    %v1652 = vpop.permute.xlu0 %1651
    %v1655 = vadd.f32 %v1633, %v1650
    %v1656 = vadd.f32 %v1634, %v1652
    %1657 = vst.msk [vmem:[#allocation2 + $0x90] sm:$0xff] %vm48, %v1655
    %1658 = vst.msk [vmem:[#allocation2 + $0x98] sm:$0xff] %vm48, %v1656
    %v1660 = vsel %vm48, %v1481, 0
    %v1663 = vsel %vm48, %v1482, 0
    %1665 = vmatpush.msra.mxu0 0.0
    %1666 = vmatpush.msra.mxu0 0.0
    %1667 = vmatpush.msra.mxu0 0.0
    %1668 = vmatpush.msra.mxu0 0.0
    %1669 = vmatpush.msra.mxu0 0.0
    %1670 = vmatpush.msra.mxu0 0.0
    %1671 = vmatpush.msra.mxu0 0.0
    %1672 = vmatpush.msra.mxu0 0.0
    %1673 = vmatpush.msra.mxu0 0.0
    %1674 = vmatpush.msra.mxu0 0.0
    %1675 = vmatpush.msra.mxu0 0.0
    %1676 = vmatpush.msra.mxu0 0.0
    %1677 = vmatpush.msra.mxu0 0.0
    %1678 = vmatpush.msra.mxu0 0.0
    %1679 = vmatpush.msra.mxu0 0.0
    %1680 = vmatpush.msra.mxu0 %v41
    %1681 = vmatmul.f32.gmra.mxu0 %v1660
    %v1682 = vpop.f32.mrf.mxu0
    %v1683 = vadd.f32 0.0, %v1682
    %1684 = vmatmul.f32.gmra.mxu0 %v1663
    %v1685 = vpop.f32.mrf.mxu0
    %v1686 = vadd.f32 0.0, %v1685
    %1687 = vdwg.mxu0
    %1688 = vmatpush.msra.mxu0 0.0
    %1689 = vmatpush.msra.mxu0 0.0
    %1690 = vmatpush.msra.mxu0 0.0
    %1691 = vmatpush.msra.mxu0 0.0
    %1692 = vmatpush.msra.mxu0 0.0
    %1693 = vmatpush.msra.mxu0 0.0
    %1694 = vmatpush.msra.mxu0 0.0
    %1695 = vmatpush.msra.mxu0 0.0
    %1696 = vmatpush.msra.mxu0 0.0
    %1697 = vmatpush.msra.mxu0 0.0
    %1698 = vmatpush.msra.mxu0 0.0
    %1699 = vmatpush.msra.mxu0 0.0
    %1700 = vmatpush.msra.mxu0 0.0
    %1701 = vmatpush.msra.mxu0 0.0
    %1702 = vmatpush.msra.mxu0 %v1686
    %1703 = vmatpush.msra.mxu0 %v1683
    %1704 = vmatmul.f32.gmra.mxu0 %v83
    %v1705 = vpop.f32.mrf.mxu0
    %v1706 = vadd.f32 0.0, %v1705
    %1707 = vmatmul.f32.gmra.mxu0 %v86
    %v1708 = vpop.f32.mrf.mxu0
    %v1709 = vadd.f32 0.0, %v1708
    %1710 = vdwg.mxu0
    %v1711 = vadd.f32 %v106, %v1706
    %v1712 = vadd.f32 %v109, %v1709
    %v1713 = vxor.u32 %v1711, 2147483648
    %v1714 = vxor.u32 %v1712, 2147483648
    %v1715 = vmul.f32 %v1713, 1.442695
    %v1716 = vpow.pop %v1715
    %v1717 = vmul.f32 %v1714, 1.442695
    %v1718 = vpow.pop %v1717
    %v1719 = vadd.f32 %v1716, 1.0
    %v1720 = vadd.f32 %v1718, 1.0
    %v1721 = vrcp.pop %v1719
    %v1722 = vmul.f32 %v1719, %v1721
    %v1723 = vsub.f32 1.0, %v1722
    %v1724 = vmul.f32 %v1721, %v1723
    %v1725 = vadd.f32 %v1721, %v1724
    %vm1726 = vweird.f32 %v1719
    %vm1727 = vweird.f32 %v1721
    %vm1728 = vmor %vm1726, %vm1727
    %v1729 = vsel %vm1728, %v1721, %v1725
    %v1730 = vand.u32 2147483647, %v1719
    %vm1731 = vcmp.eq.f32.partialorder %v1730, 8.507059e+37
    %v1732 = vand.u32 %v1719, 2147483648
    %v1733 = vor.u32 1.1754944e-38, %v1732
    %v1734 = vsel %vm1731, %v1733, %v1729
    %v1735 = vmul.f32 1.0, %v1734
    %v1736 = vrcp.pop %v1720
    %v1737 = vmul.f32 %v1720, %v1736
    %v1738 = vsub.f32 1.0, %v1737
    %v1739 = vmul.f32 %v1736, %v1738
    %v1740 = vadd.f32 %v1736, %v1739
    %vm1741 = vweird.f32 %v1720
    %vm1742 = vweird.f32 %v1736
    %vm1743 = vmor %vm1741, %vm1742
    %v1744 = vsel %vm1743, %v1736, %v1740
    %v1745 = vand.u32 2147483647, %v1720
    %vm1746 = vcmp.eq.f32.partialorder %v1745, 8.507059e+37
    %v1747 = vand.u32 %v1720, 2147483648
    %v1748 = vor.u32 1.1754944e-38, %v1747
    %v1749 = vsel %vm1746, %v1748, %v1744
    %v1750 = vmul.f32 1.0, %v1749
    %v1751 = vmul.f32 %v1735, %v1481
    %v1752 = vmul.f32 %v1750, %v1482
    %v1754 = vsel %vm48, %v1751, 0
    %v1757 = vsel %vm48, %v1752, 0
    %1759 = vmatpush.msra.mxu0 0.0
    %1760 = vmatpush.msra.mxu0 0.0
    %1761 = vmatpush.msra.mxu0 0.0
    %1762 = vmatpush.msra.mxu0 0.0
    %1763 = vmatpush.msra.mxu0 0.0
    %1764 = vmatpush.msra.mxu0 0.0
    %1765 = vmatpush.msra.mxu0 0.0
    %1766 = vmatpush.msra.mxu0 0.0
    %1767 = vmatpush.msra.mxu0 0.0
    %1768 = vmatpush.msra.mxu0 0.0
    %1769 = vmatpush.msra.mxu0 0.0
    %1770 = vmatpush.msra.mxu0 0.0
    %1771 = vmatpush.msra.mxu0 0.0
    %1772 = vmatpush.msra.mxu0 0.0
    %1773 = vmatpush.msra.mxu0 0.0
    %1774 = vmatpush.msra.mxu0 %v42
    %1775 = vmatmul.f32.gmra.mxu0 %v1754
    %v1776 = vpop.f32.mrf.mxu0
    %v1777 = vadd.f32 0.0, %v1776
    %1778 = vmatmul.f32.gmra.mxu0 %v1757
    %v1779 = vpop.f32.mrf.mxu0
    %v1780 = vadd.f32 0.0, %v1779
    %1781 = vdwg.mxu0
    %1782 = vmatpush.msra.mxu0 0.0
    %1783 = vmatpush.msra.mxu0 0.0
    %1784 = vmatpush.msra.mxu0 0.0
    %1785 = vmatpush.msra.mxu0 0.0
    %1786 = vmatpush.msra.mxu0 0.0
    %1787 = vmatpush.msra.mxu0 0.0
    %1788 = vmatpush.msra.mxu0 0.0
    %1789 = vmatpush.msra.mxu0 0.0
    %1790 = vmatpush.msra.mxu0 0.0
    %1791 = vmatpush.msra.mxu0 0.0
    %1792 = vmatpush.msra.mxu0 0.0
    %1793 = vmatpush.msra.mxu0 0.0
    %1794 = vmatpush.msra.mxu0 0.0
    %1795 = vmatpush.msra.mxu0 0.0
    %1796 = vmatpush.msra.mxu0 %v1780
    %1797 = vmatpush.msra.mxu0 %v1777
    %1798 = vmatmul.f32.gmra.mxu0 %v83
    %v1799 = vpop.f32.mrf.mxu0
    %v1800 = vadd.f32 0.0, %v1799
    %1801 = vmatmul.f32.gmra.mxu0 %v86
    %v1802 = vpop.f32.mrf.mxu0
    %v1803 = vadd.f32 0.0, %v1802
    %1804 = vdwg.mxu0
    %v1805 = vadd.f32 %v156, %v1800
    %v1806 = vadd.f32 %v159, %v1803
    %v1807 = vtanh.pop %v1805
    %v1808 = vtanh.pop %v1806
    %v1809 = vsub.f32 %v1481, %v1807
    %v1810 = vsub.f32 %v1482, %v1808
    %1813 = vrot.lane.b32.xlu0 %v1809, 8
    %v1814 = vpop.permute.xlu0 %1813
    %1815 = vrot.lane.b32.xlu0 %v1810, 8
    %v1816 = vpop.permute.xlu0 %1815
    %v1819 = vmul.f32 %v1735, %v1814
    %v1820 = vmul.f32 %v1750, %v1816
    %1823 = vrot.lane.b32.xlu0 %v1819, 120
    %v1824 = vpop.permute.xlu0 %1823
    %1825 = vrot.lane.b32.xlu0 %v1820, 120
    %v1826 = vpop.permute.xlu0 %1825
    %v1829 = vadd.f32 %v1807, %v1824
    %v1830 = vadd.f32 %v1808, %v1826
    %1831 = vst.msk [vmem:[#allocation2 + $0x40] sm:$0xff] %vm48, %v1829
    %1832 = vst.msk [vmem:[#allocation2 + $0x48] sm:$0xff] %vm48, %v1830
    %v1834 = vsel %vm48, %v1655, 0
    %v1837 = vsel %vm48, %v1656, 0
    %1839 = vmatpush.msra.mxu0 0.0
    %1840 = vmatpush.msra.mxu0 0.0
    %1841 = vmatpush.msra.mxu0 0.0
    %1842 = vmatpush.msra.mxu0 0.0
    %1843 = vmatpush.msra.mxu0 0.0
    %1844 = vmatpush.msra.mxu0 0.0
    %1845 = vmatpush.msra.mxu0 0.0
    %1846 = vmatpush.msra.mxu0 0.0
    %1847 = vmatpush.msra.mxu0 0.0
    %1848 = vmatpush.msra.mxu0 0.0
    %1849 = vmatpush.msra.mxu0 0.0
    %1850 = vmatpush.msra.mxu0 0.0
    %1851 = vmatpush.msra.mxu0 0.0
    %1852 = vmatpush.msra.mxu0 0.0
    %1853 = vmatpush.msra.mxu0 0.0
    %1854 = vmatpush.msra.mxu0 %v41
    %1855 = vmatmul.f32.gmra.mxu0 %v1834
    %v1856 = vpop.f32.mrf.mxu0
    %v1857 = vadd.f32 0.0, %v1856
    %1858 = vmatmul.f32.gmra.mxu0 %v1837
    %v1859 = vpop.f32.mrf.mxu0
    %v1860 = vadd.f32 0.0, %v1859
    %1861 = vdwg.mxu0
    %1862 = vmatpush.msra.mxu0 0.0
    %1863 = vmatpush.msra.mxu0 0.0
    %1864 = vmatpush.msra.mxu0 0.0
    %1865 = vmatpush.msra.mxu0 0.0
    %1866 = vmatpush.msra.mxu0 0.0
    %1867 = vmatpush.msra.mxu0 0.0
    %1868 = vmatpush.msra.mxu0 0.0
    %1869 = vmatpush.msra.mxu0 0.0
    %1870 = vmatpush.msra.mxu0 0.0
    %1871 = vmatpush.msra.mxu0 0.0
    %1872 = vmatpush.msra.mxu0 0.0
    %1873 = vmatpush.msra.mxu0 0.0
    %1874 = vmatpush.msra.mxu0 0.0
    %1875 = vmatpush.msra.mxu0 0.0
    %1876 = vmatpush.msra.mxu0 %v1860
    %1877 = vmatpush.msra.mxu0 %v1857
    %1878 = vmatmul.f32.gmra.mxu0 %v83
    %v1879 = vpop.f32.mrf.mxu0
    %v1880 = vadd.f32 0.0, %v1879
    %1881 = vmatmul.f32.gmra.mxu0 %v86
    %v1882 = vpop.f32.mrf.mxu0
    %v1883 = vadd.f32 0.0, %v1882
    %1884 = vdwg.mxu0
    %v1885 = vadd.f32 %v213, %v1880
    %v1886 = vadd.f32 %v216, %v1883
    %v1887 = vxor.u32 %v1885, 2147483648
    %v1888 = vxor.u32 %v1886, 2147483648
    %v1889 = vmul.f32 %v1887, 1.442695
    %v1890 = vpow.pop %v1889
    %v1891 = vmul.f32 %v1888, 1.442695
    %v1892 = vpow.pop %v1891
    %v1893 = vadd.f32 %v1890, 1.0
    %v1894 = vadd.f32 %v1892, 1.0
    %v1895 = vrcp.pop %v1893
    %v1896 = vmul.f32 %v1893, %v1895
    %v1897 = vsub.f32 1.0, %v1896
    %v1898 = vmul.f32 %v1895, %v1897
    %v1899 = vadd.f32 %v1895, %v1898
    %vm1900 = vweird.f32 %v1893
    %vm1901 = vweird.f32 %v1895
    %vm1902 = vmor %vm1900, %vm1901
    %v1903 = vsel %vm1902, %v1895, %v1899
    %v1904 = vand.u32 2147483647, %v1893
    %vm1905 = vcmp.eq.f32.partialorder %v1904, 8.507059e+37
    %v1906 = vand.u32 %v1893, 2147483648
    %v1907 = vor.u32 1.1754944e-38, %v1906
    %v1908 = vsel %vm1905, %v1907, %v1903
    %v1909 = vmul.f32 1.0, %v1908
    %v1910 = vrcp.pop %v1894
    %v1911 = vmul.f32 %v1894, %v1910
    %v1912 = vsub.f32 1.0, %v1911
    %v1913 = vmul.f32 %v1910, %v1912
    %v1914 = vadd.f32 %v1910, %v1913
    %vm1915 = vweird.f32 %v1894
    %vm1916 = vweird.f32 %v1910
    %vm1917 = vmor %vm1915, %vm1916
    %v1918 = vsel %vm1917, %v1910, %v1914
    %v1919 = vand.u32 2147483647, %v1894
    %vm1920 = vcmp.eq.f32.partialorder %v1919, 8.507059e+37
    %v1921 = vand.u32 %v1894, 2147483648
    %v1922 = vor.u32 1.1754944e-38, %v1921
    %v1923 = vsel %vm1920, %v1922, %v1918
    %v1924 = vmul.f32 1.0, %v1923
    %v1925 = vmul.f32 %v1909, %v1655
    %v1926 = vmul.f32 %v1924, %v1656
    %v1928 = vsel %vm48, %v1925, 0
    %v1931 = vsel %vm48, %v1926, 0
    %1933 = vmatpush.msra.mxu0 0.0
    %1934 = vmatpush.msra.mxu0 0.0
    %1935 = vmatpush.msra.mxu0 0.0
    %1936 = vmatpush.msra.mxu0 0.0
    %1937 = vmatpush.msra.mxu0 0.0
    %1938 = vmatpush.msra.mxu0 0.0
    %1939 = vmatpush.msra.mxu0 0.0
    %1940 = vmatpush.msra.mxu0 0.0
    %1941 = vmatpush.msra.mxu0 0.0
    %1942 = vmatpush.msra.mxu0 0.0
    %1943 = vmatpush.msra.mxu0 0.0
    %1944 = vmatpush.msra.mxu0 0.0
    %1945 = vmatpush.msra.mxu0 0.0
    %1946 = vmatpush.msra.mxu0 0.0
    %1947 = vmatpush.msra.mxu0 0.0
    %1948 = vmatpush.msra.mxu0 %v42
    %1949 = vmatmul.f32.gmra.mxu0 %v1928
    %v1950 = vpop.f32.mrf.mxu0
    %v1951 = vadd.f32 0.0, %v1950
    %1952 = vmatmul.f32.gmra.mxu0 %v1931
    %v1953 = vpop.f32.mrf.mxu0
    %v1954 = vadd.f32 0.0, %v1953
    %1955 = vdwg.mxu0
    %1956 = vmatpush.msra.mxu0 0.0
    %1957 = vmatpush.msra.mxu0 0.0
    %1958 = vmatpush.msra.mxu0 0.0
    %1959 = vmatpush.msra.mxu0 0.0
    %1960 = vmatpush.msra.mxu0 0.0
    %1961 = vmatpush.msra.mxu0 0.0
    %1962 = vmatpush.msra.mxu0 0.0
    %1963 = vmatpush.msra.mxu0 0.0
    %1964 = vmatpush.msra.mxu0 0.0
    %1965 = vmatpush.msra.mxu0 0.0
    %1966 = vmatpush.msra.mxu0 0.0
    %1967 = vmatpush.msra.mxu0 0.0
    %1968 = vmatpush.msra.mxu0 0.0
    %1969 = vmatpush.msra.mxu0 0.0
    %1970 = vmatpush.msra.mxu0 %v1954
    %1971 = vmatpush.msra.mxu0 %v1951
    %1972 = vmatmul.f32.gmra.mxu0 %v83
    %v1973 = vpop.f32.mrf.mxu0
    %v1974 = vadd.f32 0.0, %v1973
    %1975 = vmatmul.f32.gmra.mxu0 %v86
    %v1976 = vpop.f32.mrf.mxu0
    %v1977 = vadd.f32 0.0, %v1976
    %1978 = vdwg.mxu0
    %v1979 = vadd.f32 %v259, %v1974
    %v1980 = vadd.f32 %v262, %v1977
    %v1981 = vtanh.pop %v1979
    %v1982 = vtanh.pop %v1980
    %v1983 = vsub.f32 %v1655, %v1981
    %v1984 = vsub.f32 %v1656, %v1982
    %1987 = vrot.lane.b32.xlu0 %v1983, 8
    %v1988 = vpop.permute.xlu0 %1987
    %1989 = vrot.lane.b32.xlu0 %v1984, 8
    %v1990 = vpop.permute.xlu0 %1989
    %v1993 = vmul.f32 %v1909, %v1988
    %v1994 = vmul.f32 %v1924, %v1990
    %1997 = vrot.lane.b32.xlu0 %v1993, 120
    %v1998 = vpop.permute.xlu0 %1997
    %1999 = vrot.lane.b32.xlu0 %v1994, 120
    %v2000 = vpop.permute.xlu0 %1999
    %v2003 = vadd.f32 %v1981, %v1998
    %v2004 = vadd.f32 %v1982, %v2000
    %2005 = vst.msk [vmem:[#allocation2 + $0xa0] sm:$0xff] %vm48, %v2003
    %2006 = vst.msk [vmem:[#allocation2 + $0xa8] sm:$0xff] %vm48, %v2004
    %v2008 = vsel %vm48, %v1829, 0
    %v2011 = vsel %vm48, %v1830, 0
    %2013 = vmatpush.msra.mxu0 0.0
    %2014 = vmatpush.msra.mxu0 0.0
    %2015 = vmatpush.msra.mxu0 0.0
    %2016 = vmatpush.msra.mxu0 0.0
    %2017 = vmatpush.msra.mxu0 0.0
    %2018 = vmatpush.msra.mxu0 0.0
    %2019 = vmatpush.msra.mxu0 0.0
    %2020 = vmatpush.msra.mxu0 0.0
    %2021 = vmatpush.msra.mxu0 0.0
    %2022 = vmatpush.msra.mxu0 0.0
    %2023 = vmatpush.msra.mxu0 0.0
    %2024 = vmatpush.msra.mxu0 0.0
    %2025 = vmatpush.msra.mxu0 0.0
    %2026 = vmatpush.msra.mxu0 0.0
    %2027 = vmatpush.msra.mxu0 0.0
    %2028 = vmatpush.msra.mxu0 %v41
    %2029 = vmatmul.f32.gmra.mxu0 %v2008
    %v2030 = vpop.f32.mrf.mxu0
    %v2031 = vadd.f32 0.0, %v2030
    %2032 = vmatmul.f32.gmra.mxu0 %v2011
    %v2033 = vpop.f32.mrf.mxu0
    %v2034 = vadd.f32 0.0, %v2033
    %2035 = vdwg.mxu0
    %2036 = vmatpush.msra.mxu0 0.0
    %2037 = vmatpush.msra.mxu0 0.0
    %2038 = vmatpush.msra.mxu0 0.0
    %2039 = vmatpush.msra.mxu0 0.0
    %2040 = vmatpush.msra.mxu0 0.0
    %2041 = vmatpush.msra.mxu0 0.0
    %2042 = vmatpush.msra.mxu0 0.0
    %2043 = vmatpush.msra.mxu0 0.0
    %2044 = vmatpush.msra.mxu0 0.0
    %2045 = vmatpush.msra.mxu0 0.0
    %2046 = vmatpush.msra.mxu0 0.0
    %2047 = vmatpush.msra.mxu0 0.0
    %2048 = vmatpush.msra.mxu0 0.0
    %2049 = vmatpush.msra.mxu0 0.0
    %2050 = vmatpush.msra.mxu0 %v2034
    %2051 = vmatpush.msra.mxu0 %v2031
    %2052 = vmatmul.f32.gmra.mxu0 %v83
    %v2053 = vpop.f32.mrf.mxu0
    %v2054 = vadd.f32 0.0, %v2053
    %2055 = vmatmul.f32.gmra.mxu0 %v86
    %v2056 = vpop.f32.mrf.mxu0
    %v2057 = vadd.f32 0.0, %v2056
    %2058 = vdwg.mxu0
    %v2059 = vadd.f32 %v106, %v2054
    %v2060 = vadd.f32 %v109, %v2057
    %v2061 = vxor.u32 %v2059, 2147483648
    %v2062 = vxor.u32 %v2060, 2147483648
    %v2063 = vmul.f32 %v2061, 1.442695
    %v2064 = vpow.pop %v2063
    %v2065 = vmul.f32 %v2062, 1.442695
    %v2066 = vpow.pop %v2065
    %v2067 = vadd.f32 %v2064, 1.0
    %v2068 = vadd.f32 %v2066, 1.0
    %v2069 = vrcp.pop %v2067
    %v2070 = vmul.f32 %v2067, %v2069
    %v2071 = vsub.f32 1.0, %v2070
    %v2072 = vmul.f32 %v2069, %v2071
    %v2073 = vadd.f32 %v2069, %v2072
    %vm2074 = vweird.f32 %v2067
    %vm2075 = vweird.f32 %v2069
    %vm2076 = vmor %vm2074, %vm2075
    %v2077 = vsel %vm2076, %v2069, %v2073
    %v2078 = vand.u32 2147483647, %v2067
    %vm2079 = vcmp.eq.f32.partialorder %v2078, 8.507059e+37
    %v2080 = vand.u32 %v2067, 2147483648
    %v2081 = vor.u32 1.1754944e-38, %v2080
    %v2082 = vsel %vm2079, %v2081, %v2077
    %v2083 = vmul.f32 1.0, %v2082
    %v2084 = vrcp.pop %v2068
    %v2085 = vmul.f32 %v2068, %v2084
    %v2086 = vsub.f32 1.0, %v2085
    %v2087 = vmul.f32 %v2084, %v2086
    %v2088 = vadd.f32 %v2084, %v2087
    %vm2089 = vweird.f32 %v2068
    %vm2090 = vweird.f32 %v2084
    %vm2091 = vmor %vm2089, %vm2090
    %v2092 = vsel %vm2091, %v2084, %v2088
    %v2093 = vand.u32 2147483647, %v2068
    %vm2094 = vcmp.eq.f32.partialorder %v2093, 8.507059e+37
    %v2095 = vand.u32 %v2068, 2147483648
    %v2096 = vor.u32 1.1754944e-38, %v2095
    %v2097 = vsel %vm2094, %v2096, %v2092
    %v2098 = vmul.f32 1.0, %v2097
    %v2099 = vmul.f32 %v2083, %v1829
    %v2100 = vmul.f32 %v2098, %v1830
    %v2102 = vsel %vm48, %v2099, 0
    %v2105 = vsel %vm48, %v2100, 0
    %2107 = vmatpush.msra.mxu0 0.0
    %2108 = vmatpush.msra.mxu0 0.0
    %2109 = vmatpush.msra.mxu0 0.0
    %2110 = vmatpush.msra.mxu0 0.0
    %2111 = vmatpush.msra.mxu0 0.0
    %2112 = vmatpush.msra.mxu0 0.0
    %2113 = vmatpush.msra.mxu0 0.0
    %2114 = vmatpush.msra.mxu0 0.0
    %2115 = vmatpush.msra.mxu0 0.0
    %2116 = vmatpush.msra.mxu0 0.0
    %2117 = vmatpush.msra.mxu0 0.0
    %2118 = vmatpush.msra.mxu0 0.0
    %2119 = vmatpush.msra.mxu0 0.0
    %2120 = vmatpush.msra.mxu0 0.0
    %2121 = vmatpush.msra.mxu0 0.0
    %2122 = vmatpush.msra.mxu0 %v42
    %2123 = vmatmul.f32.gmra.mxu0 %v2102
    %v2124 = vpop.f32.mrf.mxu0
    %v2125 = vadd.f32 0.0, %v2124
    %2126 = vmatmul.f32.gmra.mxu0 %v2105
    %v2127 = vpop.f32.mrf.mxu0
    %v2128 = vadd.f32 0.0, %v2127
    %2129 = vdwg.mxu0
    %2130 = vmatpush.msra.mxu0 0.0
    %2131 = vmatpush.msra.mxu0 0.0
    %2132 = vmatpush.msra.mxu0 0.0
    %2133 = vmatpush.msra.mxu0 0.0
    %2134 = vmatpush.msra.mxu0 0.0
    %2135 = vmatpush.msra.mxu0 0.0
    %2136 = vmatpush.msra.mxu0 0.0
    %2137 = vmatpush.msra.mxu0 0.0
    %2138 = vmatpush.msra.mxu0 0.0
    %2139 = vmatpush.msra.mxu0 0.0
    %2140 = vmatpush.msra.mxu0 0.0
    %2141 = vmatpush.msra.mxu0 0.0
    %2142 = vmatpush.msra.mxu0 0.0
    %2143 = vmatpush.msra.mxu0 0.0
    %2144 = vmatpush.msra.mxu0 %v2128
    %2145 = vmatpush.msra.mxu0 %v2125
    %2146 = vmatmul.f32.gmra.mxu0 %v83
    %v2147 = vpop.f32.mrf.mxu0
    %v2148 = vadd.f32 0.0, %v2147
    %2149 = vmatmul.f32.gmra.mxu0 %v86
    %v2150 = vpop.f32.mrf.mxu0
    %v2151 = vadd.f32 0.0, %v2150
    %2152 = vdwg.mxu0
    %v2153 = vadd.f32 %v156, %v2148
    %v2154 = vadd.f32 %v159, %v2151
    %v2155 = vtanh.pop %v2153
    %v2156 = vtanh.pop %v2154
    %v2157 = vsub.f32 %v1829, %v2155
    %v2158 = vsub.f32 %v1830, %v2156
    %2161 = vrot.lane.b32.xlu0 %v2157, 8
    %v2162 = vpop.permute.xlu0 %2161
    %2163 = vrot.lane.b32.xlu0 %v2158, 8
    %v2164 = vpop.permute.xlu0 %2163
    %v2167 = vmul.f32 %v2083, %v2162
    %v2168 = vmul.f32 %v2098, %v2164
    %2171 = vrot.lane.b32.xlu0 %v2167, 120
    %v2172 = vpop.permute.xlu0 %2171
    %2173 = vrot.lane.b32.xlu0 %v2168, 120
    %v2174 = vpop.permute.xlu0 %2173
    %v2177 = vadd.f32 %v2155, %v2172
    %v2178 = vadd.f32 %v2156, %v2174
    %2179 = vst.msk [vmem:[#allocation2 + $0x50] sm:$0xff] %vm48, %v2177
    %2180 = vst.msk [vmem:[#allocation2 + $0x58] sm:$0xff] %vm48, %v2178
    %v2182 = vsel %vm48, %v2003, 0
    %v2185 = vsel %vm48, %v2004, 0
    %2187 = vmatpush.msra.mxu0 0.0
    %2188 = vmatpush.msra.mxu0 0.0
    %2189 = vmatpush.msra.mxu0 0.0
    %2190 = vmatpush.msra.mxu0 0.0
    %2191 = vmatpush.msra.mxu0 0.0
    %2192 = vmatpush.msra.mxu0 0.0
    %2193 = vmatpush.msra.mxu0 0.0
    %2194 = vmatpush.msra.mxu0 0.0
    %2195 = vmatpush.msra.mxu0 0.0
    %2196 = vmatpush.msra.mxu0 0.0
    %2197 = vmatpush.msra.mxu0 0.0
    %2198 = vmatpush.msra.mxu0 0.0
    %2199 = vmatpush.msra.mxu0 0.0
    %2200 = vmatpush.msra.mxu0 0.0
    %2201 = vmatpush.msra.mxu0 0.0
    %2202 = vmatpush.msra.mxu0 %v41
    %2203 = vmatmul.f32.gmra.mxu0 %v2182
    %v2204 = vpop.f32.mrf.mxu0
    %v2205 = vadd.f32 0.0, %v2204
    %2206 = vmatmul.f32.gmra.mxu0 %v2185
    %v2207 = vpop.f32.mrf.mxu0
    %v2208 = vadd.f32 0.0, %v2207
    %2209 = vdwg.mxu0
    %2210 = vmatpush.msra.mxu0 0.0
    %2211 = vmatpush.msra.mxu0 0.0
    %2212 = vmatpush.msra.mxu0 0.0
    %2213 = vmatpush.msra.mxu0 0.0
    %2214 = vmatpush.msra.mxu0 0.0
    %2215 = vmatpush.msra.mxu0 0.0
    %2216 = vmatpush.msra.mxu0 0.0
    %2217 = vmatpush.msra.mxu0 0.0
    %2218 = vmatpush.msra.mxu0 0.0
    %2219 = vmatpush.msra.mxu0 0.0
    %2220 = vmatpush.msra.mxu0 0.0
    %2221 = vmatpush.msra.mxu0 0.0
    %2222 = vmatpush.msra.mxu0 0.0
    %2223 = vmatpush.msra.mxu0 0.0
    %2224 = vmatpush.msra.mxu0 %v2208
    %2225 = vmatpush.msra.mxu0 %v2205
    %2226 = vmatmul.f32.gmra.mxu0 %v83
    %v2227 = vpop.f32.mrf.mxu0
    %v2228 = vadd.f32 0.0, %v2227
    %2229 = vmatmul.f32.gmra.mxu0 %v86
    %v2230 = vpop.f32.mrf.mxu0
    %v2231 = vadd.f32 0.0, %v2230
    %2232 = vdwg.mxu0
    %v2233 = vadd.f32 %v213, %v2228
    %v2234 = vadd.f32 %v216, %v2231
    %v2235 = vxor.u32 %v2233, 2147483648
    %v2236 = vxor.u32 %v2234, 2147483648
    %v2237 = vmul.f32 %v2235, 1.442695
    %v2238 = vpow.pop %v2237
    %v2239 = vmul.f32 %v2236, 1.442695
    %v2240 = vpow.pop %v2239
    %v2241 = vadd.f32 %v2238, 1.0
    %v2242 = vadd.f32 %v2240, 1.0
    %v2243 = vrcp.pop %v2241
    %v2244 = vmul.f32 %v2241, %v2243
    %v2245 = vsub.f32 1.0, %v2244
    %v2246 = vmul.f32 %v2243, %v2245
    %v2247 = vadd.f32 %v2243, %v2246
    %vm2248 = vweird.f32 %v2241
    %vm2249 = vweird.f32 %v2243
    %vm2250 = vmor %vm2248, %vm2249
    %v2251 = vsel %vm2250, %v2243, %v2247
    %v2252 = vand.u32 2147483647, %v2241
    %vm2253 = vcmp.eq.f32.partialorder %v2252, 8.507059e+37
    %v2254 = vand.u32 %v2241, 2147483648
    %v2255 = vor.u32 1.1754944e-38, %v2254
    %v2256 = vsel %vm2253, %v2255, %v2251
    %v2257 = vmul.f32 1.0, %v2256
    %v2258 = vrcp.pop %v2242
    %v2259 = vmul.f32 %v2242, %v2258
    %v2260 = vsub.f32 1.0, %v2259
    %v2261 = vmul.f32 %v2258, %v2260
    %v2262 = vadd.f32 %v2258, %v2261
    %vm2263 = vweird.f32 %v2242
    %vm2264 = vweird.f32 %v2258
    %vm2265 = vmor %vm2263, %vm2264
    %v2266 = vsel %vm2265, %v2258, %v2262
    %v2267 = vand.u32 2147483647, %v2242
    %vm2268 = vcmp.eq.f32.partialorder %v2267, 8.507059e+37
    %v2269 = vand.u32 %v2242, 2147483648
    %v2270 = vor.u32 1.1754944e-38, %v2269
    %v2271 = vsel %vm2268, %v2270, %v2266
    %v2272 = vmul.f32 1.0, %v2271
    %v2273 = vmul.f32 %v2257, %v2003
    %v2274 = vmul.f32 %v2272, %v2004
    %v2276 = vsel %vm48, %v2273, 0
    %v2279 = vsel %vm48, %v2274, 0
    %2281 = vmatpush.msra.mxu0 0.0
    %2282 = vmatpush.msra.mxu0 0.0
    %2283 = vmatpush.msra.mxu0 0.0
    %2284 = vmatpush.msra.mxu0 0.0
    %2285 = vmatpush.msra.mxu0 0.0
    %2286 = vmatpush.msra.mxu0 0.0
    %2287 = vmatpush.msra.mxu0 0.0
    %2288 = vmatpush.msra.mxu0 0.0
    %2289 = vmatpush.msra.mxu0 0.0
    %2290 = vmatpush.msra.mxu0 0.0
    %2291 = vmatpush.msra.mxu0 0.0
    %2292 = vmatpush.msra.mxu0 0.0
    %2293 = vmatpush.msra.mxu0 0.0
    %2294 = vmatpush.msra.mxu0 0.0
    %2295 = vmatpush.msra.mxu0 0.0
    %2296 = vmatpush.msra.mxu0 %v42
    %2297 = vmatmul.f32.gmra.mxu0 %v2276
    %v2298 = vpop.f32.mrf.mxu0
    %v2299 = vadd.f32 0.0, %v2298
    %2300 = vmatmul.f32.gmra.mxu0 %v2279
    %v2301 = vpop.f32.mrf.mxu0
    %v2302 = vadd.f32 0.0, %v2301
    %2303 = vdwg.mxu0
    %2304 = vmatpush.msra.mxu0 0.0
    %2305 = vmatpush.msra.mxu0 0.0
    %2306 = vmatpush.msra.mxu0 0.0
    %2307 = vmatpush.msra.mxu0 0.0
    %2308 = vmatpush.msra.mxu0 0.0
    %2309 = vmatpush.msra.mxu0 0.0
    %2310 = vmatpush.msra.mxu0 0.0
    %2311 = vmatpush.msra.mxu0 0.0
    %2312 = vmatpush.msra.mxu0 0.0
    %2313 = vmatpush.msra.mxu0 0.0
    %2314 = vmatpush.msra.mxu0 0.0
    %2315 = vmatpush.msra.mxu0 0.0
    %2316 = vmatpush.msra.mxu0 0.0
    %2317 = vmatpush.msra.mxu0 0.0
    %2318 = vmatpush.msra.mxu0 %v2302
    %2319 = vmatpush.msra.mxu0 %v2299
    %2320 = vmatmul.f32.gmra.mxu0 %v83
    %v2321 = vpop.f32.mrf.mxu0
    %v2322 = vadd.f32 0.0, %v2321
    %2323 = vmatmul.f32.gmra.mxu0 %v86
    %v2324 = vpop.f32.mrf.mxu0
    %v2325 = vadd.f32 0.0, %v2324
    %2326 = vdwg.mxu0
    %v2327 = vadd.f32 %v259, %v2322
    %v2328 = vadd.f32 %v262, %v2325
    %v2329 = vtanh.pop %v2327
    %v2330 = vtanh.pop %v2328
    %v2331 = vsub.f32 %v2003, %v2329
    %v2332 = vsub.f32 %v2004, %v2330
    %2335 = vrot.lane.b32.xlu0 %v2331, 8
    %v2336 = vpop.permute.xlu0 %2335
    %2337 = vrot.lane.b32.xlu0 %v2332, 8
    %v2338 = vpop.permute.xlu0 %2337
    %v2341 = vmul.f32 %v2257, %v2336
    %v2342 = vmul.f32 %v2272, %v2338
    %2345 = vrot.lane.b32.xlu0 %v2341, 120
    %v2346 = vpop.permute.xlu0 %2345
    %2347 = vrot.lane.b32.xlu0 %v2342, 120
    %v2348 = vpop.permute.xlu0 %2347
    %v2351 = vadd.f32 %v2329, %v2346
    %v2352 = vadd.f32 %v2330, %v2348
    %2353 = vst.msk [vmem:[#allocation2 + $0xb0] sm:$0xff] %vm48, %v2351
    %2354 = vst.msk [vmem:[#allocation2 + $0xb8] sm:$0xff] %vm48, %v2352
    %v2355 = vld [vmem:[#allocation2] sm:$0xff]
    %v2356 = vld [vmem:[#allocation2 + $0x8] sm:$0xff]
    %v2357 = vld [vmem:[#allocation2 + $0x10] sm:$0xff]
    %v2358 = vld [vmem:[#allocation2 + $0x18] sm:$0xff]
    %v2359 = vld [vmem:[#allocation2 + $0x20] sm:$0xff]
    %v2360 = vld [vmem:[#allocation2 + $0x28] sm:$0xff]
    %v2361 = vld [vmem:[#allocation2 + $0x30] sm:$0xff]
    %v2362 = vld [vmem:[#allocation2 + $0x38] sm:$0xff]
    %v2363 = vld [vmem:[#allocation2 + $0x40] sm:$0xff]
    %v2364 = vld [vmem:[#allocation2 + $0x48] sm:$0xff]
    %v2365 = vld [vmem:[#allocation2 + $0x50] sm:$0xff]
    %v2366 = vld [vmem:[#allocation2 + $0x58] sm:$0xff]
    %v2367 = vld [vmem:[#allocation2 + $0x60] sm:$0xff]
    %v2368 = vld [vmem:[#allocation2 + $0x68] sm:$0xff]
    %v2369 = vld [vmem:[#allocation2 + $0x70] sm:$0xff]
    %v2370 = vld [vmem:[#allocation2 + $0x78] sm:$0xff]
    %v2371 = vld [vmem:[#allocation2 + $0x80] sm:$0xff]
    %v2372 = vld [vmem:[#allocation2 + $0x88] sm:$0xff]
    %v2373 = vld [vmem:[#allocation2 + $0x90] sm:$0xff]
    %v2374 = vld [vmem:[#allocation2 + $0x98] sm:$0xff]
    %v2375 = vld [vmem:[#allocation2 + $0xa0] sm:$0xff]
    %v2376 = vld [vmem:[#allocation2 + $0xa8] sm:$0xff]
    %v2377 = vld [vmem:[#allocation2 + $0xb0] sm:$0xff]
    %v2378 = vld [vmem:[#allocation2 + $0xb8] sm:$0xff]
    %v2379 = vld [vmem:[%s9] sm:$0xff]
    %v2380 = vld [vmem:[%s10] sm:$0x1]
    %v2382 = vperm.slane %v2380, 0
    %v2385 = vsel %vm48, %v2355, 0
    %v2388 = vsel %vm48, %v2356, 0
    %v2391 = vsel %vm48, %v2357, 0
    %v2394 = vsel %vm48, %v2358, 0
    %v2397 = vsel %vm48, %v2359, 0
    %v2400 = vsel %vm48, %v2360, 0
    %v2403 = vsel %vm48, %v2361, 0
    %v2406 = vsel %vm48, %v2362, 0
    %v2409 = vsel %vm48, %v2363, 0
    %v2412 = vsel %vm48, %v2364, 0
    %v2415 = vsel %vm48, %v2365, 0
    %v2418 = vsel %vm48, %v2366, 0
    %v2421 = vsel %vm48, %v2367, 0
    %v2424 = vsel %vm48, %v2368, 0
    %v2427 = vsel %vm48, %v2369, 0
    %v2430 = vsel %vm48, %v2370, 0
    %v2433 = vsel %vm48, %v2371, 0
    %v2436 = vsel %vm48, %v2372, 0
    %v2439 = vsel %vm48, %v2373, 0
    %v2442 = vsel %vm48, %v2374, 0
    %v2445 = vsel %vm48, %v2375, 0
    %v2448 = vsel %vm48, %v2376, 0
    %v2451 = vsel %vm48, %v2377, 0
    %v2454 = vsel %vm48, %v2378, 0
    %2456 = vmatpush.msra.mxu0 0.0
    %2457 = vmatpush.msra.mxu0 0.0
    %2458 = vmatpush.msra.mxu0 0.0
    %2459 = vmatpush.msra.mxu0 0.0
    %2460 = vmatpush.msra.mxu0 0.0
    %2461 = vmatpush.msra.mxu0 0.0
    %2462 = vmatpush.msra.mxu0 0.0
    %2463 = vmatpush.msra.mxu0 0.0
    %2464 = vmatpush.msra.mxu0 0.0
    %2465 = vmatpush.msra.mxu0 0.0
    %2466 = vmatpush.msra.mxu0 0.0
    %2467 = vmatpush.msra.mxu0 0.0
    %2468 = vmatpush.msra.mxu0 0.0
    %2469 = vmatpush.msra.mxu0 0.0
    %2470 = vmatpush.msra.mxu0 0.0
    %2471 = vmatpush.msra.mxu0 %v2379
    %2472 = vmatmul.f32.gmra.mxu0 %v2385
    %v2473 = vpop.f32.mrf.mxu0
    %v2474 = vadd.f32 %v2382, %v2473
    %2475 = vmatmul.f32.gmra.mxu0 %v2388
    %v2476 = vpop.f32.mrf.mxu0
    %v2477 = vadd.f32 %v2382, %v2476
    %2478 = vmatmul.f32.gmra.mxu0 %v2391
    %v2479 = vpop.f32.mrf.mxu0
    %v2480 = vadd.f32 %v2382, %v2479
    %2481 = vmatmul.f32.gmra.mxu0 %v2394
    %v2482 = vpop.f32.mrf.mxu0
    %v2483 = vadd.f32 %v2382, %v2482
    %2484 = vmatmul.f32.gmra.mxu0 %v2397
    %v2485 = vpop.f32.mrf.mxu0
    %v2486 = vadd.f32 %v2382, %v2485
    %2487 = vmatmul.f32.gmra.mxu0 %v2400
    %v2488 = vpop.f32.mrf.mxu0
    %v2489 = vadd.f32 %v2382, %v2488
    %2490 = vmatmul.f32.gmra.mxu0 %v2403
    %v2491 = vpop.f32.mrf.mxu0
    %v2492 = vadd.f32 %v2382, %v2491
    %2493 = vmatmul.f32.gmra.mxu0 %v2406
    %v2494 = vpop.f32.mrf.mxu0
    %v2495 = vadd.f32 %v2382, %v2494
    %2496 = vmatmul.f32.gmra.mxu0 %v2409
    %v2497 = vpop.f32.mrf.mxu0
    %v2498 = vadd.f32 %v2382, %v2497
    %2499 = vmatmul.f32.gmra.mxu0 %v2412
    %v2500 = vpop.f32.mrf.mxu0
    %v2501 = vadd.f32 %v2382, %v2500
    %2502 = vmatmul.f32.gmra.mxu0 %v2415
    %v2503 = vpop.f32.mrf.mxu0
    %v2504 = vadd.f32 %v2382, %v2503
    %2505 = vmatmul.f32.gmra.mxu0 %v2418
    %v2506 = vpop.f32.mrf.mxu0
    %v2507 = vadd.f32 %v2382, %v2506
    %2508 = vmatmul.f32.gmra.mxu0 %v2421
    %v2509 = vpop.f32.mrf.mxu0
    %v2510 = vadd.f32 %v2382, %v2509
    %2511 = vmatmul.f32.gmra.mxu0 %v2424
    %v2512 = vpop.f32.mrf.mxu0
    %v2513 = vadd.f32 %v2382, %v2512
    %2514 = vmatmul.f32.gmra.mxu0 %v2427
    %v2515 = vpop.f32.mrf.mxu0
    %v2516 = vadd.f32 %v2382, %v2515
    %2517 = vmatmul.f32.gmra.mxu0 %v2430
    %v2518 = vpop.f32.mrf.mxu0
    %v2519 = vadd.f32 %v2382, %v2518
    %2520 = vmatmul.f32.gmra.mxu0 %v2433
    %v2521 = vpop.f32.mrf.mxu0
    %v2522 = vadd.f32 %v2382, %v2521
    %2523 = vmatmul.f32.gmra.mxu0 %v2436
    %v2524 = vpop.f32.mrf.mxu0
    %v2525 = vadd.f32 %v2382, %v2524
    %2526 = vmatmul.f32.gmra.mxu0 %v2439
    %v2527 = vpop.f32.mrf.mxu0
    %v2528 = vadd.f32 %v2382, %v2527
    %2529 = vmatmul.f32.gmra.mxu0 %v2442
    %v2530 = vpop.f32.mrf.mxu0
    %v2531 = vadd.f32 %v2382, %v2530
    %2532 = vmatmul.f32.gmra.mxu0 %v2445
    %v2533 = vpop.f32.mrf.mxu0
    %v2534 = vadd.f32 %v2382, %v2533
    %2535 = vmatmul.f32.gmra.mxu0 %v2448
    %v2536 = vpop.f32.mrf.mxu0
    %v2537 = vadd.f32 %v2382, %v2536
    %2538 = vmatmul.f32.gmra.mxu0 %v2451
    %v2539 = vpop.f32.mrf.mxu0
    %v2540 = vadd.f32 %v2382, %v2539
    %2541 = vmatmul.f32.gmra.mxu0 %v2454
    %v2542 = vpop.f32.mrf.mxu0
    %v2543 = vadd.f32 %v2382, %v2542
    %2544 = vdwg.mxu0
    %v2545 = vxor.u32 %v2474, 2147483648
    %v2546 = vxor.u32 %v2477, 2147483648
    %v2547 = vxor.u32 %v2480, 2147483648
    %v2548 = vxor.u32 %v2483, 2147483648
    %v2549 = vxor.u32 %v2486, 2147483648
    %v2550 = vxor.u32 %v2489, 2147483648
    %v2551 = vxor.u32 %v2492, 2147483648
    %v2552 = vxor.u32 %v2495, 2147483648
    %v2553 = vxor.u32 %v2498, 2147483648
    %v2554 = vxor.u32 %v2501, 2147483648
    %v2555 = vxor.u32 %v2504, 2147483648
    %v2556 = vxor.u32 %v2507, 2147483648
    %v2557 = vxor.u32 %v2510, 2147483648
    %v2558 = vxor.u32 %v2513, 2147483648
    %v2559 = vxor.u32 %v2516, 2147483648
    %v2560 = vxor.u32 %v2519, 2147483648
    %v2561 = vxor.u32 %v2522, 2147483648
    %v2562 = vxor.u32 %v2525, 2147483648
    %v2563 = vxor.u32 %v2528, 2147483648
    %v2564 = vxor.u32 %v2531, 2147483648
    %v2565 = vxor.u32 %v2534, 2147483648
    %v2566 = vxor.u32 %v2537, 2147483648
    %v2567 = vxor.u32 %v2540, 2147483648
    %v2568 = vxor.u32 %v2543, 2147483648
    %v2569 = vmul.f32 %v2545, 1.442695
    %v2570 = vpow.pop %v2569
    %v2571 = vmul.f32 %v2546, 1.442695
    %v2572 = vpow.pop %v2571
    %v2573 = vmul.f32 %v2547, 1.442695
    %v2574 = vpow.pop %v2573
    %v2575 = vmul.f32 %v2548, 1.442695
    %v2576 = vpow.pop %v2575
    %v2577 = vmul.f32 %v2549, 1.442695
    %v2578 = vpow.pop %v2577
    %v2579 = vmul.f32 %v2550, 1.442695
    %v2580 = vpow.pop %v2579
    %v2581 = vmul.f32 %v2551, 1.442695
    %v2582 = vpow.pop %v2581
    %v2583 = vmul.f32 %v2552, 1.442695
    %v2584 = vpow.pop %v2583
    %v2585 = vmul.f32 %v2553, 1.442695
    %v2586 = vpow.pop %v2585
    %v2587 = vmul.f32 %v2554, 1.442695
    %v2588 = vpow.pop %v2587
    %v2589 = vmul.f32 %v2555, 1.442695
    %v2590 = vpow.pop %v2589
    %v2591 = vmul.f32 %v2556, 1.442695
    %v2592 = vpow.pop %v2591
    %v2593 = vmul.f32 %v2557, 1.442695
    %v2594 = vpow.pop %v2593
    %v2595 = vmul.f32 %v2558, 1.442695
    %v2596 = vpow.pop %v2595
    %v2597 = vmul.f32 %v2559, 1.442695
    %v2598 = vpow.pop %v2597
    %v2599 = vmul.f32 %v2560, 1.442695
    %v2600 = vpow.pop %v2599
    %v2601 = vmul.f32 %v2561, 1.442695
    %v2602 = vpow.pop %v2601
    %v2603 = vmul.f32 %v2562, 1.442695
    %v2604 = vpow.pop %v2603
    %v2605 = vmul.f32 %v2563, 1.442695
    %v2606 = vpow.pop %v2605
    %v2607 = vmul.f32 %v2564, 1.442695
    %v2608 = vpow.pop %v2607
    %v2609 = vmul.f32 %v2565, 1.442695
    %v2610 = vpow.pop %v2609
    %v2611 = vmul.f32 %v2566, 1.442695
    %v2612 = vpow.pop %v2611
    %v2613 = vmul.f32 %v2567, 1.442695
    %v2614 = vpow.pop %v2613
    %v2615 = vmul.f32 %v2568, 1.442695
    %v2616 = vpow.pop %v2615
    %v2617 = vadd.f32 %v2570, 1.0
    %v2618 = vadd.f32 %v2572, 1.0
    %v2619 = vadd.f32 %v2574, 1.0
    %v2620 = vadd.f32 %v2576, 1.0
    %v2621 = vadd.f32 %v2578, 1.0
    %v2622 = vadd.f32 %v2580, 1.0
    %v2623 = vadd.f32 %v2582, 1.0
    %v2624 = vadd.f32 %v2584, 1.0
    %v2625 = vadd.f32 %v2586, 1.0
    %v2626 = vadd.f32 %v2588, 1.0
    %v2627 = vadd.f32 %v2590, 1.0
    %v2628 = vadd.f32 %v2592, 1.0
    %v2629 = vadd.f32 %v2594, 1.0
    %v2630 = vadd.f32 %v2596, 1.0
    %v2631 = vadd.f32 %v2598, 1.0
    %v2632 = vadd.f32 %v2600, 1.0
    %v2633 = vadd.f32 %v2602, 1.0
    %v2634 = vadd.f32 %v2604, 1.0
    %v2635 = vadd.f32 %v2606, 1.0
    %v2636 = vadd.f32 %v2608, 1.0
    %v2637 = vadd.f32 %v2610, 1.0
    %v2638 = vadd.f32 %v2612, 1.0
    %v2639 = vadd.f32 %v2614, 1.0
    %v2640 = vadd.f32 %v2616, 1.0
    %v2641 = vrcp.pop %v2617
    %v2642 = vmul.f32 %v2617, %v2641
    %v2643 = vsub.f32 1.0, %v2642
    %v2644 = vmul.f32 %v2641, %v2643
    %v2645 = vadd.f32 %v2641, %v2644
    %vm2646 = vweird.f32 %v2617
    %vm2647 = vweird.f32 %v2641
    %vm2648 = vmor %vm2646, %vm2647
    %v2649 = vsel %vm2648, %v2641, %v2645
    %v2650 = vand.u32 2147483647, %v2617
    %vm2651 = vcmp.eq.f32.partialorder %v2650, 8.507059e+37
    %v2652 = vand.u32 %v2617, 2147483648
    %v2653 = vor.u32 1.1754944e-38, %v2652
    %v2654 = vsel %vm2651, %v2653, %v2649
    %v2655 = vmul.f32 1.0, %v2654
    %v2656 = vrcp.pop %v2618
    %v2657 = vmul.f32 %v2618, %v2656
    %v2658 = vsub.f32 1.0, %v2657
    %v2659 = vmul.f32 %v2656, %v2658
    %v2660 = vadd.f32 %v2656, %v2659
    %vm2661 = vweird.f32 %v2618
    %vm2662 = vweird.f32 %v2656
    %vm2663 = vmor %vm2661, %vm2662
    %v2664 = vsel %vm2663, %v2656, %v2660
    %v2665 = vand.u32 2147483647, %v2618
    %vm2666 = vcmp.eq.f32.partialorder %v2665, 8.507059e+37
    %v2667 = vand.u32 %v2618, 2147483648
    %v2668 = vor.u32 1.1754944e-38, %v2667
    %v2669 = vsel %vm2666, %v2668, %v2664
    %v2670 = vmul.f32 1.0, %v2669
    %v2671 = vrcp.pop %v2619
    %v2672 = vmul.f32 %v2619, %v2671
    %v2673 = vsub.f32 1.0, %v2672
    %v2674 = vmul.f32 %v2671, %v2673
    %v2675 = vadd.f32 %v2671, %v2674
    %vm2676 = vweird.f32 %v2619
    %vm2677 = vweird.f32 %v2671
    %vm2678 = vmor %vm2676, %vm2677
    %v2679 = vsel %vm2678, %v2671, %v2675
    %v2680 = vand.u32 2147483647, %v2619
    %vm2681 = vcmp.eq.f32.partialorder %v2680, 8.507059e+37
    %v2682 = vand.u32 %v2619, 2147483648
    %v2683 = vor.u32 1.1754944e-38, %v2682
    %v2684 = vsel %vm2681, %v2683, %v2679
    %v2685 = vmul.f32 1.0, %v2684
    %v2686 = vrcp.pop %v2620
    %v2687 = vmul.f32 %v2620, %v2686
    %v2688 = vsub.f32 1.0, %v2687
    %v2689 = vmul.f32 %v2686, %v2688
    %v2690 = vadd.f32 %v2686, %v2689
    %vm2691 = vweird.f32 %v2620
    %vm2692 = vweird.f32 %v2686
    %vm2693 = vmor %vm2691, %vm2692
    %v2694 = vsel %vm2693, %v2686, %v2690
    %v2695 = vand.u32 2147483647, %v2620
    %vm2696 = vcmp.eq.f32.partialorder %v2695, 8.507059e+37
    %v2697 = vand.u32 %v2620, 2147483648
    %v2698 = vor.u32 1.1754944e-38, %v2697
    %v2699 = vsel %vm2696, %v2698, %v2694
    %v2700 = vmul.f32 1.0, %v2699
    %v2701 = vrcp.pop %v2621
    %v2702 = vmul.f32 %v2621, %v2701
    %v2703 = vsub.f32 1.0, %v2702
    %v2704 = vmul.f32 %v2701, %v2703
    %v2705 = vadd.f32 %v2701, %v2704
    %vm2706 = vweird.f32 %v2621
    %vm2707 = vweird.f32 %v2701
    %vm2708 = vmor %vm2706, %vm2707
    %v2709 = vsel %vm2708, %v2701, %v2705
    %v2710 = vand.u32 2147483647, %v2621
    %vm2711 = vcmp.eq.f32.partialorder %v2710, 8.507059e+37
    %v2712 = vand.u32 %v2621, 2147483648
    %v2713 = vor.u32 1.1754944e-38, %v2712
    %v2714 = vsel %vm2711, %v2713, %v2709
    %v2715 = vmul.f32 1.0, %v2714
    %v2716 = vrcp.pop %v2622
    %v2717 = vmul.f32 %v2622, %v2716
    %v2718 = vsub.f32 1.0, %v2717
    %v2719 = vmul.f32 %v2716, %v2718
    %v2720 = vadd.f32 %v2716, %v2719
    %vm2721 = vweird.f32 %v2622
    %vm2722 = vweird.f32 %v2716
    %vm2723 = vmor %vm2721, %vm2722
    %v2724 = vsel %vm2723, %v2716, %v2720
    %v2725 = vand.u32 2147483647, %v2622
    %vm2726 = vcmp.eq.f32.partialorder %v2725, 8.507059e+37
    %v2727 = vand.u32 %v2622, 2147483648
    %v2728 = vor.u32 1.1754944e-38, %v2727
    %v2729 = vsel %vm2726, %v2728, %v2724
    %v2730 = vmul.f32 1.0, %v2729
    %v2731 = vrcp.pop %v2623
    %v2732 = vmul.f32 %v2623, %v2731
    %v2733 = vsub.f32 1.0, %v2732
    %v2734 = vmul.f32 %v2731, %v2733
    %v2735 = vadd.f32 %v2731, %v2734
    %vm2736 = vweird.f32 %v2623
    %vm2737 = vweird.f32 %v2731
    %vm2738 = vmor %vm2736, %vm2737
    %v2739 = vsel %vm2738, %v2731, %v2735
    %v2740 = vand.u32 2147483647, %v2623
    %vm2741 = vcmp.eq.f32.partialorder %v2740, 8.507059e+37
    %v2742 = vand.u32 %v2623, 2147483648
    %v2743 = vor.u32 1.1754944e-38, %v2742
    %v2744 = vsel %vm2741, %v2743, %v2739
    %v2745 = vmul.f32 1.0, %v2744
    %v2746 = vrcp.pop %v2624
    %v2747 = vmul.f32 %v2624, %v2746
    %v2748 = vsub.f32 1.0, %v2747
    %v2749 = vmul.f32 %v2746, %v2748
    %v2750 = vadd.f32 %v2746, %v2749
    %vm2751 = vweird.f32 %v2624
    %vm2752 = vweird.f32 %v2746
    %vm2753 = vmor %vm2751, %vm2752
    %v2754 = vsel %vm2753, %v2746, %v2750
    %v2755 = vand.u32 2147483647, %v2624
    %vm2756 = vcmp.eq.f32.partialorder %v2755, 8.507059e+37
    %v2757 = vand.u32 %v2624, 2147483648
    %v2758 = vor.u32 1.1754944e-38, %v2757
    %v2759 = vsel %vm2756, %v2758, %v2754
    %v2760 = vmul.f32 1.0, %v2759
    %v2761 = vrcp.pop %v2625
    %v2762 = vmul.f32 %v2625, %v2761
    %v2763 = vsub.f32 1.0, %v2762
    %v2764 = vmul.f32 %v2761, %v2763
    %v2765 = vadd.f32 %v2761, %v2764
    %vm2766 = vweird.f32 %v2625
    %vm2767 = vweird.f32 %v2761
    %vm2768 = vmor %vm2766, %vm2767
    %v2769 = vsel %vm2768, %v2761, %v2765
    %v2770 = vand.u32 2147483647, %v2625
    %vm2771 = vcmp.eq.f32.partialorder %v2770, 8.507059e+37
    %v2772 = vand.u32 %v2625, 2147483648
    %v2773 = vor.u32 1.1754944e-38, %v2772
    %v2774 = vsel %vm2771, %v2773, %v2769
    %v2775 = vmul.f32 1.0, %v2774
    %v2776 = vrcp.pop %v2626
    %v2777 = vmul.f32 %v2626, %v2776
    %v2778 = vsub.f32 1.0, %v2777
    %v2779 = vmul.f32 %v2776, %v2778
    %v2780 = vadd.f32 %v2776, %v2779
    %vm2781 = vweird.f32 %v2626
    %vm2782 = vweird.f32 %v2776
    %vm2783 = vmor %vm2781, %vm2782
    %v2784 = vsel %vm2783, %v2776, %v2780
    %v2785 = vand.u32 2147483647, %v2626
    %vm2786 = vcmp.eq.f32.partialorder %v2785, 8.507059e+37
    %v2787 = vand.u32 %v2626, 2147483648
    %v2788 = vor.u32 1.1754944e-38, %v2787
    %v2789 = vsel %vm2786, %v2788, %v2784
    %v2790 = vmul.f32 1.0, %v2789
    %v2791 = vrcp.pop %v2627
    %v2792 = vmul.f32 %v2627, %v2791
    %v2793 = vsub.f32 1.0, %v2792
    %v2794 = vmul.f32 %v2791, %v2793
    %v2795 = vadd.f32 %v2791, %v2794
    %vm2796 = vweird.f32 %v2627
    %vm2797 = vweird.f32 %v2791
    %vm2798 = vmor %vm2796, %vm2797
    %v2799 = vsel %vm2798, %v2791, %v2795
    %v2800 = vand.u32 2147483647, %v2627
    %vm2801 = vcmp.eq.f32.partialorder %v2800, 8.507059e+37
    %v2802 = vand.u32 %v2627, 2147483648
    %v2803 = vor.u32 1.1754944e-38, %v2802
    %v2804 = vsel %vm2801, %v2803, %v2799
    %v2805 = vmul.f32 1.0, %v2804
    %v2806 = vrcp.pop %v2628
    %v2807 = vmul.f32 %v2628, %v2806
    %v2808 = vsub.f32 1.0, %v2807
    %v2809 = vmul.f32 %v2806, %v2808
    %v2810 = vadd.f32 %v2806, %v2809
    %vm2811 = vweird.f32 %v2628
    %vm2812 = vweird.f32 %v2806
    %vm2813 = vmor %vm2811, %vm2812
    %v2814 = vsel %vm2813, %v2806, %v2810
    %v2815 = vand.u32 2147483647, %v2628
    %vm2816 = vcmp.eq.f32.partialorder %v2815, 8.507059e+37
    %v2817 = vand.u32 %v2628, 2147483648
    %v2818 = vor.u32 1.1754944e-38, %v2817
    %v2819 = vsel %vm2816, %v2818, %v2814
    %v2820 = vmul.f32 1.0, %v2819
    %v2821 = vrcp.pop %v2629
    %v2822 = vmul.f32 %v2629, %v2821
    %v2823 = vsub.f32 1.0, %v2822
    %v2824 = vmul.f32 %v2821, %v2823
    %v2825 = vadd.f32 %v2821, %v2824
    %vm2826 = vweird.f32 %v2629
    %vm2827 = vweird.f32 %v2821
    %vm2828 = vmor %vm2826, %vm2827
    %v2829 = vsel %vm2828, %v2821, %v2825
    %v2830 = vand.u32 2147483647, %v2629
    %vm2831 = vcmp.eq.f32.partialorder %v2830, 8.507059e+37
    %v2832 = vand.u32 %v2629, 2147483648
    %v2833 = vor.u32 1.1754944e-38, %v2832
    %v2834 = vsel %vm2831, %v2833, %v2829
    %v2835 = vmul.f32 1.0, %v2834
    %v2836 = vrcp.pop %v2630
    %v2837 = vmul.f32 %v2630, %v2836
    %v2838 = vsub.f32 1.0, %v2837
    %v2839 = vmul.f32 %v2836, %v2838
    %v2840 = vadd.f32 %v2836, %v2839
    %vm2841 = vweird.f32 %v2630
    %vm2842 = vweird.f32 %v2836
    %vm2843 = vmor %vm2841, %vm2842
    %v2844 = vsel %vm2843, %v2836, %v2840
    %v2845 = vand.u32 2147483647, %v2630
    %vm2846 = vcmp.eq.f32.partialorder %v2845, 8.507059e+37
    %v2847 = vand.u32 %v2630, 2147483648
    %v2848 = vor.u32 1.1754944e-38, %v2847
    %v2849 = vsel %vm2846, %v2848, %v2844
    %v2850 = vmul.f32 1.0, %v2849
    %v2851 = vrcp.pop %v2631
    %v2852 = vmul.f32 %v2631, %v2851
    %v2853 = vsub.f32 1.0, %v2852
    %v2854 = vmul.f32 %v2851, %v2853
    %v2855 = vadd.f32 %v2851, %v2854
    %vm2856 = vweird.f32 %v2631
    %vm2857 = vweird.f32 %v2851
    %vm2858 = vmor %vm2856, %vm2857
    %v2859 = vsel %vm2858, %v2851, %v2855
    %v2860 = vand.u32 2147483647, %v2631
    %vm2861 = vcmp.eq.f32.partialorder %v2860, 8.507059e+37
    %v2862 = vand.u32 %v2631, 2147483648
    %v2863 = vor.u32 1.1754944e-38, %v2862
    %v2864 = vsel %vm2861, %v2863, %v2859
    %v2865 = vmul.f32 1.0, %v2864
    %v2866 = vrcp.pop %v2632
    %v2867 = vmul.f32 %v2632, %v2866
    %v2868 = vsub.f32 1.0, %v2867
    %v2869 = vmul.f32 %v2866, %v2868
    %v2870 = vadd.f32 %v2866, %v2869
    %vm2871 = vweird.f32 %v2632
    %vm2872 = vweird.f32 %v2866
    %vm2873 = vmor %vm2871, %vm2872
    %v2874 = vsel %vm2873, %v2866, %v2870
    %v2875 = vand.u32 2147483647, %v2632
    %vm2876 = vcmp.eq.f32.partialorder %v2875, 8.507059e+37
    %v2877 = vand.u32 %v2632, 2147483648
    %v2878 = vor.u32 1.1754944e-38, %v2877
    %v2879 = vsel %vm2876, %v2878, %v2874
    %v2880 = vmul.f32 1.0, %v2879
    %v2881 = vrcp.pop %v2633
    %v2882 = vmul.f32 %v2633, %v2881
    %v2883 = vsub.f32 1.0, %v2882
    %v2884 = vmul.f32 %v2881, %v2883
    %v2885 = vadd.f32 %v2881, %v2884
    %vm2886 = vweird.f32 %v2633
    %vm2887 = vweird.f32 %v2881
    %vm2888 = vmor %vm2886, %vm2887
    %v2889 = vsel %vm2888, %v2881, %v2885
    %v2890 = vand.u32 2147483647, %v2633
    %vm2891 = vcmp.eq.f32.partialorder %v2890, 8.507059e+37
    %v2892 = vand.u32 %v2633, 2147483648
    %v2893 = vor.u32 1.1754944e-38, %v2892
    %v2894 = vsel %vm2891, %v2893, %v2889
    %v2895 = vmul.f32 1.0, %v2894
    %v2896 = vrcp.pop %v2634
    %v2897 = vmul.f32 %v2634, %v2896
    %v2898 = vsub.f32 1.0, %v2897
    %v2899 = vmul.f32 %v2896, %v2898
    %v2900 = vadd.f32 %v2896, %v2899
    %vm2901 = vweird.f32 %v2634
    %vm2902 = vweird.f32 %v2896
    %vm2903 = vmor %vm2901, %vm2902
    %v2904 = vsel %vm2903, %v2896, %v2900
    %v2905 = vand.u32 2147483647, %v2634
    %vm2906 = vcmp.eq.f32.partialorder %v2905, 8.507059e+37
    %v2907 = vand.u32 %v2634, 2147483648
    %v2908 = vor.u32 1.1754944e-38, %v2907
    %v2909 = vsel %vm2906, %v2908, %v2904
    %v2910 = vmul.f32 1.0, %v2909
    %v2911 = vrcp.pop %v2635
    %v2912 = vmul.f32 %v2635, %v2911
    %v2913 = vsub.f32 1.0, %v2912
    %v2914 = vmul.f32 %v2911, %v2913
    %v2915 = vadd.f32 %v2911, %v2914
    %vm2916 = vweird.f32 %v2635
    %vm2917 = vweird.f32 %v2911
    %vm2918 = vmor %vm2916, %vm2917
    %v2919 = vsel %vm2918, %v2911, %v2915
    %v2920 = vand.u32 2147483647, %v2635
    %vm2921 = vcmp.eq.f32.partialorder %v2920, 8.507059e+37
    %v2922 = vand.u32 %v2635, 2147483648
    %v2923 = vor.u32 1.1754944e-38, %v2922
    %v2924 = vsel %vm2921, %v2923, %v2919
    %v2925 = vmul.f32 1.0, %v2924
    %v2926 = vrcp.pop %v2636
    %v2927 = vmul.f32 %v2636, %v2926
    %v2928 = vsub.f32 1.0, %v2927
    %v2929 = vmul.f32 %v2926, %v2928
    %v2930 = vadd.f32 %v2926, %v2929
    %vm2931 = vweird.f32 %v2636
    %vm2932 = vweird.f32 %v2926
    %vm2933 = vmor %vm2931, %vm2932
    %v2934 = vsel %vm2933, %v2926, %v2930
    %v2935 = vand.u32 2147483647, %v2636
    %vm2936 = vcmp.eq.f32.partialorder %v2935, 8.507059e+37
    %v2937 = vand.u32 %v2636, 2147483648
    %v2938 = vor.u32 1.1754944e-38, %v2937
    %v2939 = vsel %vm2936, %v2938, %v2934
    %v2940 = vmul.f32 1.0, %v2939
    %v2941 = vrcp.pop %v2637
    %v2942 = vmul.f32 %v2637, %v2941
    %v2943 = vsub.f32 1.0, %v2942
    %v2944 = vmul.f32 %v2941, %v2943
    %v2945 = vadd.f32 %v2941, %v2944
    %vm2946 = vweird.f32 %v2637
    %vm2947 = vweird.f32 %v2941
    %vm2948 = vmor %vm2946, %vm2947
    %v2949 = vsel %vm2948, %v2941, %v2945
    %v2950 = vand.u32 2147483647, %v2637
    %vm2951 = vcmp.eq.f32.partialorder %v2950, 8.507059e+37
    %v2952 = vand.u32 %v2637, 2147483648
    %v2953 = vor.u32 1.1754944e-38, %v2952
    %v2954 = vsel %vm2951, %v2953, %v2949
    %v2955 = vmul.f32 1.0, %v2954
    %v2956 = vrcp.pop %v2638
    %v2957 = vmul.f32 %v2638, %v2956
    %v2958 = vsub.f32 1.0, %v2957
    %v2959 = vmul.f32 %v2956, %v2958
    %v2960 = vadd.f32 %v2956, %v2959
    %vm2961 = vweird.f32 %v2638
    %vm2962 = vweird.f32 %v2956
    %vm2963 = vmor %vm2961, %vm2962
    %v2964 = vsel %vm2963, %v2956, %v2960
    %v2965 = vand.u32 2147483647, %v2638
    %vm2966 = vcmp.eq.f32.partialorder %v2965, 8.507059e+37
    %v2967 = vand.u32 %v2638, 2147483648
    %v2968 = vor.u32 1.1754944e-38, %v2967
    %v2969 = vsel %vm2966, %v2968, %v2964
    %v2970 = vmul.f32 1.0, %v2969
    %v2971 = vrcp.pop %v2639
    %v2972 = vmul.f32 %v2639, %v2971
    %v2973 = vsub.f32 1.0, %v2972
    %v2974 = vmul.f32 %v2971, %v2973
    %v2975 = vadd.f32 %v2971, %v2974
    %vm2976 = vweird.f32 %v2639
    %vm2977 = vweird.f32 %v2971
    %vm2978 = vmor %vm2976, %vm2977
    %v2979 = vsel %vm2978, %v2971, %v2975
    %v2980 = vand.u32 2147483647, %v2639
    %vm2981 = vcmp.eq.f32.partialorder %v2980, 8.507059e+37
    %v2982 = vand.u32 %v2639, 2147483648
    %v2983 = vor.u32 1.1754944e-38, %v2982
    %v2984 = vsel %vm2981, %v2983, %v2979
    %v2985 = vmul.f32 1.0, %v2984
    %v2986 = vrcp.pop %v2640
    %v2987 = vmul.f32 %v2640, %v2986
    %v2988 = vsub.f32 1.0, %v2987
    %v2989 = vmul.f32 %v2986, %v2988
    %v2990 = vadd.f32 %v2986, %v2989
    %vm2991 = vweird.f32 %v2640
    %vm2992 = vweird.f32 %v2986
    %vm2993 = vmor %vm2991, %vm2992
    %v2994 = vsel %vm2993, %v2986, %v2990
    %v2995 = vand.u32 2147483647, %v2640
    %vm2996 = vcmp.eq.f32.partialorder %v2995, 8.507059e+37
    %v2997 = vand.u32 %v2640, 2147483648
    %v2998 = vor.u32 1.1754944e-38, %v2997
    %v2999 = vsel %vm2996, %v2998, %v2994
    %v3000 = vmul.f32 1.0, %v2999
    %3001 = vst [vmem:[#allocation3] sm:$0xff] %v2655
    %3002 = vst [vmem:[#allocation3 + $0x8] sm:$0xff] %v2670
    %3003 = vst [vmem:[#allocation3 + $0x10] sm:$0xff] %v2685
    %3004 = vst [vmem:[#allocation3 + $0x18] sm:$0xff] %v2700
    %3005 = vst [vmem:[#allocation3 + $0x20] sm:$0xff] %v2715
    %3006 = vst [vmem:[#allocation3 + $0x28] sm:$0xff] %v2730
    %3007 = vst [vmem:[#allocation3 + $0x30] sm:$0xff] %v2745
    %3008 = vst [vmem:[#allocation3 + $0x38] sm:$0xff] %v2760
    %3009 = vst [vmem:[#allocation3 + $0x40] sm:$0xff] %v2775
    %3010 = vst [vmem:[#allocation3 + $0x48] sm:$0xff] %v2790
    %3011 = vst [vmem:[#allocation3 + $0x50] sm:$0xff] %v2805
    %3012 = vst [vmem:[#allocation3 + $0x58] sm:$0xff] %v2820
    %3013 = vst [vmem:[#allocation3 + $0x60] sm:$0xff] %v2835
    %3014 = vst [vmem:[#allocation3 + $0x68] sm:$0xff] %v2850
    %3015 = vst [vmem:[#allocation3 + $0x70] sm:$0xff] %v2865
    %3016 = vst [vmem:[#allocation3 + $0x78] sm:$0xff] %v2880
    %3017 = vst [vmem:[#allocation3 + $0x80] sm:$0xff] %v2895
    %3018 = vst [vmem:[#allocation3 + $0x88] sm:$0xff] %v2910
    %3019 = vst [vmem:[#allocation3 + $0x90] sm:$0xff] %v2925
    %3020 = vst [vmem:[#allocation3 + $0x98] sm:$0xff] %v2940
    %3021 = vst [vmem:[#allocation3 + $0xa0] sm:$0xff] %v2955
    %3022 = vst [vmem:[#allocation3 + $0xa8] sm:$0xff] %v2970
    %3023 = vst [vmem:[#allocation3 + $0xb0] sm:$0xff] %v2985
    %3024 = vst [vmem:[#allocation3 + $0xb8] sm:$0xff] %v3000
    // Predicated region
    $region46: #{tpu_custom_call.1} parent=1 // pred_check
      _
    $region47: #{tpu_custom_call.1} parent=1 // pred_check_branch
      %3026 = sbr.rel (0) target = $region49
    $region48: #{tpu_custom_call.1} parent=1 // pred_region
      %3028 = vsyncadd [#allocation4], 0
      %s3029 = sshll.u32 [#allocation3], 4
      %s3030 = int_to_ptr.vmem [resolvable:$true] %s3029
      %s3031 = sshll.u32 %s11, 4
      %s3032 = int_to_ptr.hbm [resolvable:$true] %s3031
      %3037 = dma.vmem_to_hbm [thread:$0]  %s3030, 3072, %s3032, [#allocation4], 128, 128, 8
    $region49: #{tpu_custom_call.1} parent=1 // pred_fallthru
      _
    // Predicated region
    $region50: #{tpu_custom_call.1} parent=1 // pred_check
      _
    $region51: #{tpu_custom_call.1} parent=1 // pred_check_branch
      %3039 = sbr.rel (0) target = $region53
    $region52: #{tpu_custom_call.1} parent=1 // pred_region
      %3041 = dma.done [#allocation4], 3072
    $region53: #{tpu_custom_call.1} parent=1 // pred_fallthru
      _
    %3042 = vsyncpa [#allocation4], 1

</llo_original>
